<compile_context>
chip_gen: v7x
topology: tpu7x:2x2x1
jax: 0.10.0
libtpu: 0.0.40
codegen_flags: <defaults>
</compile_context>

<pallas_src>
import functools

import jax
import jax.numpy as jnp
from jax import lax
from jax.experimental import pallas as pl
from jax.experimental.pallas import tpu as pltpu


def _round_up(x, m):
    return ((x + m - 1) // m) * m


# -----------------------------------------------------------------------------
# Pallas kernel: tiled  out = [relu](x @ w + b), f32 accumulation over K tiles
# -----------------------------------------------------------------------------
def _matmul_bias_act_kernel(x_ref, w_ref, b_ref, o_ref, acc_ref, *, apply_relu):
    @pl.when(pl.program_id(1) == 0)
    def _init():
        acc_ref[...] = jnp.zeros_like(acc_ref)

    acc_ref[...] += jnp.dot(x_ref[...], w_ref[...],
                            preferred_element_type=jnp.float32)

    @pl.when(pl.program_id(1) == pl.num_programs(1) - 1)
    def _finalize():
        out = acc_ref[...] + b_ref[...]   # b_ref (1, N) broadcasts over rows
        if apply_relu:
            out = jnp.maximum(out, 0.0)
        o_ref[...] = out.astype(o_ref.dtype)


def pallas_matmul_bias_act(x, w, b, *, apply_relu, out_dtype):
    """x: (M, K) bf16, w: (K, N) bf16, b: (N,) f32 -> (M, N) out_dtype."""
    M, K = x.shape
    N = w.shape[1]

    # Lane-dense output: pad N up to a multiple of 128.
    Np = _round_up(N, 128)
    # M tiles: large enough to pipeline DMA behind the MXU; parallel axis.
    tm = min(256, _round_up(M, 8))
    Mp = _round_up(M, tm)
    # K tiles: single (128-aligned) tile when small, 512-wide accumulation else.
    Kp = _round_up(K, 128)
    if Kp > 1024:
        tk = 512
        Kp = _round_up(K, tk)
    else:
        tk = Kp

    x_p = jnp.pad(x, ((0, Mp - M), (0, Kp - K)))
    w_p = jnp.pad(w, ((0, Kp - K), (0, Np - N)))
    b_p = jnp.pad(b.astype(jnp.float32), ((0, Np - N),)).reshape(1, Np)

    kernel = functools.partial(_matmul_bias_act_kernel, apply_relu=apply_relu)
    out = pl.pallas_call(
        kernel,
        out_shape=jax.ShapeDtypeStruct((Mp, Np), out_dtype),
        grid=(Mp // tm, Kp // tk),
        in_specs=[
            pl.BlockSpec((tm, tk), lambda i, k: (i, k)),
            pl.BlockSpec((tk, Np), lambda i, k: (k, 0)),
            pl.BlockSpec((1, Np), lambda i, k: (0, 0)),
        ],
        out_specs=pl.BlockSpec((tm, Np), lambda i, k: (i, 0)),
        scratch_shapes=[pltpu.VMEM((tm, Np), jnp.float32)],
        compiler_params=pltpu.CompilerParams(
            dimension_semantics=("parallel", "arbitrary"),
            vmem_limit_bytes=48 * 1024 * 1024,
        ),
    )(x_p, w_p, b_p)
    return out[:M, :N]


# -----------------------------------------------------------------------------
# Pallas kernel: fused Q head  q = relu(x @ w1 + b1) @ w2 + b2
# (fc1 accumulated over K tiles in VMEM scratch; fc2 runs on the last step)
# -----------------------------------------------------------------------------
def _q_head_kernel(x_ref, w1_ref, b1_ref, w2_ref, b2_ref, o_ref, h_ref):
    k = pl.program_id(0)

    @pl.when(k == 0)
    def _init():
        h_ref[...] = jnp.zeros_like(h_ref)

    h_ref[...] += jnp.dot(x_ref[...], w1_ref[...],
                          preferred_element_type=jnp.float32)

    @pl.when(k == pl.num_programs(0) - 1)
    def _finalize():
        h = jnp.maximum(h_ref[...] + b1_ref[...], 0.0).astype(w2_ref.dtype)
        q = jnp.dot(h, w2_ref[...], preferred_element_type=jnp.float32)
        o_ref[...] = (q + b2_ref[...]).astype(o_ref.dtype)


def pallas_q_head(feats, w1, b1, w2, b2):
    """feats: (B, 3136) bf16, w1: (3136, 512) bf16, w2: (512, N) bf16."""
    B, K1 = feats.shape
    H = w1.shape[1]                     # 512 (multiple of 128)
    N = w2.shape[1]                     # Q * A

    Mp = _round_up(B, 8)
    tk = 512
    K1p = _round_up(K1, tk)
    Np = _round_up(N, 128)              # lane-dense fc2 output

    x_p = jnp.pad(feats, ((0, Mp - B), (0, K1p - K1)))
    w1_p = jnp.pad(w1, ((0, K1p - K1), (0, 0)))
    w2_p = jnp.pad(w2, ((0, 0), (0, Np - N)))
    b1_p = b1.astype(jnp.float32).reshape(1, H)
    b2_p = jnp.pad(b2.astype(jnp.float32), ((0, Np - N),)).reshape(1, Np)

    out = pl.pallas_call(
        _q_head_kernel,
        out_shape=jax.ShapeDtypeStruct((Mp, Np), jnp.float32),
        grid=(K1p // tk,),
        in_specs=[
            pl.BlockSpec((Mp, tk), lambda k: (0, k)),
            pl.BlockSpec((tk, H), lambda k: (k, 0)),
            pl.BlockSpec((1, H), lambda k: (0, 0)),
            pl.BlockSpec((H, Np), lambda k: (0, 0)),
            pl.BlockSpec((1, Np), lambda k: (0, 0)),
        ],
        out_specs=pl.BlockSpec((Mp, Np), lambda k: (0, 0)),
        scratch_shapes=[pltpu.VMEM((Mp, H), jnp.float32)],
        compiler_params=pltpu.CompilerParams(
            dimension_semantics=("arbitrary",),
            vmem_limit_bytes=48 * 1024 * 1024,
        ),
    )(x_p, w1_p, b1_p, w2_p, b2_p)
    return out[:B, :N]


# -----------------------------------------------------------------------------
# Conv layer = patch extraction (XLA) + tiled Pallas matmul/bias/ReLU
# -----------------------------------------------------------------------------
def pallas_conv2d_relu(x_nhwc, w_mat, b, kh, kw, stride, cout):
    """Valid strided conv + bias + ReLU (PyTorch conv2d semantics), bf16."""
    B = x_nhwc.shape[0]
    patches = lax.conv_general_dilated_patches(
        x_nhwc, filter_shape=(kh, kw), window_strides=(stride, stride),
        padding="VALID", dimension_numbers=("NHWC", "HWIO", "NHWC"))
    _, OH, OW, K = patches.shape        # patch channel order: (cin, kh, kw)
    out = pallas_matmul_bias_act(patches.reshape(B * OH * OW, K), w_mat, b,
                                 apply_relu=True, out_dtype=jnp.bfloat16)
    return out.reshape(B, OH, OW, cout)


# -----------------------------------------------------------------------------
# Bayesian weight sampling (reparameterization trick) -- plain-JAX glue
# -----------------------------------------------------------------------------
def _sample_bayesian(mu, rho, key, train):
    if not train:
        return mu
    eps = jax.random.normal(key, mu.shape, mu.dtype)
    return mu + jax.nn.softplus(rho) * eps  # numerically safe sigma = softplus(rho)


def init_params(key, n_actions, n_quantiles):
    shapes = {
        "conv1_w": (32, 4, 8, 8),   "conv1_b": (32,),
        "conv2_w": (64, 32, 4, 4),  "conv2_b": (64,),
        "conv3_w": (64, 64, 3, 3),  "conv3_b": (64,),
        # fc1_w rows are indexed in (h, w, c) NHWC-flatten order (see forward).
        "fc1_w": (3136, 512),       "fc1_b": (512,),
        "fc2_w": (512, n_quantiles * n_actions),
        "fc2_b": (n_quantiles * n_actions,),
    }
    params = {}
    keys = jax.random.split(key, len(shapes))
    for (name, shp), k in zip(shapes.items(), keys):
        mu = 0.05 * jax.random.normal(k, shp, jnp.float32)
        rho = jnp.full(shp, -5.0, jnp.float32)  # small initial sigma
        params[name] = (mu, rho)
    return params


# -----------------------------------------------------------------------------
# Forward pass: BayesianAtariQRNetwork(state, train) -> [B, Q, A]
# -----------------------------------------------------------------------------
def bayesian_atari_qr_forward(params, state_nchw, noise_key,
                              *, n_actions, n_quantiles, train=True):
    B = state_nchw.shape[0]
    # NCHW -> NHWC once at the boundary; bf16 inputs halve HBM/VMEM traffic
    # (all kernels accumulate in f32 and do bias+ReLU on the f32 accumulator).
    x = jnp.transpose(state_nchw.astype(jnp.float32),
                      (0, 2, 3, 1)).astype(jnp.bfloat16)

    ks = jax.random.split(noise_key, 10)
    w1 = _sample_bayesian(*params["conv1_w"], ks[0], train)
    b1 = _sample_bayesian(*params["conv1_b"], ks[1], train)
    w2 = _sample_bayesian(*params["conv2_w"], ks[2], train)
    b2 = _sample_bayesian(*params["conv2_b"], ks[3], train)
    w3 = _sample_bayesian(*params["conv3_w"], ks[4], train)
    b3 = _sample_bayesian(*params["conv3_b"], ks[5], train)
    fw1 = _sample_bayesian(*params["fc1_w"], ks[6], train)
    fb1 = _sample_bayesian(*params["fc1_b"], ks[7], train)
    fw2 = _sample_bayesian(*params["fc2_w"], ks[8], train)
    fb2 = _sample_bayesian(*params["fc2_b"], ks[9], train)
    # TODO(synk): fuse the reparameterization of the large fc1 weight into the
    # head kernel (mu/rho tiles + pltpu.prng_random_bits / stateful_normal) to
    # skip the sampled-weight HBM round trip; kept in XLA here for robustness.

    # Torch conv weight (Cout, Cin, KH, KW) -> (Cin*KH*KW, Cout) matrix; this
    # matches conv_general_dilated_patches' channel-major (c, h, w) ordering.
    w1m = w1.reshape(w1.shape[0], -1).T.astype(jnp.bfloat16)
    w2m = w2.reshape(w2.shape[0], -1).T.astype(jnp.bfloat16)
    w3m = w3.reshape(w3.shape[0], -1).T.astype(jnp.bfloat16)

    # Atari DQN feature net
    x = pallas_conv2d_relu(x, w1m, b1, 8, 8, 4, 32)   # (B, 20, 20, 32)
    x = pallas_conv2d_relu(x, w2m, b2, 4, 4, 2, 64)   # (B,  9,  9, 64)
    x = pallas_conv2d_relu(x, w3m, b3, 3, 3, 1, 64)   # (B,  7,  7, 64)

    # Flatten directly in NHWC order (no runtime transpose); fc1_w's rows are
    # declared in (h, w, c) order. For torch-trained weights, permute rows from
    # torch's NCHW-flatten order once at parameter-load time.
    feats = x.reshape(B, -1)                          # (B, 3136) bf16

    # Fused Bayesian Q head: 3136 -> 512 (ReLU) -> Q*A in one pallas_call.
    q = pallas_q_head(feats, fw1.astype(jnp.bfloat16), fb1,
                      fw2.astype(jnp.bfloat16), fb2)  # (B, Q*A) f32

    return q.reshape(B, n_quantiles, n_actions)       # [B, Q, A]


if __name__ == "__main__":
    key = jax.random.PRNGKey(0)
    pkey, xkey, nkey = jax.random.split(key, 3)

    n_actions, n_quantiles = 4, 8
    params = init_params(pkey, n_actions, n_quantiles)

    # q_net hard-codes 3136 = 64*7*7 => standard Atari NCHW input (B, 4, 84, 84).
    state = jax.random.uniform(xkey, (2, 4, 84, 84), jnp.float32)

    fwd = jax.jit(functools.partial(bayesian_atari_qr_forward,
                                    n_actions=n_actions,
                                    n_quantiles=n_quantiles,
                                    train=True))
    out = jax.block_until_ready(fwd(params, state, nkey))
    assert out.shape == (2, n_quantiles, n_actions), out.shape
    assert out.dtype == jnp.float32
    print("KERNEL_OK")
</pallas_src>

<mosaic_0001>
module attributes {stable_mosaic.version = 11 : i64} {
  func.func @_matmul_bias_act_kernel(%arg0: i32, %arg1: i32, %arg2: memref<256x256xbf16, #tpu.memory_space<vmem>>, %arg3: memref<256x128xbf16, #tpu.memory_space<vmem>>, %arg4: memref<1x128xf32, #tpu.memory_space<vmem>>, %arg5: memref<256x128xbf16, #tpu.memory_space<vmem>>, %arg6: memref<256x128xf32, #tpu.memory_space<vmem>>) attributes {dimension_semantics = [#tpu.dimension_semantics<parallel>, #tpu.dimension_semantics<arbitrary>], iteration_bounds = array<i64: 4, 1>, scalar_prefetch = 0 : i64, scratch_operands = 1 : i64, tpu.core_type = #tpu.core_type<tc>, window_params = [{transform_indices = @transform_0, window_bounds = array<i64: 256, 256>}, {transform_indices = @transform_1, window_bounds = array<i64: 256, 128>}, {pipeline_mode = #tpu.pipeline_mode<synchronous>, transform_indices = @transform_2, window_bounds = array<i64: 1, 128>}, {transform_indices = @transform_3, window_bounds = array<i64: 256, 128>}]} {
    %c0_i32 = arith.constant 0 : i32
    %0 = arith.cmpi eq, %arg1, %c0_i32 : i32
    %1 = arith.extui %0 : i1 to i32
    %c0_i32_0 = arith.constant 0 : i32
    %2 = arith.cmpi ne, %1, %c0_i32_0 : i32
    scf.if %2 {
      %cst_10 = arith.constant 0.000000e+00 : f32
      %12 = vector.broadcast %cst_10 : f32 to vector<256x128xf32>
      %c0_11 = arith.constant 0 : index
      %c0_12 = arith.constant 0 : index
      %13 = vector.load %arg6[%c0_11, %c0_12] : memref<256x128xf32, #tpu.memory_space<vmem>>, vector<256x128xf32>
      tpu.vector_store %arg6[%c0_11, %c0_12], %12 {strides = array<i32>} : memref<256x128xf32, #tpu.memory_space<vmem>>, vector<256x128xf32>,
    } else {
    }
    %c0 = arith.constant 0 : index
    %c0_1 = arith.constant 0 : index
    %3 = vector.load %arg6[%c0, %c0_1] : memref<256x128xf32, #tpu.memory_space<vmem>>, vector<256x128xf32>
    %c0_2 = arith.constant 0 : index
    %c0_3 = arith.constant 0 : index
    %4 = vector.load %arg2[%c0_2, %c0_3] : memref<256x256xbf16, #tpu.memory_space<vmem>>, vector<256x256xbf16>
    %c0_4 = arith.constant 0 : index
    %c0_5 = arith.constant 0 : index
    %5 = vector.load %arg3[%c0_4, %c0_5] : memref<256x128xbf16, #tpu.memory_space<vmem>>, vector<256x128xbf16>
    %cst = arith.constant dense<0.000000e+00> : vector<256x128xf32>
    %6 = tpu.matmul %4, %5, %cst {dimension_numbers = #tpu.dot_dimension_numbers<[1], [0], [0], [1], [0, 0, 1, 1], [], []>} : vector<256x256xbf16>, vector<256x128xbf16>, vector<256x128xf32> -> vector<256x128xf32>
    %7 = arith.addf %3, %6 : vector<256x128xf32>
    %c0_6 = arith.constant 0 : index
    %c0_7 = arith.constant 0 : index
    %8 = vector.load %arg6[%c0_6, %c0_7] : memref<256x128xf32, #tpu.memory_space<vmem>>, vector<256x128xf32>
    tpu.vector_store %arg6[%c0_6, %c0_7], %7 {strides = array<i32>} : memref<256x128xf32, #tpu.memory_space<vmem>>, vector<256x128xf32>,
    %c0_i32_8 = arith.constant 0 : i32
    %9 = arith.cmpi eq, %arg1, %c0_i32_8 : i32
    %10 = arith.extui %9 : i1 to i32
    %c0_i32_9 = arith.constant 0 : i32
    %11 = arith.cmpi ne, %10, %c0_i32_9 : i32
    scf.if %11 {
      %c0_10 = arith.constant 0 : index
      %c0_11 = arith.constant 0 : index
      %12 = vector.load %arg6[%c0_10, %c0_11] : memref<256x128xf32, #tpu.memory_space<vmem>>, vector<256x128xf32>
      %c0_12 = arith.constant 0 : index
      %c0_13 = arith.constant 0 : index
      %13 = vector.load %arg4[%c0_12, %c0_13] : memref<1x128xf32, #tpu.memory_space<vmem>>, vector<1x128xf32>
      %14 = vector.broadcast %13 : vector<1x128xf32> to vector<256x128xf32>
      %15 = arith.addf %12, %14 : vector<256x128xf32>
      %cst_14 = arith.constant 0.000000e+00 : f32
      %16 = vector.broadcast %cst_14 : f32 to vector<256x128xf32>
      %17 = arith.maximumf %15, %16 : vector<256x128xf32>
      %18 = arith.truncf %17 : vector<256x128xf32> to vector<256x128xbf16>
      %c0_15 = arith.constant 0 : index
      %c0_16 = arith.constant 0 : index
      %19 = vector.load %arg5[%c0_15, %c0_16] : memref<256x128xbf16, #tpu.memory_space<vmem>>, vector<256x128xbf16>
      tpu.vector_store %arg5[%c0_15, %c0_16], %18 {strides = array<i32>} : memref<256x128xbf16, #tpu.memory_space<vmem>>, vector<256x128xbf16>,
    } else {
    }
    return
  }
  func.func @transform_0(%arg0: i32, %arg1: i32) -> (i32, i32) {
    %c0_i32 = arith.constant 0 : i32
    return %arg0, %arg1 : i32, i32
  }
  func.func @transform_1(%arg0: i32, %arg1: i32) -> (i32, i32) {
    %c0_i32 = arith.constant 0 : i32
    %c0_i32_0 = arith.constant 0 : i32
    return %arg1, %c0_i32 : i32, i32
  }
  func.func @transform_2(%arg0: i32, %arg1: i32) -> (i32, i32) {
    %c0_i32 = arith.constant 0 : i32
    %c0_i32_0 = arith.constant 0 : i32
    %c0_i32_1 = arith.constant 0 : i32
    return %c0_i32, %c0_i32_0 : i32, i32
  }
  func.func @transform_3(%arg0: i32, %arg1: i32) -> (i32, i32) {
    %c0_i32 = arith.constant 0 : i32
    %c0_i32_0 = arith.constant 0 : i32
    return %arg0, %c0_i32 : i32, i32
  }
}

module attributes {stable_mosaic.version = 11 : i64} {
  func.func @_matmul_bias_act_kernel(%arg0: i32, %arg1: i32, %arg2: memref<168x512xbf16, #tpu.memory_space<vmem>>, %arg3: memref<512x128xbf16, #tpu.memory_space<vmem>>, %arg4: memref<1x128xf32, #tpu.memory_space<vmem>>, %arg5: memref<168x128xbf16, #tpu.memory_space<vmem>>, %arg6: memref<168x128xf32, #tpu.memory_space<vmem>>) attributes {dimension_semantics = [#tpu.dimension_semantics<parallel>, #tpu.dimension_semantics<arbitrary>], iteration_bounds = array<i64: 1, 1>, scalar_prefetch = 0 : i64, scratch_operands = 1 : i64, tpu.core_type = #tpu.core_type<tc>, window_params = [{transform_indices = @transform_0, window_bounds = array<i64: 168, 512>}, {transform_indices = @transform_1, window_bounds = array<i64: 512, 128>}, {pipeline_mode = #tpu.pipeline_mode<synchronous>, transform_indices = @transform_2, window_bounds = array<i64: 1, 128>}, {transform_indices = @transform_3, window_bounds = array<i64: 168, 128>}]} {
    %c0_i32 = arith.constant 0 : i32
    %0 = arith.cmpi eq, %arg1, %c0_i32 : i32
    %1 = arith.extui %0 : i1 to i32
    %c0_i32_0 = arith.constant 0 : i32
    %2 = arith.cmpi ne, %1, %c0_i32_0 : i32
    scf.if %2 {
      %cst_10 = arith.constant 0.000000e+00 : f32
      %12 = vector.broadcast %cst_10 : f32 to vector<168x128xf32>
      %c0_11 = arith.constant 0 : index
      %c0_12 = arith.constant 0 : index
      %13 = vector.load %arg6[%c0_11, %c0_12] : memref<168x128xf32, #tpu.memory_space<vmem>>, vector<168x128xf32>
      tpu.vector_store %arg6[%c0_11, %c0_12], %12 {strides = array<i32>} : memref<168x128xf32, #tpu.memory_space<vmem>>, vector<168x128xf32>,
    } else {
    }
    %c0 = arith.constant 0 : index
    %c0_1 = arith.constant 0 : index
    %3 = vector.load %arg6[%c0, %c0_1] : memref<168x128xf32, #tpu.memory_space<vmem>>, vector<168x128xf32>
    %c0_2 = arith.constant 0 : index
    %c0_3 = arith.constant 0 : index
    %4 = vector.load %arg2[%c0_2, %c0_3] : memref<168x512xbf16, #tpu.memory_space<vmem>>, vector<168x512xbf16>
    %c0_4 = arith.constant 0 : index
    %c0_5 = arith.constant 0 : index
    %5 = vector.load %arg3[%c0_4, %c0_5] : memref<512x128xbf16, #tpu.memory_space<vmem>>, vector<512x128xbf16>
    %cst = arith.constant dense<0.000000e+00> : vector<168x128xf32>
    %6 = tpu.matmul %4, %5, %cst {dimension_numbers = #tpu.dot_dimension_numbers<[1], [0], [0], [1], [0, 0, 1, 1], [], []>} : vector<168x512xbf16>, vector<512x128xbf16>, vector<168x128xf32> -> vector<168x128xf32>
    %7 = arith.addf %3, %6 : vector<168x128xf32>
    %c0_6 = arith.constant 0 : index
    %c0_7 = arith.constant 0 : index
    %8 = vector.load %arg6[%c0_6, %c0_7] : memref<168x128xf32, #tpu.memory_space<vmem>>, vector<168x128xf32>
    tpu.vector_store %arg6[%c0_6, %c0_7], %7 {strides = array<i32>} : memref<168x128xf32, #tpu.memory_space<vmem>>, vector<168x128xf32>,
    %c0_i32_8 = arith.constant 0 : i32
    %9 = arith.cmpi eq, %arg1, %c0_i32_8 : i32
    %10 = arith.extui %9 : i1 to i32
    %c0_i32_9 = arith.constant 0 : i32
    %11 = arith.cmpi ne, %10, %c0_i32_9 : i32
    scf.if %11 {
      %c0_10 = arith.constant 0 : index
      %c0_11 = arith.constant 0 : index
      %12 = vector.load %arg6[%c0_10, %c0_11] : memref<168x128xf32, #tpu.memory_space<vmem>>, vector<168x128xf32>
      %c0_12 = arith.constant 0 : index
      %c0_13 = arith.constant 0 : index
      %13 = vector.load %arg4[%c0_12, %c0_13] : memref<1x128xf32, #tpu.memory_space<vmem>>, vector<1x128xf32>
      %14 = vector.broadcast %13 : vector<1x128xf32> to vector<168x128xf32>
      %15 = arith.addf %12, %14 : vector<168x128xf32>
      %cst_14 = arith.constant 0.000000e+00 : f32
      %16 = vector.broadcast %cst_14 : f32 to vector<168x128xf32>
      %17 = arith.maximumf %15, %16 : vector<168x128xf32>
      %18 = arith.truncf %17 : vector<168x128xf32> to vector<168x128xbf16>
      %c0_15 = arith.constant 0 : index
      %c0_16 = arith.constant 0 : index
      %19 = vector.load %arg5[%c0_15, %c0_16] : memref<168x128xbf16, #tpu.memory_space<vmem>>, vector<168x128xbf16>
      tpu.vector_store %arg5[%c0_15, %c0_16], %18 {strides = array<i32>} : memref<168x128xbf16, #tpu.memory_space<vmem>>, vector<168x128xbf16>,
    } else {
    }
    return
  }
  func.func @transform_0(%arg0: i32, %arg1: i32) -> (i32, i32) {
    %c0_i32 = arith.constant 0 : i32
    return %arg0, %arg1 : i32, i32
  }
  func.func @transform_1(%arg0: i32, %arg1: i32) -> (i32, i32) {
    %c0_i32 = arith.constant 0 : i32
    %c0_i32_0 = arith.constant 0 : i32
    return %arg1, %c0_i32 : i32, i32
  }
  func.func @transform_2(%arg0: i32, %arg1: i32) -> (i32, i32) {
    %c0_i32 = arith.constant 0 : i32
    %c0_i32_0 = arith.constant 0 : i32
    %c0_i32_1 = arith.constant 0 : i32
    return %c0_i32, %c0_i32_0 : i32, i32
  }
  func.func @transform_3(%arg0: i32, %arg1: i32) -> (i32, i32) {
    %c0_i32 = arith.constant 0 : i32
    %c0_i32_0 = arith.constant 0 : i32
    return %arg0, %c0_i32 : i32, i32
  }
}

module attributes {stable_mosaic.version = 11 : i64} {
  func.func @_matmul_bias_act_kernel(%arg0: i32, %arg1: i32, %arg2: memref<104x640xbf16, #tpu.memory_space<vmem>>, %arg3: memref<640x128xbf16, #tpu.memory_space<vmem>>, %arg4: memref<1x128xf32, #tpu.memory_space<vmem>>, %arg5: memref<104x128xbf16, #tpu.memory_space<vmem>>, %arg6: memref<104x128xf32, #tpu.memory_space<vmem>>) attributes {dimension_semantics = [#tpu.dimension_semantics<parallel>, #tpu.dimension_semantics<arbitrary>], iteration_bounds = array<i64: 1, 1>, scalar_prefetch = 0 : i64, scratch_operands = 1 : i64, tpu.core_type = #tpu.core_type<tc>, window_params = [{transform_indices = @transform_0, window_bounds = array<i64: 104, 640>}, {transform_indices = @transform_1, window_bounds = array<i64: 640, 128>}, {pipeline_mode = #tpu.pipeline_mode<synchronous>, transform_indices = @transform_2, window_bounds = array<i64: 1, 128>}, {transform_indices = @transform_3, window_bounds = array<i64: 104, 128>}]} {
    %c0_i32 = arith.constant 0 : i32
    %0 = arith.cmpi eq, %arg1, %c0_i32 : i32
    %1 = arith.extui %0 : i1 to i32
    %c0_i32_0 = arith.constant 0 : i32
    %2 = arith.cmpi ne, %1, %c0_i32_0 : i32
    scf.if %2 {
      %cst_10 = arith.constant 0.000000e+00 : f32
      %12 = vector.broadcast %cst_10 : f32 to vector<104x128xf32>
      %c0_11 = arith.constant 0 : index
      %c0_12 = arith.constant 0 : index
      %13 = vector.load %arg6[%c0_11, %c0_12] : memref<104x128xf32, #tpu.memory_space<vmem>>, vector<104x128xf32>
      tpu.vector_store %arg6[%c0_11, %c0_12], %12 {strides = array<i32>} : memref<104x128xf32, #tpu.memory_space<vmem>>, vector<104x128xf32>,
    } else {
    }
    %c0 = arith.constant 0 : index
    %c0_1 = arith.constant 0 : index
    %3 = vector.load %arg6[%c0, %c0_1] : memref<104x128xf32, #tpu.memory_space<vmem>>, vector<104x128xf32>
    %c0_2 = arith.constant 0 : index
    %c0_3 = arith.constant 0 : index
    %4 = vector.load %arg2[%c0_2, %c0_3] : memref<104x640xbf16, #tpu.memory_space<vmem>>, vector<104x640xbf16>
    %c0_4 = arith.constant 0 : index
    %c0_5 = arith.constant 0 : index
    %5 = vector.load %arg3[%c0_4, %c0_5] : memref<640x128xbf16, #tpu.memory_space<vmem>>, vector<640x128xbf16>
    %cst = arith.constant dense<0.000000e+00> : vector<104x128xf32>
    %6 = tpu.matmul %4, %5, %cst {dimension_numbers = #tpu.dot_dimension_numbers<[1], [0], [0], [1], [0, 0, 1, 1], [], []>} : vector<104x640xbf16>, vector<640x128xbf16>, vector<104x128xf32> -> vector<104x128xf32>
    %7 = arith.addf %3, %6 : vector<104x128xf32>
    %c0_6 = arith.constant 0 : index
    %c0_7 = arith.constant 0 : index
    %8 = vector.load %arg6[%c0_6, %c0_7] : memref<104x128xf32, #tpu.memory_space<vmem>>, vector<104x128xf32>
    tpu.vector_store %arg6[%c0_6, %c0_7], %7 {strides = array<i32>} : memref<104x128xf32, #tpu.memory_space<vmem>>, vector<104x128xf32>,
    %c0_i32_8 = arith.constant 0 : i32
    %9 = arith.cmpi eq, %arg1, %c0_i32_8 : i32
    %10 = arith.extui %9 : i1 to i32
    %c0_i32_9 = arith.constant 0 : i32
    %11 = arith.cmpi ne, %10, %c0_i32_9 : i32
    scf.if %11 {
      %c0_10 = arith.constant 0 : index
      %c0_11 = arith.constant 0 : index
      %12 = vector.load %arg6[%c0_10, %c0_11] : memref<104x128xf32, #tpu.memory_space<vmem>>, vector<104x128xf32>
      %c0_12 = arith.constant 0 : index
      %c0_13 = arith.constant 0 : index
      %13 = vector.load %arg4[%c0_12, %c0_13] : memref<1x128xf32, #tpu.memory_space<vmem>>, vector<1x128xf32>
      %14 = vector.broadcast %13 : vector<1x128xf32> to vector<104x128xf32>
      %15 = arith.addf %12, %14 : vector<104x128xf32>
      %cst_14 = arith.constant 0.000000e+00 : f32
      %16 = vector.broadcast %cst_14 : f32 to vector<104x128xf32>
      %17 = arith.maximumf %15, %16 : vector<104x128xf32>
      %18 = arith.truncf %17 : vector<104x128xf32> to vector<104x128xbf16>
      %c0_15 = arith.constant 0 : index
      %c0_16 = arith.constant 0 : index
      %19 = vector.load %arg5[%c0_15, %c0_16] : memref<104x128xbf16, #tpu.memory_space<vmem>>, vector<104x128xbf16>
      tpu.vector_store %arg5[%c0_15, %c0_16], %18 {strides = array<i32>} : memref<104x128xbf16, #tpu.memory_space<vmem>>, vector<104x128xbf16>,
    } else {
    }
    return
  }
  func.func @transform_0(%arg0: i32, %arg1: i32) -> (i32, i32) {
    %c0_i32 = arith.constant 0 : i32
    return %arg0, %arg1 : i32, i32
  }
  func.func @transform_1(%arg0: i32, %arg1: i32) -> (i32, i32) {
    %c0_i32 = arith.constant 0 : i32
    %c0_i32_0 = arith.constant 0 : i32
    return %arg1, %c0_i32 : i32, i32
  }
  func.func @transform_2(%arg0: i32, %arg1: i32) -> (i32, i32) {
    %c0_i32 = arith.constant 0 : i32
    %c0_i32_0 = arith.constant 0 : i32
    %c0_i32_1 = arith.constant 0 : i32
    return %c0_i32, %c0_i32_0 : i32, i32
  }
  func.func @transform_3(%arg0: i32, %arg1: i32) -> (i32, i32) {
    %c0_i32 = arith.constant 0 : i32
    %c0_i32_0 = arith.constant 0 : i32
    return %arg0, %c0_i32 : i32, i32
  }
}

module attributes {stable_mosaic.version = 11 : i64} {
  func.func @_q_head_kernel(%arg0: i32, %arg1: memref<8x512xbf16, #tpu.memory_space<vmem>>, %arg2: memref<512x512xbf16, #tpu.memory_space<vmem>>, %arg3: memref<1x512xf32, #tpu.memory_space<vmem>>, %arg4: memref<512x128xbf16, #tpu.memory_space<vmem>>, %arg5: memref<1x128xf32, #tpu.memory_space<vmem>>, %arg6: memref<8x128xf32, #tpu.memory_space<vmem>>, %arg7: memref<8x512xf32, #tpu.memory_space<vmem>>) attributes {dimension_semantics = [#tpu.dimension_semantics<arbitrary>], iteration_bounds = array<i64: 7>, scalar_prefetch = 0 : i64, scratch_operands = 1 : i64, tpu.core_type = #tpu.core_type<tc>, window_params = [{transform_indices = @transform_0, window_bounds = array<i64: 8, 512>}, {transform_indices = @transform_1, window_bounds = array<i64: 512, 512>}, {pipeline_mode = #tpu.pipeline_mode<synchronous>, transform_indices = @transform_2, window_bounds = array<i64: 1, 512>}, {pipeline_mode = #tpu.pipeline_mode<synchronous>, transform_indices = @transform_3, window_bounds = array<i64: 512, 128>}, {pipeline_mode = #tpu.pipeline_mode<synchronous>, transform_indices = @transform_4, window_bounds = array<i64: 1, 128>}, {pipeline_mode = #tpu.pipeline_mode<synchronous>, transform_indices = @transform_5, window_bounds = array<i64: 8, 128>}]} {
    %c0_i32 = arith.constant 0 : i32
    %0 = arith.cmpi eq, %arg0, %c0_i32 : i32
    %1 = arith.extui %0 : i1 to i32
    %c0_i32_0 = arith.constant 0 : i32
    %2 = arith.cmpi ne, %1, %c0_i32_0 : i32
    scf.if %2 {
      %cst_9 = arith.constant 0.000000e+00 : f32
      %12 = vector.broadcast %cst_9 : f32 to vector<8x512xf32>
      %c0_10 = arith.constant 0 : index
      %c0_11 = arith.constant 0 : index
      %13 = vector.load %arg7[%c0_10, %c0_11] : memref<8x512xf32, #tpu.memory_space<vmem>>, vector<8x512xf32>
      tpu.vector_store %arg7[%c0_10, %c0_11], %12 {strides = array<i32>} : memref<8x512xf32, #tpu.memory_space<vmem>>, vector<8x512xf32>,
    } else {
    }
    %c0 = arith.constant 0 : index
    %c0_1 = arith.constant 0 : index
    %3 = vector.load %arg7[%c0, %c0_1] : memref<8x512xf32, #tpu.memory_space<vmem>>, vector<8x512xf32>
    %c0_2 = arith.constant 0 : index
    %c0_3 = arith.constant 0 : index
    %4 = vector.load %arg1[%c0_2, %c0_3] : memref<8x512xbf16, #tpu.memory_space<vmem>>, vector<8x512xbf16>
    %c0_4 = arith.constant 0 : index
    %c0_5 = arith.constant 0 : index
    %5 = vector.load %arg2[%c0_4, %c0_5] : memref<512x512xbf16, #tpu.memory_space<vmem>>, vector<512x512xbf16>
    %cst = arith.constant dense<0.000000e+00> : vector<8x512xf32>
    %6 = tpu.matmul %4, %5, %cst {dimension_numbers = #tpu.dot_dimension_numbers<[1], [0], [0], [1], [0, 0, 1, 1], [], []>} : vector<8x512xbf16>, vector<512x512xbf16>, vector<8x512xf32> -> vector<8x512xf32>
    %7 = arith.addf %3, %6 : vector<8x512xf32>
    %c0_6 = arith.constant 0 : index
    %c0_7 = arith.constant 0 : index
    %8 = vector.load %arg7[%c0_6, %c0_7] : memref<8x512xf32, #tpu.memory_space<vmem>>, vector<8x512xf32>
    tpu.vector_store %arg7[%c0_6, %c0_7], %7 {strides = array<i32>} : memref<8x512xf32, #tpu.memory_space<vmem>>, vector<8x512xf32>,
    %c6_i32 = arith.constant 6 : i32
    %9 = arith.cmpi eq, %arg0, %c6_i32 : i32
    %10 = arith.extui %9 : i1 to i32
    %c0_i32_8 = arith.constant 0 : i32
    %11 = arith.cmpi ne, %10, %c0_i32_8 : i32
    scf.if %11 {
      %c0_9 = arith.constant 0 : index
      %c0_10 = arith.constant 0 : index
      %12 = vector.load %arg7[%c0_9, %c0_10] : memref<8x512xf32, #tpu.memory_space<vmem>>, vector<8x512xf32>
      %c0_11 = arith.constant 0 : index
      %c0_12 = arith.constant 0 : index
      %13 = vector.load %arg3[%c0_11, %c0_12] : memref<1x512xf32, #tpu.memory_space<vmem>>, vector<1x512xf32>
      %14 = vector.broadcast %13 : vector<1x512xf32> to vector<8x512xf32>
      %15 = arith.addf %12, %14 : vector<8x512xf32>
      %cst_13 = arith.constant 0.000000e+00 : f32
      %16 = vector.broadcast %cst_13 : f32 to vector<8x512xf32>
      %17 = arith.maximumf %15, %16 : vector<8x512xf32>
      %18 = arith.truncf %17 : vector<8x512xf32> to vector<8x512xbf16>
      %c0_14 = arith.constant 0 : index
      %c0_15 = arith.constant 0 : index
      %19 = vector.load %arg4[%c0_14, %c0_15] : memref<512x128xbf16, #tpu.memory_space<vmem>>, vector<512x128xbf16>
      %cst_16 = arith.constant dense<0.000000e+00> : vector<8x128xf32>
      %20 = tpu.matmul %18, %19, %cst_16 {dimension_numbers = #tpu.dot_dimension_numbers<[1], [0], [0], [1], [0, 0, 1, 1], [], []>} : vector<8x512xbf16>, vector<512x128xbf16>, vector<8x128xf32> -> vector<8x128xf32>
      %c0_17 = arith.constant 0 : index
      %c0_18 = arith.constant 0 : index
      %21 = vector.load %arg5[%c0_17, %c0_18] : memref<1x128xf32, #tpu.memory_space<vmem>>, vector<1x128xf32>
      %22 = vector.broadcast %21 : vector<1x128xf32> to vector<8x128xf32>
      %23 = arith.addf %20, %22 : vector<8x128xf32>
      %c0_19 = arith.constant 0 : index
      %c0_20 = arith.constant 0 : index
      %24 = vector.load %arg6[%c0_19, %c0_20] : memref<8x128xf32, #tpu.memory_space<vmem>>, vector<8x128xf32>
      tpu.vector_store %arg6[%c0_19, %c0_20], %23 {strides = array<i32>} : memref<8x128xf32, #tpu.memory_space<vmem>>, vector<8x128xf32>,
    } else {
    }
    return
  }
  func.func @transform_0(%arg0: i32) -> (i32, i32) {
    %c0_i32 = arith.constant 0 : i32
    %c0_i32_0 = arith.constant 0 : i32
    return %c0_i32, %arg0 : i32, i32
  }
  func.func @transform_1(%arg0: i32) -> (i32, i32) {
    %c0_i32 = arith.constant 0 : i32
    %c0_i32_0 = arith.constant 0 : i32
    return %arg0, %c0_i32 : i32, i32
  }
  func.func @transform_2(%arg0: i32) -> (i32, i32) {
    %c0_i32 = arith.constant 0 : i32
    %c0_i32_0 = arith.constant 0 : i32
    %c0_i32_1 = arith.constant 0 : i32
    return %c0_i32, %c0_i32_0 : i32, i32
  }
  func.func @transform_3(%arg0: i32) -> (i32, i32) {
    %c0_i32 = arith.constant 0 : i32
    %c0_i32_0 = arith.constant 0 : i32
    %c0_i32_1 = arith.constant 0 : i32
    return %c0_i32, %c0_i32_0 : i32, i32
  }
  func.func @transform_4(%arg0: i32) -> (i32, i32) {
    %c0_i32 = arith.constant 0 : i32
    %c0_i32_0 = arith.constant 0 : i32
    %c0_i32_1 = arith.constant 0 : i32
    return %c0_i32, %c0_i32_0 : i32, i32
  }
  func.func @transform_5(%arg0: i32) -> (i32, i32) {
    %c0_i32 = arith.constant 0 : i32
    %c0_i32_0 = arith.constant 0 : i32
    %c0_i32_1 = arith.constant 0 : i32
    return %c0_i32, %c0_i32_0 : i32, i32
  }
}

</mosaic_0001>

<llo_original>
// kernel: bayesian_atari_qr_forward.6
$region0: #{bayesian_atari_qr_forward.6}
  #allocation0 [shape = 'u32[]', space=smem, size = 0x4, offset = 0x4, fixed_abs, tag = 'smem constant byte address 0x4 - core index']
  #allocation1 [shape = 'u32[144,128]{1,0:T(1,128)}', space=vmem, size = 0x12000, scoped, tag = 'internal scratch']
  #allocation2 [shape = 'f32[256,128]{1,0:T(8,128)}', space=vmem, size = 0x20000, scoped, tag = 'scratch operand']
  %s0 = inlined_call_operand.vmem [shape: bf16[1024,256], index: 0, kind: input, shape index: {}]
  %s1 = inlined_call_operand.vmem [shape: bf16[256,128], index: 1, kind: input, shape index: {}]
  %s2 = inlined_call_operand.vmem [shape: f32[1,128], index: 2, kind: input, shape index: {}]
  %s3 = inlined_call_operand.vmem [shape: bf16[1024,128], index: 3, kind: output, shape index: {}]
  %s4 = sld [smem:[#allocation0]]
  $region53: #{bayesian_atari_qr_forward.6} parent=0
    _
  %s6 = ssub.s32 1, %s4
  %s7 = scalar_select 0, %s6, %s4
  loop: start=0, step=1, limit=6
  $region2: #{bayesian_atari_qr_forward.6} parent=0 // loop_pre_header
    _
  $region3: #{bayesian_atari_qr_forward.6} parent=0 // loop_header
    %s9 = sphi 0, %s13
    %p10 = scmp.ge.s32.totalorder %s9, 6
    %s16 = sphi 0, %s28
    %s17 = sphi 0, %s24
    %s18 = sphi 0, %s16
    %s19 = sphi 0, %s17
    %s20 = sphi 0, %s18
    %s21 = sphi 0, %s19
    %s33 = sphi 0, %s35
    %s36 = sphi 0, %s33
    %s37 = sphi 0, %s36
    %s53 = sphi 0, %s37
    %s59 = sphi 0, %s61
    %s62 = sphi 0, %s59
    %s63 = sphi 0, %s62
    %s79 = sphi 0, %s63
    %s83 = sphi 0, %s83
    %s85 = sphi 0, %s83
    %s86 = sphi 0, %s85
    %s100 = sphi 0, %s86
    %s106 = sphi 0, %s108
    %s109 = sphi 0, %s106
    %s110 = sphi 0, %s109
    %s126 = sphi 0, %s110
  $region4: #{bayesian_atari_qr_forward.6} parent=0 // loop_header_branch
    %12 = sbr.rel (%p10) target = $region8
  $region5: #{bayesian_atari_qr_forward.6} parent=0 // loop_body
    %s14 = ssub.s32 %s9, 1
    %s15 = ssub.s32 %s9, 2
    %s22 = sadd.s32 1, %s17
    %p23 = scmp.ge.s32.totalorder %s22, 1
    %s24 = scalar_select %p23, 0, %s22
    %s25 = sadd.s32 1, %s16
    %s26 = scalar_select %p23, %s25, %s16
    %p27 = scmp.ge.s32.totalorder %s26, 4
    %s28 = scalar_select %p27, 0, %s26
    %s29 = ssub.s32 %s16, %s28
    %s30 = ssub.s32 %s17, %s24
    %s31 = sor.u32 %s29, %s30
    %p32 = scmp.eq.s32.totalorder %s31, 0
    %s34 = sadd.s32 %s33, 1
    %s35 = scalar_select %p32, %s33, %s34
    %p38 = pneg %p32
    %p39 = scmp.eq.s32.totalorder %s9, 3
    %p40 = por %p38, %p39
    %p41 = scmp.ne.s32.totalorder %s33, %s36
    %p42 = scmp.eq.s32.totalorder %s9, 0
    %p43 = por %p41, %p42
    %p44 = scmp.ne.s32.totalorder %s33, %s36
    %p45 = scmp.eq.s32.totalorder %s14, 3
    %p46 = por %p44, %p45
    %p47 = scmp.ne.s32.totalorder %s36, %s37
    %p48 = scmp.eq.s32.totalorder %s14, 0
    %p49 = por %p47, %p48
    %p50 = scmp.ne.s32.totalorder %s36, %s37
    %p51 = scmp.eq.s32.totalorder %s15, 3
    %p52 = por %p50, %p51
    %p54 = scmp.ne.s32.totalorder %s37, %s53
    %p55 = scmp.eq.s32.totalorder %s15, 0
    %p56 = por %p54, %p55
    %s57 = ssub.s32 %s17, %s24
    %p58 = scmp.eq.s32.totalorder %s57, 0
    %s60 = sadd.s32 %s59, 1
    %s61 = scalar_select %p58, %s59, %s60
    %p64 = pneg %p58
    %p65 = scmp.eq.s32.totalorder %s9, 3
    %p66 = por %p64, %p65
    %p67 = scmp.ne.s32.totalorder %s59, %s62
    %p68 = scmp.eq.s32.totalorder %s9, 0
    %p69 = por %p67, %p68
    %p70 = scmp.ne.s32.totalorder %s59, %s62
    %p71 = scmp.eq.s32.totalorder %s14, 3
    %p72 = por %p70, %p71
    %p73 = scmp.ne.s32.totalorder %s62, %s63
    %p74 = scmp.eq.s32.totalorder %s14, 0
    %p75 = por %p73, %p74
    %p76 = scmp.ne.s32.totalorder %s62, %s63
    %p77 = scmp.eq.s32.totalorder %s15, 3
    %p78 = por %p76, %p77
    %p80 = scmp.ne.s32.totalorder %s63, %s79
    %p81 = scmp.eq.s32.totalorder %s15, 0
    %p82 = por %p80, %p81
    %s84 = sadd.s32 %s83, 1
    %p87 = scmp.eq.s32.totalorder %s9, 3
    %p88 = scmp.ne.s32.totalorder %s83, %s85
    %p89 = scmp.eq.s32.totalorder %s9, 0
    %p90 = por %p88, %p89
    %p91 = scmp.ne.s32.totalorder %s83, %s85
    %p92 = scmp.eq.s32.totalorder %s14, 3
    %p93 = por %p91, %p92
    %p94 = scmp.ne.s32.totalorder %s85, %s86
    %p95 = scmp.eq.s32.totalorder %s14, 0
    %p96 = por %p94, %p95
    %p97 = scmp.ne.s32.totalorder %s85, %s86
    %p98 = scmp.eq.s32.totalorder %s15, 3
    %p99 = por %p97, %p98
    %p101 = scmp.ne.s32.totalorder %s86, %s100
    %p102 = scmp.eq.s32.totalorder %s15, 0
    %p103 = por %p101, %p102
    %s104 = ssub.s32 %s16, %s28
    %p105 = scmp.eq.s32.totalorder %s104, 0
    %s107 = sadd.s32 %s106, 1
    %s108 = scalar_select %p105, %s106, %s107
    %p111 = pneg %p105
    %p112 = scmp.eq.s32.totalorder %s9, 3
    %p113 = por %p111, %p112
    %p114 = scmp.ne.s32.totalorder %s106, %s109
    %p115 = scmp.eq.s32.totalorder %s9, 0
    %p116 = por %p114, %p115
    %p117 = scmp.ne.s32.totalorder %s106, %s109
    %p118 = scmp.eq.s32.totalorder %s14, 3
    %p119 = por %p117, %p118
    %p120 = scmp.ne.s32.totalorder %s109, %s110
    %p121 = scmp.eq.s32.totalorder %s14, 0
    %p122 = por %p120, %p121
    %p123 = scmp.ne.s32.totalorder %s109, %s110
    %p124 = scmp.eq.s32.totalorder %s15, 3
    %p125 = por %p123, %p124
    %p127 = scmp.ne.s32.totalorder %s110, %s126
    %p128 = scmp.eq.s32.totalorder %s15, 0
    %p129 = por %p127, %p128
    %p130 = scmp.le.s32.totalorder 1, %s9
    %p131 = scmp.lt.s32.totalorder %s9, 5
    %p132 = pnand %p130, %p131
    %p133 = pneg %p132
    // Predicated region
    $region9: #{bayesian_atari_qr_forward.6} parent=5 // pred_check
      _
    $region10: #{bayesian_atari_qr_forward.6} parent=5 // pred_check_branch
      %135 = sbr.rel (%p132) target = $region12
    $region11: #{bayesian_atari_qr_forward.6} parent=5 // pred_region
      %s136 = ssub.s32 %s9, 1
      // Predicated region
      $region13: #{bayesian_atari_qr_forward.6} parent=11 // pred_check
        %p137 = pneg %p75
      $region14: #{bayesian_atari_qr_forward.6} parent=11 // pred_check_branch
        %139 = sbr.rel (%p137) target = $region16
      $region15: #{bayesian_atari_qr_forward.6} parent=11 // pred_region
        %s140 = smul.u32 32, %s19
        %p141 = scmp.lt.s32.totalorder %s140, 31
        %s142 = scalar_select %p141, %s140, 31
        %s143 = smul.addr %s142, 4
        %s144 = scalar_lea.vmem %s1, %s143
        %s145 = smul.u32 32, %s19
      $region16: #{bayesian_atari_qr_forward.6} parent=11 // pred_fallthru
        _
      // Predicated region
      $region17: #{bayesian_atari_qr_forward.6} parent=11 // pred_check
        %p146 = pneg %p96
      $region18: #{bayesian_atari_qr_forward.6} parent=11 // pred_check_branch
        %148 = sbr.rel (%p146) target = $region20
      $region19: #{bayesian_atari_qr_forward.6} parent=11 // pred_region
        _
      $region20: #{bayesian_atari_qr_forward.6} parent=11 // pred_fallthru
        _
    $region12: #{bayesian_atari_qr_forward.6} parent=5 // pred_fallthru
      _
    %p149 = scmp.lt.s32.totalorder %s9, 4
    // Predicated region
    $region21: #{bayesian_atari_qr_forward.6} parent=5 // pred_check
      %p150 = pneg %p149
    $region22: #{bayesian_atari_qr_forward.6} parent=5 // pred_check_branch
      %152 = sbr.rel (%p150) target = $region24
    $region23: #{bayesian_atari_qr_forward.6} parent=5 // pred_region
      // Predicated region
      $region25: #{bayesian_atari_qr_forward.6} parent=23 // pred_check
        %p153 = pneg %p43
      $region26: #{bayesian_atari_qr_forward.6} parent=23 // pred_check_branch
        %155 = sbr.rel (%p153) target = $region28
      $region27: #{bayesian_atari_qr_forward.6} parent=23 // pred_region
        %s156 = smul.u32 32, %s16
        %s157 = smul.u32 2, %s17
        %p158 = scmp.lt.s32.totalorder %s156, 127
        %s159 = scalar_select %p158, %s156, 127
        %p160 = scmp.lt.s32.totalorder %s157, 1
        %s161 = scalar_select %p160, %s157, 1
        %s162 = smul.addr %s159, 2
        %s163 = sadd.s32 %s161, %s162
        %s164 = smul.addr %s163, 4
        %s165 = scalar_lea.vmem %s0, %s164
        %s166 = smul.u32 32, %s16
        %s167 = smul.u32 2, %s17
      $region28: #{bayesian_atari_qr_forward.6} parent=23 // pred_fallthru
        _
    $region24: #{bayesian_atari_qr_forward.6} parent=5 // pred_fallthru
      _
    %p168 = scmp.le.s32.totalorder 1, %s9
    %p169 = scmp.lt.s32.totalorder %s9, 5
    %p170 = pnand %p168, %p169
    %p171 = pneg %p170
    // Predicated region
    $region29: #{bayesian_atari_qr_forward.6} parent=5 // pred_check
      _
    $region30: #{bayesian_atari_qr_forward.6} parent=5 // pred_check_branch
      %173 = sbr.rel (%p170) target = $region32
    $region31: #{bayesian_atari_qr_forward.6} parent=5 // pred_region
      %s174 = ssub.s32 %s9, 1
      %s175 = smul.u32 32, %s18
      %s176 = smul.u32 2, %s19
      %p177 = scmp.lt.s32.totalorder %s175, 127
      %s178 = scalar_select %p177, %s175, 127
      %p179 = scmp.lt.s32.totalorder %s176, 1
      %s180 = scalar_select %p179, %s176, 1
      %s181 = smul.addr %s178, 2
      %s182 = sadd.s32 %s180, %s181
      %s183 = smul.addr %s182, 4
      %s184 = scalar_lea.vmem %s0, %s183
      %p185 = pneg %p49
      %p186 = pneg %p46
      %s187 = smul.u32 32, %s19
      %p188 = scmp.lt.s32.totalorder %s187, 31
      %s189 = scalar_select %p188, %s187, 31
      %s190 = smul.addr %s189, 4
      %s191 = scalar_lea.vmem %s1, %s190
      %p192 = pneg %p75
      %p193 = pneg %p72
      %p194 = pneg %p96
      %p195 = pneg %p93
      %p196 = pneg %p122
      %p197 = pneg %p119
      %s198 = smul.u32 32, %s18
      %p199 = scmp.lt.s32.totalorder %s198, 127
      %s200 = scalar_select %p199, %s198, 127
      %s201 = smul.addr %s200, 4
      %s202 = scalar_lea.vmem %s3, %s201
      %s203 = smul.u32 32, %s18
      %s204 = smul.u32 2, %s19
      %p205 = scmp.lt.s32.totalorder %s203, 127
      %s206 = scalar_select %p205, %s203, 127
      %p207 = scmp.lt.s32.totalorder %s204, 1
      %s208 = scalar_select %p207, %s204, 1
      %s209 = smul.addr %s206, 2
      %s210 = sadd.s32 %s208, %s209
      %s211 = smul.addr %s210, 4
      %s212 = scalar_lea.vmem %s0, %s211
      %s213 = smul.u32 32, %s18
      %s214 = smul.u32 2, %s19
      %s215 = smul.u32 32, %s19
      %p216 = scmp.lt.s32.totalorder %s215, 31
      %s217 = scalar_select %p216, %s215, 31
      %s218 = smul.addr %s217, 4
      %s219 = scalar_lea.vmem %s1, %s218
      %s220 = smul.u32 32, %s19
      %s221 = smul.u32 32, %s18
      %p222 = scmp.lt.s32.totalorder %s221, 127
      %s223 = scalar_select %p222, %s221, 127
      %s224 = smul.addr %s223, 4
      %s225 = scalar_lea.vmem %s3, %s224
      %s226 = smul.u32 32, %s18
      %p228 = scmp.eq.s32.totalorder %s19, 0
      // Predicated region
      $region33: #{bayesian_atari_qr_forward.6} parent=31 // pred_check
        %p229 = pneg %p228
      $region34: #{bayesian_atari_qr_forward.6} parent=31 // pred_check_branch
        %231 = sbr.rel (%p229) target = $region36
      $region35: #{bayesian_atari_qr_forward.6} parent=31 // pred_region
        %232 = vst [vmem:[#allocation2] sm:$0xff] 0.0
        %233 = vst [vmem:[#allocation2 + $0x8] sm:$0xff] 0.0
        %234 = vst [vmem:[#allocation2 + $0x10] sm:$0xff] 0.0
        %235 = vst [vmem:[#allocation2 + $0x18] sm:$0xff] 0.0
        %236 = vst [vmem:[#allocation2 + $0x20] sm:$0xff] 0.0
        %237 = vst [vmem:[#allocation2 + $0x28] sm:$0xff] 0.0
        %238 = vst [vmem:[#allocation2 + $0x30] sm:$0xff] 0.0
        %239 = vst [vmem:[#allocation2 + $0x38] sm:$0xff] 0.0
        %240 = vst [vmem:[#allocation2 + $0x40] sm:$0xff] 0.0
        %241 = vst [vmem:[#allocation2 + $0x48] sm:$0xff] 0.0
        %242 = vst [vmem:[#allocation2 + $0x50] sm:$0xff] 0.0
        %243 = vst [vmem:[#allocation2 + $0x58] sm:$0xff] 0.0
        %244 = vst [vmem:[#allocation2 + $0x60] sm:$0xff] 0.0
        %245 = vst [vmem:[#allocation2 + $0x68] sm:$0xff] 0.0
        %246 = vst [vmem:[#allocation2 + $0x70] sm:$0xff] 0.0
        %247 = vst [vmem:[#allocation2 + $0x78] sm:$0xff] 0.0
        %248 = vst [vmem:[#allocation2 + $0x80] sm:$0xff] 0.0
        %249 = vst [vmem:[#allocation2 + $0x88] sm:$0xff] 0.0
        %250 = vst [vmem:[#allocation2 + $0x90] sm:$0xff] 0.0
        %251 = vst [vmem:[#allocation2 + $0x98] sm:$0xff] 0.0
        %252 = vst [vmem:[#allocation2 + $0xa0] sm:$0xff] 0.0
        %253 = vst [vmem:[#allocation2 + $0xa8] sm:$0xff] 0.0
        %254 = vst [vmem:[#allocation2 + $0xb0] sm:$0xff] 0.0
        %255 = vst [vmem:[#allocation2 + $0xb8] sm:$0xff] 0.0
        %256 = vst [vmem:[#allocation2 + $0xc0] sm:$0xff] 0.0
        %257 = vst [vmem:[#allocation2 + $0xc8] sm:$0xff] 0.0
        %258 = vst [vmem:[#allocation2 + $0xd0] sm:$0xff] 0.0
        %259 = vst [vmem:[#allocation2 + $0xd8] sm:$0xff] 0.0
        %260 = vst [vmem:[#allocation2 + $0xe0] sm:$0xff] 0.0
        %261 = vst [vmem:[#allocation2 + $0xe8] sm:$0xff] 0.0
        %262 = vst [vmem:[#allocation2 + $0xf0] sm:$0xff] 0.0
        %263 = vst [vmem:[#allocation2 + $0xf8] sm:$0xff] 0.0
      $region36: #{bayesian_atari_qr_forward.6} parent=31 // pred_fallthru
        _
      %v264 = vld [vmem:[#allocation2] sm:$0xff]
      %v265 = vld [vmem:[#allocation2 + $0x8] sm:$0xff]
      %v266 = vld [vmem:[#allocation2 + $0x10] sm:$0xff]
      %v267 = vld [vmem:[#allocation2 + $0x18] sm:$0xff]
      %v268 = vld [vmem:[#allocation2 + $0x20] sm:$0xff]
      %v269 = vld [vmem:[#allocation2 + $0x28] sm:$0xff]
      %v270 = vld [vmem:[#allocation2 + $0x30] sm:$0xff]
      %v271 = vld [vmem:[#allocation2 + $0x38] sm:$0xff]
      %v272 = vld [vmem:[#allocation2 + $0x40] sm:$0xff]
      %v273 = vld [vmem:[#allocation2 + $0x48] sm:$0xff]
      %v274 = vld [vmem:[#allocation2 + $0x50] sm:$0xff]
      %v275 = vld [vmem:[#allocation2 + $0x58] sm:$0xff]
      %v276 = vld [vmem:[#allocation2 + $0x60] sm:$0xff]
      %v277 = vld [vmem:[#allocation2 + $0x68] sm:$0xff]
      %v278 = vld [vmem:[#allocation2 + $0x70] sm:$0xff]
      %v279 = vld [vmem:[#allocation2 + $0x78] sm:$0xff]
      %v280 = vld [vmem:[#allocation2 + $0x80] sm:$0xff]
      %v281 = vld [vmem:[#allocation2 + $0x88] sm:$0xff]
      %v282 = vld [vmem:[#allocation2 + $0x90] sm:$0xff]
      %v283 = vld [vmem:[#allocation2 + $0x98] sm:$0xff]
      %v284 = vld [vmem:[#allocation2 + $0xa0] sm:$0xff]
      %v285 = vld [vmem:[#allocation2 + $0xa8] sm:$0xff]
      %v286 = vld [vmem:[#allocation2 + $0xb0] sm:$0xff]
      %v287 = vld [vmem:[#allocation2 + $0xb8] sm:$0xff]
      %v288 = vld [vmem:[#allocation2 + $0xc0] sm:$0xff]
      %v289 = vld [vmem:[#allocation2 + $0xc8] sm:$0xff]
      %v290 = vld [vmem:[#allocation2 + $0xd0] sm:$0xff]
      %v291 = vld [vmem:[#allocation2 + $0xd8] sm:$0xff]
      %v292 = vld [vmem:[#allocation2 + $0xe0] sm:$0xff]
      %v293 = vld [vmem:[#allocation2 + $0xe8] sm:$0xff]
      %v294 = vld [vmem:[#allocation2 + $0xf0] sm:$0xff]
      %v295 = vld [vmem:[#allocation2 + $0xf8] sm:$0xff]
      %v296 = vld [vmem:[%s212] sm:$0xff]
      %v297 = vld [vmem:[%s212 + $0x8] sm:$0xff]
      %v298 = vld [vmem:[%s212 + $0x10] sm:$0xff]
      %v299 = vld [vmem:[%s212 + $0x18] sm:$0xff]
      %v300 = vld [vmem:[%s212 + $0x20] sm:$0xff]
      %v301 = vld [vmem:[%s212 + $0x28] sm:$0xff]
      %v302 = vld [vmem:[%s212 + $0x30] sm:$0xff]
      %v303 = vld [vmem:[%s212 + $0x38] sm:$0xff]
      %v304 = vld [vmem:[%s212 + $0x40] sm:$0xff]
      %v305 = vld [vmem:[%s212 + $0x48] sm:$0xff]
      %v306 = vld [vmem:[%s212 + $0x50] sm:$0xff]
      %v307 = vld [vmem:[%s212 + $0x58] sm:$0xff]
      %v308 = vld [vmem:[%s212 + $0x60] sm:$0xff]
      %v309 = vld [vmem:[%s212 + $0x68] sm:$0xff]
      %v310 = vld [vmem:[%s212 + $0x70] sm:$0xff]
      %v311 = vld [vmem:[%s212 + $0x78] sm:$0xff]
      %v312 = vld [vmem:[%s212 + $0x80] sm:$0xff]
      %v313 = vld [vmem:[%s212 + $0x88] sm:$0xff]
      %v314 = vld [vmem:[%s212 + $0x90] sm:$0xff]
      %v315 = vld [vmem:[%s212 + $0x98] sm:$0xff]
      %v316 = vld [vmem:[%s212 + $0xa0] sm:$0xff]
      %v317 = vld [vmem:[%s212 + $0xa8] sm:$0xff]
      %v318 = vld [vmem:[%s212 + $0xb0] sm:$0xff]
      %v319 = vld [vmem:[%s212 + $0xb8] sm:$0xff]
      %v320 = vld [vmem:[%s212 + $0xc0] sm:$0xff]
      %v321 = vld [vmem:[%s212 + $0xc8] sm:$0xff]
      %v322 = vld [vmem:[%s212 + $0xd0] sm:$0xff]
      %v323 = vld [vmem:[%s212 + $0xd8] sm:$0xff]
      %v324 = vld [vmem:[%s212 + $0xe0] sm:$0xff]
      %v325 = vld [vmem:[%s212 + $0xe8] sm:$0xff]
      %v326 = vld [vmem:[%s212 + $0xf0] sm:$0xff]
      %v327 = vld [vmem:[%s212 + $0xf8] sm:$0xff]
      %v328 = vld [vmem:[%s219] sm:$0xf]
      %v329 = vld [vmem:[%s219 + $0x4] sm:$0xf]
      %v330 = vld [vmem:[%s219 + $0x8] sm:$0xf]
      %v331 = vld [vmem:[%s219 + $0xc] sm:$0xf]
      %v332 = vld [vmem:[%s219 + $0x10] sm:$0xf]
      %v333 = vld [vmem:[%s219 + $0x14] sm:$0xf]
      %v334 = vld [vmem:[%s219 + $0x18] sm:$0xf]
      %v335 = vld [vmem:[%s219 + $0x1c] sm:$0xf]
      %v336 = vld [vmem:[%s219 + $0x20] sm:$0xf]
      %v337 = vld [vmem:[%s219 + $0x24] sm:$0xf]
      %v338 = vld [vmem:[%s219 + $0x28] sm:$0xf]
      %v339 = vld [vmem:[%s219 + $0x2c] sm:$0xf]
      %v340 = vld [vmem:[%s219 + $0x30] sm:$0xf]
      %v341 = vld [vmem:[%s219 + $0x34] sm:$0xf]
      %v342 = vld [vmem:[%s219 + $0x38] sm:$0xf]
      %v343 = vld [vmem:[%s219 + $0x3c] sm:$0xf]
      %v344 = vld [vmem:[%s219 + $0x40] sm:$0xf]
      %v345 = vld [vmem:[%s219 + $0x44] sm:$0xf]
      %v346 = vld [vmem:[%s219 + $0x48] sm:$0xf]
      %v347 = vld [vmem:[%s219 + $0x4c] sm:$0xf]
      %v348 = vld [vmem:[%s219 + $0x50] sm:$0xf]
      %v349 = vld [vmem:[%s219 + $0x54] sm:$0xf]
      %v350 = vld [vmem:[%s219 + $0x58] sm:$0xf]
      %v351 = vld [vmem:[%s219 + $0x5c] sm:$0xf]
      %v352 = vld [vmem:[%s219 + $0x60] sm:$0xf]
      %v353 = vld [vmem:[%s219 + $0x64] sm:$0xf]
      %v354 = vld [vmem:[%s219 + $0x68] sm:$0xf]
      %v355 = vld [vmem:[%s219 + $0x6c] sm:$0xf]
      %v356 = vld [vmem:[%s219 + $0x70] sm:$0xf]
      %v357 = vld [vmem:[%s219 + $0x74] sm:$0xf]
      %v358 = vld [vmem:[%s219 + $0x78] sm:$0xf]
      %v359 = vld [vmem:[%s219 + $0x7c] sm:$0xf]
      %v392 = vunpack.c.l.b16 %v296
      %v393 = vunpack.c.h.b16 %v296
      %v394 = vunpack.c.l.b16 %v297
      %v395 = vunpack.c.h.b16 %v297
      %v396 = vunpack.c.l.b16 %v298
      %v397 = vunpack.c.h.b16 %v298
      %v398 = vunpack.c.l.b16 %v299
      %v399 = vunpack.c.h.b16 %v299
      %v400 = vunpack.c.l.b16 %v300
      %v401 = vunpack.c.h.b16 %v300
      %v402 = vunpack.c.l.b16 %v301
      %v403 = vunpack.c.h.b16 %v301
      %v404 = vunpack.c.l.b16 %v302
      %v405 = vunpack.c.h.b16 %v302
      %v406 = vunpack.c.l.b16 %v303
      %v407 = vunpack.c.h.b16 %v303
      %v408 = vunpack.c.l.b16 %v304
      %v409 = vunpack.c.h.b16 %v304
      %v410 = vunpack.c.l.b16 %v305
      %v411 = vunpack.c.h.b16 %v305
      %v412 = vunpack.c.l.b16 %v306
      %v413 = vunpack.c.h.b16 %v306
      %v414 = vunpack.c.l.b16 %v307
      %v415 = vunpack.c.h.b16 %v307
      %v416 = vunpack.c.l.b16 %v308
      %v417 = vunpack.c.h.b16 %v308
      %v418 = vunpack.c.l.b16 %v309
      %v419 = vunpack.c.h.b16 %v309
      %v420 = vunpack.c.l.b16 %v310
      %v421 = vunpack.c.h.b16 %v310
      %v422 = vunpack.c.l.b16 %v311
      %v423 = vunpack.c.h.b16 %v311
      %v424 = vunpack.c.l.b16 %v312
      %v425 = vunpack.c.h.b16 %v312
      %v426 = vunpack.c.l.b16 %v313
      %v427 = vunpack.c.h.b16 %v313
      %v428 = vunpack.c.l.b16 %v314
      %v429 = vunpack.c.h.b16 %v314
      %v430 = vunpack.c.l.b16 %v315
      %v431 = vunpack.c.h.b16 %v315
      %v432 = vunpack.c.l.b16 %v316
      %v433 = vunpack.c.h.b16 %v316
      %v434 = vunpack.c.l.b16 %v317
      %v435 = vunpack.c.h.b16 %v317
      %v436 = vunpack.c.l.b16 %v318
      %v437 = vunpack.c.h.b16 %v318
      %v438 = vunpack.c.l.b16 %v319
      %v439 = vunpack.c.h.b16 %v319
      %v440 = vunpack.c.l.b16 %v320
      %v441 = vunpack.c.h.b16 %v320
      %v442 = vunpack.c.l.b16 %v321
      %v443 = vunpack.c.h.b16 %v321
      %v444 = vunpack.c.l.b16 %v322
      %v445 = vunpack.c.h.b16 %v322
      %v446 = vunpack.c.l.b16 %v323
      %v447 = vunpack.c.h.b16 %v323
      %v448 = vunpack.c.l.b16 %v324
      %v449 = vunpack.c.h.b16 %v324
      %v450 = vunpack.c.l.b16 %v325
      %v451 = vunpack.c.h.b16 %v325
      %v452 = vunpack.c.l.b16 %v326
      %v453 = vunpack.c.h.b16 %v326
      %v454 = vunpack.c.l.b16 %v327
      %v455 = vunpack.c.h.b16 %v327
      %v456 = vpack.c.b16 %v394, %v392
      %v457 = vpack.c.b16 %v395, %v393
      %v458 = vpack.c.b16 %v398, %v396
      %v459 = vpack.c.b16 %v399, %v397
      %v460 = vpack.c.b16 %v402, %v400
      %v461 = vpack.c.b16 %v403, %v401
      %v462 = vpack.c.b16 %v406, %v404
      %v463 = vpack.c.b16 %v407, %v405
      %v464 = vpack.c.b16 %v410, %v408
      %v465 = vpack.c.b16 %v411, %v409
      %v466 = vpack.c.b16 %v414, %v412
      %v467 = vpack.c.b16 %v415, %v413
      %v468 = vpack.c.b16 %v418, %v416
      %v469 = vpack.c.b16 %v419, %v417
      %v470 = vpack.c.b16 %v422, %v420
      %v471 = vpack.c.b16 %v423, %v421
      %v472 = vpack.c.b16 %v426, %v424
      %v473 = vpack.c.b16 %v427, %v425
      %v474 = vpack.c.b16 %v430, %v428
      %v475 = vpack.c.b16 %v431, %v429
      %v476 = vpack.c.b16 %v434, %v432
      %v477 = vpack.c.b16 %v435, %v433
      %v478 = vpack.c.b16 %v438, %v436
      %v479 = vpack.c.b16 %v439, %v437
      %v480 = vpack.c.b16 %v442, %v440
      %v481 = vpack.c.b16 %v443, %v441
      %v482 = vpack.c.b16 %v446, %v444
      %v483 = vpack.c.b16 %v447, %v445
      %v484 = vpack.c.b16 %v450, %v448
      %v485 = vpack.c.b16 %v451, %v449
      %v486 = vpack.c.b16 %v454, %v452
      %v487 = vpack.c.b16 %v455, %v453
      %v552 = vunpack.c.l.b16 %v328
      %v553 = vunpack.c.l.b16 %v329
      %v554 = vunpack.c.l.b16 %v330
      %v555 = vunpack.c.l.b16 %v331
      %v556 = vunpack.c.l.b16 %v332
      %v557 = vunpack.c.l.b16 %v333
      %v558 = vunpack.c.l.b16 %v334
      %v559 = vunpack.c.l.b16 %v335
      %v560 = vunpack.c.l.b16 %v336
      %v561 = vunpack.c.l.b16 %v337
      %v562 = vunpack.c.l.b16 %v338
      %v563 = vunpack.c.l.b16 %v339
      %v564 = vunpack.c.l.b16 %v340
      %v565 = vunpack.c.l.b16 %v341
      %v566 = vunpack.c.l.b16 %v342
      %v567 = vunpack.c.l.b16 %v343
      %v568 = vunpack.c.l.b16 %v344
      %v569 = vunpack.c.l.b16 %v345
      %v570 = vunpack.c.l.b16 %v346
      %v571 = vunpack.c.l.b16 %v347
      %v572 = vunpack.c.l.b16 %v348
      %v573 = vunpack.c.l.b16 %v349
      %v574 = vunpack.c.l.b16 %v350
      %v575 = vunpack.c.l.b16 %v351
      %v576 = vunpack.c.l.b16 %v352
      %v577 = vunpack.c.l.b16 %v353
      %v578 = vunpack.c.l.b16 %v354
      %v579 = vunpack.c.l.b16 %v355
      %v580 = vunpack.c.l.b16 %v356
      %v581 = vunpack.c.l.b16 %v357
      %v582 = vunpack.c.l.b16 %v358
      %v583 = vunpack.c.l.b16 %v359
      %v584 = vpack.c.b16 %v553, %v552
      %v585 = vpack.c.b16 %v555, %v554
      %v586 = vpack.c.b16 %v557, %v556
      %v587 = vpack.c.b16 %v559, %v558
      %v588 = vpack.c.b16 %v561, %v560
      %v589 = vpack.c.b16 %v563, %v562
      %v590 = vpack.c.b16 %v565, %v564
      %v591 = vpack.c.b16 %v567, %v566
      %v592 = vpack.c.b16 %v569, %v568
      %v593 = vpack.c.b16 %v571, %v570
      %v594 = vpack.c.b16 %v573, %v572
      %v595 = vpack.c.b16 %v575, %v574
      %v596 = vpack.c.b16 %v577, %v576
      %v597 = vpack.c.b16 %v579, %v578
      %v598 = vpack.c.b16 %v581, %v580
      %v599 = vpack.c.b16 %v583, %v582
      %616 = vmatprep.subr.bf16.mxu0 0
      %617 = vmatpush1.bf16.msra.mxu0 %v584
      %618 = vmatprep.subr.bf16.mxu0 0
      %619 = vmatpush1.bf16.msra.mxu0 %v585
      %620 = vmatprep.subr.bf16.mxu0 0
      %621 = vmatpush1.bf16.msra.mxu0 %v586
      %622 = vmatprep.subr.bf16.mxu0 0
      %623 = vmatpush1.bf16.msra.mxu0 %v587
      %624 = vmatprep.subr.bf16.mxu0 0
      %625 = vmatpush1.bf16.msra.mxu0 %v588
      %626 = vmatprep.subr.bf16.mxu0 0
      %627 = vmatpush1.bf16.msra.mxu0 %v589
      %628 = vmatprep.subr.bf16.mxu0 0
      %629 = vmatpush1.bf16.msra.mxu0 %v590
      %630 = vmatprep.subr.bf16.mxu0 0
      %631 = vmatpush1.bf16.msra.mxu0 %v591
      %632 = vmatprep.subr.bf16.mxu0 0
      %633 = vmatpush1.bf16.msra.mxu0 %v592
      %634 = vmatprep.subr.bf16.mxu0 0
      %635 = vmatpush1.bf16.msra.mxu0 %v593
      %636 = vmatprep.subr.bf16.mxu0 0
      %637 = vmatpush1.bf16.msra.mxu0 %v594
      %638 = vmatprep.subr.bf16.mxu0 0
      %639 = vmatpush1.bf16.msra.mxu0 %v595
      %640 = vmatprep.subr.bf16.mxu0 0
      %641 = vmatpush1.bf16.msra.mxu0 %v596
      %642 = vmatprep.subr.bf16.mxu0 0
      %643 = vmatpush1.bf16.msra.mxu0 %v597
      %644 = vmatprep.subr.bf16.mxu0 0
      %645 = vmatpush1.bf16.msra.mxu0 %v598
      %646 = vmatprep.subr.bf16.mxu0 0
      %647 = vmatpush1.bf16.msra.mxu0 %v599
      %648 = vmatprep.mubr.bf16.mxu0 %v457
      %649 = vmatmul.mubr.bf16.gmra.mrb[0].mxu0 %v456
      %v650 = vpop.f32.mrb[0].mxu0
      %v651 = vadd.f32 0.0, %v650
      %v652 = vpop.f32.mrb[0].mxu0
      %v653 = vpop.f32.mrb[0].mxu0
      %v654 = vadd.f32 0.0, %v653
      %v655 = vpop.f32.mrb[0].mxu0
      %656 = vmatprep.mubr.bf16.mxu0 %v459
      %657 = vmatmul.mubr.bf16.gmra.mrb[0].mxu0 %v458
      %v658 = vpop.f32.mrb[0].mxu0
      %v659 = vadd.f32 0.0, %v658
      %v660 = vpop.f32.mrb[0].mxu0
      %v661 = vpop.f32.mrb[0].mxu0
      %v662 = vadd.f32 0.0, %v661
      %v663 = vpop.f32.mrb[0].mxu0
      %664 = vmatprep.mubr.bf16.mxu0 %v461
      %665 = vmatmul.mubr.bf16.gmra.mrb[0].mxu0 %v460
      %v666 = vpop.f32.mrb[0].mxu0
      %v667 = vadd.f32 0.0, %v666
      %v668 = vpop.f32.mrb[0].mxu0
      %v669 = vpop.f32.mrb[0].mxu0
      %v670 = vadd.f32 0.0, %v669
      %v671 = vpop.f32.mrb[0].mxu0
      %672 = vmatprep.mubr.bf16.mxu0 %v463
      %673 = vmatmul.mubr.bf16.gmra.mrb[0].mxu0 %v462
      %v674 = vpop.f32.mrb[0].mxu0
      %v675 = vadd.f32 0.0, %v674
      %v676 = vpop.f32.mrb[0].mxu0
      %v677 = vpop.f32.mrb[0].mxu0
      %v678 = vadd.f32 0.0, %v677
      %v679 = vpop.f32.mrb[0].mxu0
      %680 = vmatprep.mubr.bf16.mxu0 %v465
      %681 = vmatmul.mubr.bf16.gmra.mrb[0].mxu0 %v464
      %v682 = vpop.f32.mrb[0].mxu0
      %v683 = vadd.f32 0.0, %v682
      %v684 = vpop.f32.mrb[0].mxu0
      %v685 = vpop.f32.mrb[0].mxu0
      %v686 = vadd.f32 0.0, %v685
      %v687 = vpop.f32.mrb[0].mxu0
      %688 = vmatprep.mubr.bf16.mxu0 %v467
      %689 = vmatmul.mubr.bf16.gmra.mrb[0].mxu0 %v466
      %v690 = vpop.f32.mrb[0].mxu0
      %v691 = vadd.f32 0.0, %v690
      %v692 = vpop.f32.mrb[0].mxu0
      %v693 = vpop.f32.mrb[0].mxu0
      %v694 = vadd.f32 0.0, %v693
      %v695 = vpop.f32.mrb[0].mxu0
      %696 = vmatprep.mubr.bf16.mxu0 %v469
      %697 = vmatmul.mubr.bf16.gmra.mrb[0].mxu0 %v468
      %v698 = vpop.f32.mrb[0].mxu0
      %v699 = vadd.f32 0.0, %v698
      %v700 = vpop.f32.mrb[0].mxu0
      %v701 = vpop.f32.mrb[0].mxu0
      %v702 = vadd.f32 0.0, %v701
      %v703 = vpop.f32.mrb[0].mxu0
      %704 = vmatprep.mubr.bf16.mxu0 %v471
      %705 = vmatmul.mubr.bf16.gmra.mrb[0].mxu0 %v470
      %v706 = vpop.f32.mrb[0].mxu0
      %v707 = vadd.f32 0.0, %v706
      %v708 = vpop.f32.mrb[0].mxu0
      %v709 = vpop.f32.mrb[0].mxu0
      %v710 = vadd.f32 0.0, %v709
      %v711 = vpop.f32.mrb[0].mxu0
      %712 = vmatprep.mubr.bf16.mxu0 %v473
      %713 = vmatmul.mubr.bf16.gmra.mrb[0].mxu0 %v472
      %v714 = vpop.f32.mrb[0].mxu0
      %v715 = vadd.f32 0.0, %v714
      %v716 = vpop.f32.mrb[0].mxu0
      %v717 = vpop.f32.mrb[0].mxu0
      %v718 = vadd.f32 0.0, %v717
      %v719 = vpop.f32.mrb[0].mxu0
      %720 = vmatprep.mubr.bf16.mxu0 %v475
      %721 = vmatmul.mubr.bf16.gmra.mrb[0].mxu0 %v474
      %v722 = vpop.f32.mrb[0].mxu0
      %v723 = vadd.f32 0.0, %v722
      %v724 = vpop.f32.mrb[0].mxu0
      %v725 = vpop.f32.mrb[0].mxu0
      %v726 = vadd.f32 0.0, %v725
      %v727 = vpop.f32.mrb[0].mxu0
      %728 = vmatprep.mubr.bf16.mxu0 %v477
      %729 = vmatmul.mubr.bf16.gmra.mrb[0].mxu0 %v476
      %v730 = vpop.f32.mrb[0].mxu0
      %v731 = vadd.f32 0.0, %v730
      %v732 = vpop.f32.mrb[0].mxu0
      %v733 = vpop.f32.mrb[0].mxu0
      %v734 = vadd.f32 0.0, %v733
      %v735 = vpop.f32.mrb[0].mxu0
      %736 = vmatprep.mubr.bf16.mxu0 %v479
      %737 = vmatmul.mubr.bf16.gmra.mrb[0].mxu0 %v478
      %v738 = vpop.f32.mrb[0].mxu0
      %v739 = vadd.f32 0.0, %v738
      %v740 = vpop.f32.mrb[0].mxu0
      %v741 = vpop.f32.mrb[0].mxu0
      %v742 = vadd.f32 0.0, %v741
      %v743 = vpop.f32.mrb[0].mxu0
      %744 = vmatprep.mubr.bf16.mxu0 %v481
      %745 = vmatmul.mubr.bf16.gmra.mrb[0].mxu0 %v480
      %v746 = vpop.f32.mrb[0].mxu0
      %v747 = vadd.f32 0.0, %v746
      %v748 = vpop.f32.mrb[0].mxu0
      %v749 = vpop.f32.mrb[0].mxu0
      %v750 = vadd.f32 0.0, %v749
      %v751 = vpop.f32.mrb[0].mxu0
      %752 = vmatprep.mubr.bf16.mxu0 %v483
      %753 = vmatmul.mubr.bf16.gmra.mrb[0].mxu0 %v482
      %v754 = vpop.f32.mrb[0].mxu0
      %v755 = vadd.f32 0.0, %v754
      %v756 = vpop.f32.mrb[0].mxu0
      %v757 = vpop.f32.mrb[0].mxu0
      %v758 = vadd.f32 0.0, %v757
      %v759 = vpop.f32.mrb[0].mxu0
      %760 = vmatprep.mubr.bf16.mxu0 %v485
      %761 = vmatmul.mubr.bf16.gmra.mrb[0].mxu0 %v484
      %v762 = vpop.f32.mrb[0].mxu0
      %v763 = vadd.f32 0.0, %v762
      %v764 = vpop.f32.mrb[0].mxu0
      %v765 = vpop.f32.mrb[0].mxu0
      %v766 = vadd.f32 0.0, %v765
      %v767 = vpop.f32.mrb[0].mxu0
      %768 = vmatprep.mubr.bf16.mxu0 %v487
      %769 = vmatmul.mubr.bf16.gmra.mrb[0].mxu0 %v486
      %v770 = vpop.f32.mrb[0].mxu0
      %v771 = vadd.f32 0.0, %v770
      %v772 = vpop.f32.mrb[0].mxu0
      %v773 = vpop.f32.mrb[0].mxu0
      %v774 = vadd.f32 0.0, %v773
      %v775 = vpop.f32.mrb[0].mxu0
      %776 = vdwg.mxu0
      %v777 = vadd.f32 %v264, %v651
      %v778 = vadd.f32 %v265, %v654
      %v779 = vadd.f32 %v266, %v659
      %v780 = vadd.f32 %v267, %v662
      %v781 = vadd.f32 %v268, %v667
      %v782 = vadd.f32 %v269, %v670
      %v783 = vadd.f32 %v270, %v675
      %v784 = vadd.f32 %v271, %v678
      %v785 = vadd.f32 %v272, %v683
      %v786 = vadd.f32 %v273, %v686
      %v787 = vadd.f32 %v274, %v691
      %v788 = vadd.f32 %v275, %v694
      %v789 = vadd.f32 %v276, %v699
      %v790 = vadd.f32 %v277, %v702
      %v791 = vadd.f32 %v278, %v707
      %v792 = vadd.f32 %v279, %v710
      %v793 = vadd.f32 %v280, %v715
      %v794 = vadd.f32 %v281, %v718
      %v795 = vadd.f32 %v282, %v723
      %v796 = vadd.f32 %v283, %v726
      %v797 = vadd.f32 %v284, %v731
      %v798 = vadd.f32 %v285, %v734
      %v799 = vadd.f32 %v286, %v739
      %v800 = vadd.f32 %v287, %v742
      %v801 = vadd.f32 %v288, %v747
      %v802 = vadd.f32 %v289, %v750
      %v803 = vadd.f32 %v290, %v755
      %v804 = vadd.f32 %v291, %v758
      %v805 = vadd.f32 %v292, %v763
      %v806 = vadd.f32 %v293, %v766
      %v807 = vadd.f32 %v294, %v771
      %v808 = vadd.f32 %v295, %v774
      %809 = vst [vmem:[#allocation2] sm:$0xff] %v777
      %810 = vst [vmem:[#allocation2 + $0x8] sm:$0xff] %v778
      %811 = vst [vmem:[#allocation2 + $0x10] sm:$0xff] %v779
      %812 = vst [vmem:[#allocation2 + $0x18] sm:$0xff] %v780
      %813 = vst [vmem:[#allocation2 + $0x20] sm:$0xff] %v781
      %814 = vst [vmem:[#allocation2 + $0x28] sm:$0xff] %v782
      %815 = vst [vmem:[#allocation2 + $0x30] sm:$0xff] %v783
      %816 = vst [vmem:[#allocation2 + $0x38] sm:$0xff] %v784
      %817 = vst [vmem:[#allocation2 + $0x40] sm:$0xff] %v785
      %818 = vst [vmem:[#allocation2 + $0x48] sm:$0xff] %v786
      %819 = vst [vmem:[#allocation2 + $0x50] sm:$0xff] %v787
      %820 = vst [vmem:[#allocation2 + $0x58] sm:$0xff] %v788
      %821 = vst [vmem:[#allocation2 + $0x60] sm:$0xff] %v789
      %822 = vst [vmem:[#allocation2 + $0x68] sm:$0xff] %v790
      %823 = vst [vmem:[#allocation2 + $0x70] sm:$0xff] %v791
      %824 = vst [vmem:[#allocation2 + $0x78] sm:$0xff] %v792
      %825 = vst [vmem:[#allocation2 + $0x80] sm:$0xff] %v793
      %826 = vst [vmem:[#allocation2 + $0x88] sm:$0xff] %v794
      %827 = vst [vmem:[#allocation2 + $0x90] sm:$0xff] %v795
      %828 = vst [vmem:[#allocation2 + $0x98] sm:$0xff] %v796
      %829 = vst [vmem:[#allocation2 + $0xa0] sm:$0xff] %v797
      %830 = vst [vmem:[#allocation2 + $0xa8] sm:$0xff] %v798
      %831 = vst [vmem:[#allocation2 + $0xb0] sm:$0xff] %v799
      %832 = vst [vmem:[#allocation2 + $0xb8] sm:$0xff] %v800
      %833 = vst [vmem:[#allocation2 + $0xc0] sm:$0xff] %v801
      %834 = vst [vmem:[#allocation2 + $0xc8] sm:$0xff] %v802
      %835 = vst [vmem:[#allocation2 + $0xd0] sm:$0xff] %v803
      %836 = vst [vmem:[#allocation2 + $0xd8] sm:$0xff] %v804
      %837 = vst [vmem:[#allocation2 + $0xe0] sm:$0xff] %v805
      %838 = vst [vmem:[#allocation2 + $0xe8] sm:$0xff] %v806
      %839 = vst [vmem:[#allocation2 + $0xf0] sm:$0xff] %v807
      %840 = vst [vmem:[#allocation2 + $0xf8] sm:$0xff] %v808
      // Predicated region
      $region37: #{bayesian_atari_qr_forward.6} parent=31 // pred_check
        %p841 = pneg %p228
      $region38: #{bayesian_atari_qr_forward.6} parent=31 // pred_check_branch
        %843 = sbr.rel (%p841) target = $region40
      $region39: #{bayesian_atari_qr_forward.6} parent=31 // pred_region
        %v844 = vld [vmem:[#allocation2] sm:$0xff]
        %v845 = vld [vmem:[#allocation2 + $0x8] sm:$0xff]
        %v846 = vld [vmem:[#allocation2 + $0x10] sm:$0xff]
        %v847 = vld [vmem:[#allocation2 + $0x18] sm:$0xff]
        %v848 = vld [vmem:[#allocation2 + $0x20] sm:$0xff]
        %v849 = vld [vmem:[#allocation2 + $0x28] sm:$0xff]
        %v850 = vld [vmem:[#allocation2 + $0x30] sm:$0xff]
        %v851 = vld [vmem:[#allocation2 + $0x38] sm:$0xff]
        %v852 = vld [vmem:[#allocation2 + $0x40] sm:$0xff]
        %v853 = vld [vmem:[#allocation2 + $0x48] sm:$0xff]
        %v854 = vld [vmem:[#allocation2 + $0x50] sm:$0xff]
        %v855 = vld [vmem:[#allocation2 + $0x58] sm:$0xff]
        %v856 = vld [vmem:[#allocation2 + $0x60] sm:$0xff]
        %v857 = vld [vmem:[#allocation2 + $0x68] sm:$0xff]
        %v858 = vld [vmem:[#allocation2 + $0x70] sm:$0xff]
        %v859 = vld [vmem:[#allocation2 + $0x78] sm:$0xff]
        %v860 = vld [vmem:[#allocation2 + $0x80] sm:$0xff]
        %v861 = vld [vmem:[#allocation2 + $0x88] sm:$0xff]
        %v862 = vld [vmem:[#allocation2 + $0x90] sm:$0xff]
        %v863 = vld [vmem:[#allocation2 + $0x98] sm:$0xff]
        %v864 = vld [vmem:[#allocation2 + $0xa0] sm:$0xff]
        %v865 = vld [vmem:[#allocation2 + $0xa8] sm:$0xff]
        %v866 = vld [vmem:[#allocation2 + $0xb0] sm:$0xff]
        %v867 = vld [vmem:[#allocation2 + $0xb8] sm:$0xff]
        %v868 = vld [vmem:[#allocation2 + $0xc0] sm:$0xff]
        %v869 = vld [vmem:[#allocation2 + $0xc8] sm:$0xff]
        %v870 = vld [vmem:[#allocation2 + $0xd0] sm:$0xff]
        %v871 = vld [vmem:[#allocation2 + $0xd8] sm:$0xff]
        %v872 = vld [vmem:[#allocation2 + $0xe0] sm:$0xff]
        %v873 = vld [vmem:[#allocation2 + $0xe8] sm:$0xff]
        %v874 = vld [vmem:[#allocation2 + $0xf0] sm:$0xff]
        %v875 = vld [vmem:[#allocation2 + $0xf8] sm:$0xff]
        %v876 = vld [vmem:[%s2] sm:$0x1]
        %v878 = vlaneseq
        %v879 = vshrl.u32 %v878, 7
        %v880 = vsub.s32 0, %v879
        %v881 = vrot.slane %v876, %v880
        %v883 = vadd.f32 %v844, %v881
        %v884 = vadd.f32 %v845, %v881
        %v885 = vadd.f32 %v846, %v881
        %v886 = vadd.f32 %v847, %v881
        %v887 = vadd.f32 %v848, %v881
        %v888 = vadd.f32 %v849, %v881
        %v889 = vadd.f32 %v850, %v881
        %v890 = vadd.f32 %v851, %v881
        %v891 = vadd.f32 %v852, %v881
        %v892 = vadd.f32 %v853, %v881
        %v893 = vadd.f32 %v854, %v881
        %v894 = vadd.f32 %v855, %v881
        %v895 = vadd.f32 %v856, %v881
        %v896 = vadd.f32 %v857, %v881
        %v897 = vadd.f32 %v858, %v881
        %v898 = vadd.f32 %v859, %v881
        %v899 = vadd.f32 %v860, %v881
        %v900 = vadd.f32 %v861, %v881
        %v901 = vadd.f32 %v862, %v881
        %v902 = vadd.f32 %v863, %v881
        %v903 = vadd.f32 %v864, %v881
        %v904 = vadd.f32 %v865, %v881
        %v905 = vadd.f32 %v866, %v881
        %v906 = vadd.f32 %v867, %v881
        %v907 = vadd.f32 %v868, %v881
        %v908 = vadd.f32 %v869, %v881
        %v909 = vadd.f32 %v870, %v881
        %v910 = vadd.f32 %v871, %v881
        %v911 = vadd.f32 %v872, %v881
        %v912 = vadd.f32 %v873, %v881
        %v913 = vadd.f32 %v874, %v881
        %v914 = vadd.f32 %v875, %v881
        %v915 = vmax.f32 %v883, 0.0
        %v916 = vmax.f32 %v884, 0.0
        %v917 = vmax.f32 %v885, 0.0
        %v918 = vmax.f32 %v886, 0.0
        %v919 = vmax.f32 %v887, 0.0
        %v920 = vmax.f32 %v888, 0.0
        %v921 = vmax.f32 %v889, 0.0
        %v922 = vmax.f32 %v890, 0.0
        %v923 = vmax.f32 %v891, 0.0
        %v924 = vmax.f32 %v892, 0.0
        %v925 = vmax.f32 %v893, 0.0
        %v926 = vmax.f32 %v894, 0.0
        %v927 = vmax.f32 %v895, 0.0
        %v928 = vmax.f32 %v896, 0.0
        %v929 = vmax.f32 %v897, 0.0
        %v930 = vmax.f32 %v898, 0.0
        %v931 = vmax.f32 %v899, 0.0
        %v932 = vmax.f32 %v900, 0.0
        %v933 = vmax.f32 %v901, 0.0
        %v934 = vmax.f32 %v902, 0.0
        %v935 = vmax.f32 %v903, 0.0
        %v936 = vmax.f32 %v904, 0.0
        %v937 = vmax.f32 %v905, 0.0
        %v938 = vmax.f32 %v906, 0.0
        %v939 = vmax.f32 %v907, 0.0
        %v940 = vmax.f32 %v908, 0.0
        %v941 = vmax.f32 %v909, 0.0
        %v942 = vmax.f32 %v910, 0.0
        %v943 = vmax.f32 %v911, 0.0
        %v944 = vmax.f32 %v912, 0.0
        %v945 = vmax.f32 %v913, 0.0
        %v946 = vmax.f32 %v914, 0.0
        %v947 = vpack.c.bf16 %v916, %v915
        %v948 = vpack.c.bf16 %v918, %v917
        %v949 = vpack.c.bf16 %v920, %v919
        %v950 = vpack.c.bf16 %v922, %v921
        %v951 = vpack.c.bf16 %v924, %v923
        %v952 = vpack.c.bf16 %v926, %v925
        %v953 = vpack.c.bf16 %v928, %v927
        %v954 = vpack.c.bf16 %v930, %v929
        %v955 = vpack.c.bf16 %v932, %v931
        %v956 = vpack.c.bf16 %v934, %v933
        %v957 = vpack.c.bf16 %v936, %v935
        %v958 = vpack.c.bf16 %v938, %v937
        %v959 = vpack.c.bf16 %v940, %v939
        %v960 = vpack.c.bf16 %v942, %v941
        %v961 = vpack.c.bf16 %v944, %v943
        %v962 = vpack.c.bf16 %v946, %v945
        %v979 = vunpack.c.l.b16 %v947
        %v980 = vunpack.c.h.b16 %v947
        %v981 = vunpack.c.l.b16 %v948
        %v982 = vunpack.c.h.b16 %v948
        %v983 = vunpack.c.l.b16 %v949
        %v984 = vunpack.c.h.b16 %v949
        %v985 = vunpack.c.l.b16 %v950
        %v986 = vunpack.c.h.b16 %v950
        %v987 = vunpack.c.l.b16 %v951
        %v988 = vunpack.c.h.b16 %v951
        %v989 = vunpack.c.l.b16 %v952
        %v990 = vunpack.c.h.b16 %v952
        %v991 = vunpack.c.l.b16 %v953
        %v992 = vunpack.c.h.b16 %v953
        %v993 = vunpack.c.l.b16 %v954
        %v994 = vunpack.c.h.b16 %v954
        %v995 = vunpack.c.l.b16 %v955
        %v996 = vunpack.c.h.b16 %v955
        %v997 = vunpack.c.l.b16 %v956
        %v998 = vunpack.c.h.b16 %v956
        %v999 = vunpack.c.l.b16 %v957
        %v1000 = vunpack.c.h.b16 %v957
        %v1001 = vunpack.c.l.b16 %v958
        %v1002 = vunpack.c.h.b16 %v958
        %v1003 = vunpack.c.l.b16 %v959
        %v1004 = vunpack.c.h.b16 %v959
        %v1005 = vunpack.c.l.b16 %v960
        %v1006 = vunpack.c.h.b16 %v960
        %v1007 = vunpack.c.l.b16 %v961
        %v1008 = vunpack.c.h.b16 %v961
        %v1009 = vunpack.c.l.b16 %v962
        %v1010 = vunpack.c.h.b16 %v962
        %v1011 = vpack.c.b16 %v979, %v979
        %v1012 = vpack.c.b16 %v980, %v980
        %v1013 = vpack.c.b16 %v981, %v981
        %v1014 = vpack.c.b16 %v982, %v982
        %v1015 = vpack.c.b16 %v983, %v983
        %v1016 = vpack.c.b16 %v984, %v984
        %v1017 = vpack.c.b16 %v985, %v985
        %v1018 = vpack.c.b16 %v986, %v986
        %v1019 = vpack.c.b16 %v987, %v987
        %v1020 = vpack.c.b16 %v988, %v988
        %v1021 = vpack.c.b16 %v989, %v989
        %v1022 = vpack.c.b16 %v990, %v990
        %v1023 = vpack.c.b16 %v991, %v991
        %v1024 = vpack.c.b16 %v992, %v992
        %v1025 = vpack.c.b16 %v993, %v993
        %v1026 = vpack.c.b16 %v994, %v994
        %v1027 = vpack.c.b16 %v995, %v995
        %v1028 = vpack.c.b16 %v996, %v996
        %v1029 = vpack.c.b16 %v997, %v997
        %v1030 = vpack.c.b16 %v998, %v998
        %v1031 = vpack.c.b16 %v999, %v999
        %v1032 = vpack.c.b16 %v1000, %v1000
        %v1033 = vpack.c.b16 %v1001, %v1001
        %v1034 = vpack.c.b16 %v1002, %v1002
        %v1035 = vpack.c.b16 %v1003, %v1003
        %v1036 = vpack.c.b16 %v1004, %v1004
        %v1037 = vpack.c.b16 %v1005, %v1005
        %v1038 = vpack.c.b16 %v1006, %v1006
        %v1039 = vpack.c.b16 %v1007, %v1007
        %v1040 = vpack.c.b16 %v1008, %v1008
        %v1041 = vpack.c.b16 %v1009, %v1009
        %v1042 = vpack.c.b16 %v1010, %v1010
        %1075 = vst [vmem:[%s225] sm:$0xf] %v1011
        %1076 = vst [vmem:[%s225 + $0x4] sm:$0xf] %v1012
        %1077 = vst [vmem:[%s225 + $0x8] sm:$0xf] %v1013
        %1078 = vst [vmem:[%s225 + $0xc] sm:$0xf] %v1014
        %1079 = vst [vmem:[%s225 + $0x10] sm:$0xf] %v1015
        %1080 = vst [vmem:[%s225 + $0x14] sm:$0xf] %v1016
        %1081 = vst [vmem:[%s225 + $0x18] sm:$0xf] %v1017
        %1082 = vst [vmem:[%s225 + $0x1c] sm:$0xf] %v1018
        %1083 = vst [vmem:[%s225 + $0x20] sm:$0xf] %v1019
        %1084 = vst [vmem:[%s225 + $0x24] sm:$0xf] %v1020
        %1085 = vst [vmem:[%s225 + $0x28] sm:$0xf] %v1021
        %1086 = vst [vmem:[%s225 + $0x2c] sm:$0xf] %v1022
        %1087 = vst [vmem:[%s225 + $0x30] sm:$0xf] %v1023
        %1088 = vst [vmem:[%s225 + $0x34] sm:$0xf] %v1024
        %1089 = vst [vmem:[%s225 + $0x38] sm:$0xf] %v1025
        %1090 = vst [vmem:[%s225 + $0x3c] sm:$0xf] %v1026
        %1091 = vst [vmem:[%s225 + $0x40] sm:$0xf] %v1027
        %1092 = vst [vmem:[%s225 + $0x44] sm:$0xf] %v1028
        %1093 = vst [vmem:[%s225 + $0x48] sm:$0xf] %v1029
        %1094 = vst [vmem:[%s225 + $0x4c] sm:$0xf] %v1030
        %1095 = vst [vmem:[%s225 + $0x50] sm:$0xf] %v1031
        %1096 = vst [vmem:[%s225 + $0x54] sm:$0xf] %v1032
        %1097 = vst [vmem:[%s225 + $0x58] sm:$0xf] %v1033
        %1098 = vst [vmem:[%s225 + $0x5c] sm:$0xf] %v1034
        %1099 = vst [vmem:[%s225 + $0x60] sm:$0xf] %v1035
        %1100 = vst [vmem:[%s225 + $0x64] sm:$0xf] %v1036
        %1101 = vst [vmem:[%s225 + $0x68] sm:$0xf] %v1037
        %1102 = vst [vmem:[%s225 + $0x6c] sm:$0xf] %v1038
        %1103 = vst [vmem:[%s225 + $0x70] sm:$0xf] %v1039
        %1104 = vst [vmem:[%s225 + $0x74] sm:$0xf] %v1040
        %1105 = vst [vmem:[%s225 + $0x78] sm:$0xf] %v1041
        %1106 = vst [vmem:[%s225 + $0x7c] sm:$0xf] %v1042
      $region40: #{bayesian_atari_qr_forward.6} parent=31 // pred_fallthru
        _
      %s1107 = smul.u32 32, %s18
      %p1108 = scmp.lt.s32.totalorder %s1107, 127
      %s1109 = scalar_select %p1108, %s1107, 127
      %s1110 = smul.addr %s1109, 4
      %s1111 = scalar_lea.vmem %s3, %s1110
      // Predicated region
      $region41: #{bayesian_atari_qr_forward.6} parent=31 // pred_check
        %p1112 = pneg %p119
      $region42: #{bayesian_atari_qr_forward.6} parent=31 // pred_check_branch
        %1114 = sbr.rel (%p1112) target = $region44
      $region43: #{bayesian_atari_qr_forward.6} parent=31 // pred_region
        %s1115 = smul.u32 32, %s18
      $region44: #{bayesian_atari_qr_forward.6} parent=31 // pred_fallthru
        _
    $region32: #{bayesian_atari_qr_forward.6} parent=5 // pred_fallthru
      _
    %p1116 = scmp.le.s32.totalorder 2, %s9
    // Predicated region
    $region45: #{bayesian_atari_qr_forward.6} parent=5 // pred_check
      %p1117 = pneg %p1116
    $region46: #{bayesian_atari_qr_forward.6} parent=5 // pred_check_branch
      %1119 = sbr.rel (%p1117) target = $region48
    $region47: #{bayesian_atari_qr_forward.6} parent=5 // pred_region
      %s1120 = ssub.s32 %s9, 2
      // Predicated region
      $region49: #{bayesian_atari_qr_forward.6} parent=47 // pred_check
        %p1121 = pneg %p125
      $region50: #{bayesian_atari_qr_forward.6} parent=47 // pred_check_branch
        %1123 = sbr.rel (%p1121) target = $region52
      $region51: #{bayesian_atari_qr_forward.6} parent=47 // pred_region
        %s1124 = smul.u32 32, %s20
        %p1125 = scmp.lt.s32.totalorder %s1124, 127
        %s1126 = scalar_select %p1125, %s1124, 127
        %s1127 = smul.addr %s1126, 4
        %s1128 = scalar_lea.vmem %s3, %s1127
      $region52: #{bayesian_atari_qr_forward.6} parent=47 // pred_fallthru
        _
    $region48: #{bayesian_atari_qr_forward.6} parent=5 // pred_fallthru
      _
  $region6: #{bayesian_atari_qr_forward.6} parent=0 // loop_footer
    %s13 = sadd.s32 1, %s9
  $region7: #{bayesian_atari_qr_forward.6} parent=0 // loop_footer_branch
    %8 = sbr.rel target = $region3
  $region8: #{bayesian_atari_qr_forward.6} parent=0 // loop_exit
    _

// kernel: bayesian_atari_qr_forward.7
$region0: #{bayesian_atari_qr_forward.7}
  #allocation0 [shape = 'u32[]', space=smem, size = 0x4, offset = 0x4, fixed_abs, tag = 'smem constant byte address 0x4 - core index']
  #allocation1 [shape = 'u32[144,128]{1,0:T(1,128)}', space=vmem, size = 0x12000, scoped, tag = 'internal scratch']
  #allocation2 [shape = 'f32[168,128]{1,0:T(8,128)}', space=vmem, size = 0x15000, scoped, tag = 'scratch operand']
  %s0 = inlined_call_operand.vmem [shape: bf16[168,512], index: 0, kind: input, shape index: {}]
  %s1 = inlined_call_operand.vmem [shape: bf16[512,128], index: 1, kind: input, shape index: {}]
  %s2 = inlined_call_operand.vmem [shape: f32[1,128], index: 2, kind: input, shape index: {}]
  %s3 = inlined_call_operand.vmem [shape: bf16[168,128], index: 3, kind: output, shape index: {}]
  %s4 = sld [smem:[#allocation0]]
  $region30: #{bayesian_atari_qr_forward.7} parent=0
    _
  %s6 = ssub.s32 1, %s4
  %s7 = scalar_select 0, %s6, %s4
  // Predicated region
  $region2: #{bayesian_atari_qr_forward.7} parent=0 // pred_check
    _
  $region3: #{bayesian_atari_qr_forward.7} parent=0 // pred_check_branch
    %9 = sbr.rel (0) target = $region5
  $region4: #{bayesian_atari_qr_forward.7} parent=0 // pred_region
    _
  $region5: #{bayesian_atari_qr_forward.7} parent=0 // pred_fallthru
    _
  // Predicated region
  $region6: #{bayesian_atari_qr_forward.7} parent=0 // pred_check
    _
  $region7: #{bayesian_atari_qr_forward.7} parent=0 // pred_check_branch
    %11 = sbr.rel (0) target = $region9
  $region8: #{bayesian_atari_qr_forward.7} parent=0 // pred_region
    _
  $region9: #{bayesian_atari_qr_forward.7} parent=0 // pred_fallthru
    _
  // Predicated region
  $region10: #{bayesian_atari_qr_forward.7} parent=0 // pred_check
    _
  $region11: #{bayesian_atari_qr_forward.7} parent=0 // pred_check_branch
    %13 = sbr.rel (0) target = $region13
  $region12: #{bayesian_atari_qr_forward.7} parent=0 // pred_region
    _
  $region13: #{bayesian_atari_qr_forward.7} parent=0 // pred_fallthru
    _
  %p15 = scmp.eq.s32.totalorder 0, 0
  // Predicated region
  $region14: #{bayesian_atari_qr_forward.7} parent=0 // pred_check
    %p16 = pneg %p15
  $region15: #{bayesian_atari_qr_forward.7} parent=0 // pred_check_branch
    %18 = sbr.rel (%p16) target = $region17
  $region16: #{bayesian_atari_qr_forward.7} parent=0 // pred_region
    %19 = vst [vmem:[#allocation2] sm:$0xff] 0.0
    %20 = vst [vmem:[#allocation2 + $0x8] sm:$0xff] 0.0
    %21 = vst [vmem:[#allocation2 + $0x10] sm:$0xff] 0.0
    %22 = vst [vmem:[#allocation2 + $0x18] sm:$0xff] 0.0
    %23 = vst [vmem:[#allocation2 + $0x20] sm:$0xff] 0.0
    %24 = vst [vmem:[#allocation2 + $0x28] sm:$0xff] 0.0
    %25 = vst [vmem:[#allocation2 + $0x30] sm:$0xff] 0.0
    %26 = vst [vmem:[#allocation2 + $0x38] sm:$0xff] 0.0
    %27 = vst [vmem:[#allocation2 + $0x40] sm:$0xff] 0.0
    %28 = vst [vmem:[#allocation2 + $0x48] sm:$0xff] 0.0
    %29 = vst [vmem:[#allocation2 + $0x50] sm:$0xff] 0.0
    %30 = vst [vmem:[#allocation2 + $0x58] sm:$0xff] 0.0
    %31 = vst [vmem:[#allocation2 + $0x60] sm:$0xff] 0.0
    %32 = vst [vmem:[#allocation2 + $0x68] sm:$0xff] 0.0
    %33 = vst [vmem:[#allocation2 + $0x70] sm:$0xff] 0.0
    %34 = vst [vmem:[#allocation2 + $0x78] sm:$0xff] 0.0
    %35 = vst [vmem:[#allocation2 + $0x80] sm:$0xff] 0.0
    %36 = vst [vmem:[#allocation2 + $0x88] sm:$0xff] 0.0
    %37 = vst [vmem:[#allocation2 + $0x90] sm:$0xff] 0.0
    %38 = vst [vmem:[#allocation2 + $0x98] sm:$0xff] 0.0
    %39 = vst [vmem:[#allocation2 + $0xa0] sm:$0xff] 0.0
  $region17: #{bayesian_atari_qr_forward.7} parent=0 // pred_fallthru
    _
  %v40 = vld [vmem:[#allocation2] sm:$0xff]
  %v41 = vld [vmem:[#allocation2 + $0x8] sm:$0xff]
  %v42 = vld [vmem:[#allocation2 + $0x10] sm:$0xff]
  %v43 = vld [vmem:[#allocation2 + $0x18] sm:$0xff]
  %v44 = vld [vmem:[#allocation2 + $0x20] sm:$0xff]
  %v45 = vld [vmem:[#allocation2 + $0x28] sm:$0xff]
  %v46 = vld [vmem:[#allocation2 + $0x30] sm:$0xff]
  %v47 = vld [vmem:[#allocation2 + $0x38] sm:$0xff]
  %v48 = vld [vmem:[#allocation2 + $0x40] sm:$0xff]
  %v49 = vld [vmem:[#allocation2 + $0x48] sm:$0xff]
  %v50 = vld [vmem:[#allocation2 + $0x50] sm:$0xff]
  %v51 = vld [vmem:[#allocation2 + $0x58] sm:$0xff]
  %v52 = vld [vmem:[#allocation2 + $0x60] sm:$0xff]
  %v53 = vld [vmem:[#allocation2 + $0x68] sm:$0xff]
  %v54 = vld [vmem:[#allocation2 + $0x70] sm:$0xff]
  %v55 = vld [vmem:[#allocation2 + $0x78] sm:$0xff]
  %v56 = vld [vmem:[#allocation2 + $0x80] sm:$0xff]
  %v57 = vld [vmem:[#allocation2 + $0x88] sm:$0xff]
  %v58 = vld [vmem:[#allocation2 + $0x90] sm:$0xff]
  %v59 = vld [vmem:[#allocation2 + $0x98] sm:$0xff]
  %v60 = vld [vmem:[#allocation2 + $0xa0] sm:$0xff]
  %v61 = vld [vmem:[%s0] sm:$0xff]
  %v62 = vld [vmem:[%s0 + $0x8] sm:$0xff]
  %v63 = vld [vmem:[%s0 + $0x10] sm:$0xff]
  %v64 = vld [vmem:[%s0 + $0x18] sm:$0xff]
  %v65 = vld [vmem:[%s0 + $0x20] sm:$0xff]
  %v66 = vld [vmem:[%s0 + $0x28] sm:$0xff]
  %v67 = vld [vmem:[%s0 + $0x30] sm:$0xff]
  %v68 = vld [vmem:[%s0 + $0x38] sm:$0xff]
  %v69 = vld [vmem:[%s0 + $0x40] sm:$0xff]
  %v70 = vld [vmem:[%s0 + $0x48] sm:$0xff]
  %v71 = vld [vmem:[%s0 + $0x50] sm:$0xff]
  %v72 = vld [vmem:[%s0 + $0x58] sm:$0xff]
  %v73 = vld [vmem:[%s0 + $0x60] sm:$0xff]
  %v74 = vld [vmem:[%s0 + $0x68] sm:$0xff]
  %v75 = vld [vmem:[%s0 + $0x70] sm:$0xff]
  %v76 = vld [vmem:[%s0 + $0x78] sm:$0xff]
  %v77 = vld [vmem:[%s0 + $0x80] sm:$0xff]
  %v78 = vld [vmem:[%s0 + $0x88] sm:$0xff]
  %v79 = vld [vmem:[%s0 + $0x90] sm:$0xff]
  %v80 = vld [vmem:[%s0 + $0x98] sm:$0xff]
  %v81 = vld [vmem:[%s0 + $0xa0] sm:$0xff]
  %v82 = vld [vmem:[%s0 + $0xa8] sm:$0xff]
  %v83 = vld [vmem:[%s0 + $0xb0] sm:$0xff]
  %v84 = vld [vmem:[%s0 + $0xb8] sm:$0xff]
  %v85 = vld [vmem:[%s0 + $0xc0] sm:$0xff]
  %v86 = vld [vmem:[%s0 + $0xc8] sm:$0xff]
  %v87 = vld [vmem:[%s0 + $0xd0] sm:$0xff]
  %v88 = vld [vmem:[%s0 + $0xd8] sm:$0xff]
  %v89 = vld [vmem:[%s0 + $0xe0] sm:$0xff]
  %v90 = vld [vmem:[%s0 + $0xe8] sm:$0xff]
  %v91 = vld [vmem:[%s0 + $0xf0] sm:$0xff]
  %v92 = vld [vmem:[%s0 + $0xf8] sm:$0xff]
  %v93 = vld [vmem:[%s0 + $0x100] sm:$0xff]
  %v94 = vld [vmem:[%s0 + $0x108] sm:$0xff]
  %v95 = vld [vmem:[%s0 + $0x110] sm:$0xff]
  %v96 = vld [vmem:[%s0 + $0x118] sm:$0xff]
  %v97 = vld [vmem:[%s0 + $0x120] sm:$0xff]
  %v98 = vld [vmem:[%s0 + $0x128] sm:$0xff]
  %v99 = vld [vmem:[%s0 + $0x130] sm:$0xff]
  %v100 = vld [vmem:[%s0 + $0x138] sm:$0xff]
  %v101 = vld [vmem:[%s0 + $0x140] sm:$0xff]
  %v102 = vld [vmem:[%s0 + $0x148] sm:$0xff]
  %v103 = vld [vmem:[%s1] sm:$0xf]
  %v104 = vld [vmem:[%s1 + $0x4] sm:$0xf]
  %v105 = vld [vmem:[%s1 + $0x8] sm:$0xf]
  %v106 = vld [vmem:[%s1 + $0xc] sm:$0xf]
  %v107 = vld [vmem:[%s1 + $0x10] sm:$0xf]
  %v108 = vld [vmem:[%s1 + $0x14] sm:$0xf]
  %v109 = vld [vmem:[%s1 + $0x18] sm:$0xf]
  %v110 = vld [vmem:[%s1 + $0x1c] sm:$0xf]
  %v111 = vld [vmem:[%s1 + $0x20] sm:$0xf]
  %v112 = vld [vmem:[%s1 + $0x24] sm:$0xf]
  %v113 = vld [vmem:[%s1 + $0x28] sm:$0xf]
  %v114 = vld [vmem:[%s1 + $0x2c] sm:$0xf]
  %v115 = vld [vmem:[%s1 + $0x30] sm:$0xf]
  %v116 = vld [vmem:[%s1 + $0x34] sm:$0xf]
  %v117 = vld [vmem:[%s1 + $0x38] sm:$0xf]
  %v118 = vld [vmem:[%s1 + $0x3c] sm:$0xf]
  %v119 = vld [vmem:[%s1 + $0x40] sm:$0xf]
  %v120 = vld [vmem:[%s1 + $0x44] sm:$0xf]
  %v121 = vld [vmem:[%s1 + $0x48] sm:$0xf]
  %v122 = vld [vmem:[%s1 + $0x4c] sm:$0xf]
  %v123 = vld [vmem:[%s1 + $0x50] sm:$0xf]
  %v124 = vld [vmem:[%s1 + $0x54] sm:$0xf]
  %v125 = vld [vmem:[%s1 + $0x58] sm:$0xf]
  %v126 = vld [vmem:[%s1 + $0x5c] sm:$0xf]
  %v127 = vld [vmem:[%s1 + $0x60] sm:$0xf]
  %v128 = vld [vmem:[%s1 + $0x64] sm:$0xf]
  %v129 = vld [vmem:[%s1 + $0x68] sm:$0xf]
  %v130 = vld [vmem:[%s1 + $0x6c] sm:$0xf]
  %v131 = vld [vmem:[%s1 + $0x70] sm:$0xf]
  %v132 = vld [vmem:[%s1 + $0x74] sm:$0xf]
  %v133 = vld [vmem:[%s1 + $0x78] sm:$0xf]
  %v134 = vld [vmem:[%s1 + $0x7c] sm:$0xf]
  %v135 = vld [vmem:[%s1 + $0x80] sm:$0xf]
  %v136 = vld [vmem:[%s1 + $0x84] sm:$0xf]
  %v137 = vld [vmem:[%s1 + $0x88] sm:$0xf]
  %v138 = vld [vmem:[%s1 + $0x8c] sm:$0xf]
  %v139 = vld [vmem:[%s1 + $0x90] sm:$0xf]
  %v140 = vld [vmem:[%s1 + $0x94] sm:$0xf]
  %v141 = vld [vmem:[%s1 + $0x98] sm:$0xf]
  %v142 = vld [vmem:[%s1 + $0x9c] sm:$0xf]
  %v143 = vld [vmem:[%s1 + $0xa0] sm:$0xf]
  %v144 = vld [vmem:[%s1 + $0xa4] sm:$0xf]
  %v145 = vld [vmem:[%s1 + $0xa8] sm:$0xf]
  %v146 = vld [vmem:[%s1 + $0xac] sm:$0xf]
  %v147 = vld [vmem:[%s1 + $0xb0] sm:$0xf]
  %v148 = vld [vmem:[%s1 + $0xb4] sm:$0xf]
  %v149 = vld [vmem:[%s1 + $0xb8] sm:$0xf]
  %v150 = vld [vmem:[%s1 + $0xbc] sm:$0xf]
  %v151 = vld [vmem:[%s1 + $0xc0] sm:$0xf]
  %v152 = vld [vmem:[%s1 + $0xc4] sm:$0xf]
  %v153 = vld [vmem:[%s1 + $0xc8] sm:$0xf]
  %v154 = vld [vmem:[%s1 + $0xcc] sm:$0xf]
  %v155 = vld [vmem:[%s1 + $0xd0] sm:$0xf]
  %v156 = vld [vmem:[%s1 + $0xd4] sm:$0xf]
  %v157 = vld [vmem:[%s1 + $0xd8] sm:$0xf]
  %v158 = vld [vmem:[%s1 + $0xdc] sm:$0xf]
  %v159 = vld [vmem:[%s1 + $0xe0] sm:$0xf]
  %v160 = vld [vmem:[%s1 + $0xe4] sm:$0xf]
  %v161 = vld [vmem:[%s1 + $0xe8] sm:$0xf]
  %v162 = vld [vmem:[%s1 + $0xec] sm:$0xf]
  %v163 = vld [vmem:[%s1 + $0xf0] sm:$0xf]
  %v164 = vld [vmem:[%s1 + $0xf4] sm:$0xf]
  %v165 = vld [vmem:[%s1 + $0xf8] sm:$0xf]
  %v166 = vld [vmem:[%s1 + $0xfc] sm:$0xf]
  %v209 = vunpack.c.l.b16 %v61
  %v210 = vunpack.c.h.b16 %v61
  %v211 = vunpack.c.l.b16 %v62
  %v212 = vunpack.c.h.b16 %v62
  %v213 = vunpack.c.l.b16 %v63
  %v214 = vunpack.c.h.b16 %v63
  %v215 = vunpack.c.l.b16 %v64
  %v216 = vunpack.c.h.b16 %v64
  %v217 = vunpack.c.l.b16 %v65
  %v218 = vunpack.c.h.b16 %v65
  %v219 = vunpack.c.l.b16 %v66
  %v220 = vunpack.c.h.b16 %v66
  %v221 = vunpack.c.l.b16 %v67
  %v222 = vunpack.c.h.b16 %v67
  %v223 = vunpack.c.l.b16 %v68
  %v224 = vunpack.c.h.b16 %v68
  %v225 = vunpack.c.l.b16 %v69
  %v226 = vunpack.c.h.b16 %v69
  %v227 = vunpack.c.l.b16 %v70
  %v228 = vunpack.c.h.b16 %v70
  %v229 = vunpack.c.l.b16 %v71
  %v230 = vunpack.c.h.b16 %v71
  %v231 = vunpack.c.l.b16 %v72
  %v232 = vunpack.c.h.b16 %v72
  %v233 = vunpack.c.l.b16 %v73
  %v234 = vunpack.c.h.b16 %v73
  %v235 = vunpack.c.l.b16 %v74
  %v236 = vunpack.c.h.b16 %v74
  %v237 = vunpack.c.l.b16 %v75
  %v238 = vunpack.c.h.b16 %v75
  %v239 = vunpack.c.l.b16 %v76
  %v240 = vunpack.c.h.b16 %v76
  %v241 = vunpack.c.l.b16 %v77
  %v242 = vunpack.c.h.b16 %v77
  %v243 = vunpack.c.l.b16 %v78
  %v244 = vunpack.c.h.b16 %v78
  %v245 = vunpack.c.l.b16 %v79
  %v246 = vunpack.c.h.b16 %v79
  %v247 = vunpack.c.l.b16 %v80
  %v248 = vunpack.c.h.b16 %v80
  %v249 = vunpack.c.l.b16 %v81
  %v250 = vunpack.c.h.b16 %v81
  %v251 = vunpack.c.l.b16 %v82
  %v252 = vunpack.c.h.b16 %v82
  %v253 = vunpack.c.l.b16 %v83
  %v254 = vunpack.c.h.b16 %v83
  %v255 = vunpack.c.l.b16 %v84
  %v256 = vunpack.c.h.b16 %v84
  %v257 = vunpack.c.l.b16 %v85
  %v258 = vunpack.c.h.b16 %v85
  %v259 = vunpack.c.l.b16 %v86
  %v260 = vunpack.c.h.b16 %v86
  %v261 = vunpack.c.l.b16 %v87
  %v262 = vunpack.c.h.b16 %v87
  %v263 = vunpack.c.l.b16 %v88
  %v264 = vunpack.c.h.b16 %v88
  %v265 = vunpack.c.l.b16 %v89
  %v266 = vunpack.c.h.b16 %v89
  %v267 = vunpack.c.l.b16 %v90
  %v268 = vunpack.c.h.b16 %v90
  %v269 = vunpack.c.l.b16 %v91
  %v270 = vunpack.c.h.b16 %v91
  %v271 = vunpack.c.l.b16 %v92
  %v272 = vunpack.c.h.b16 %v92
  %v273 = vunpack.c.l.b16 %v93
  %v274 = vunpack.c.h.b16 %v93
  %v275 = vunpack.c.l.b16 %v94
  %v276 = vunpack.c.h.b16 %v94
  %v277 = vunpack.c.l.b16 %v95
  %v278 = vunpack.c.h.b16 %v95
  %v279 = vunpack.c.l.b16 %v96
  %v280 = vunpack.c.h.b16 %v96
  %v281 = vunpack.c.l.b16 %v97
  %v282 = vunpack.c.h.b16 %v97
  %v283 = vunpack.c.l.b16 %v98
  %v284 = vunpack.c.h.b16 %v98
  %v285 = vunpack.c.l.b16 %v99
  %v286 = vunpack.c.h.b16 %v99
  %v287 = vunpack.c.l.b16 %v100
  %v288 = vunpack.c.h.b16 %v100
  %v289 = vunpack.c.l.b16 %v101
  %v290 = vunpack.c.h.b16 %v101
  %v291 = vunpack.c.l.b16 %v102
  %v292 = vunpack.c.h.b16 %v102
  %v293 = vpack.c.b16 %v213, %v209
  %v294 = vpack.c.b16 %v214, %v210
  %v295 = vpack.c.b16 %v215, %v211
  %v296 = vpack.c.b16 %v216, %v212
  %v297 = vpack.c.b16 %v221, %v217
  %v298 = vpack.c.b16 %v222, %v218
  %v299 = vpack.c.b16 %v223, %v219
  %v300 = vpack.c.b16 %v224, %v220
  %v301 = vpack.c.b16 %v229, %v225
  %v302 = vpack.c.b16 %v230, %v226
  %v303 = vpack.c.b16 %v231, %v227
  %v304 = vpack.c.b16 %v232, %v228
  %v305 = vpack.c.b16 %v237, %v233
  %v306 = vpack.c.b16 %v238, %v234
  %v307 = vpack.c.b16 %v239, %v235
  %v308 = vpack.c.b16 %v240, %v236
  %v309 = vpack.c.b16 %v245, %v241
  %v310 = vpack.c.b16 %v246, %v242
  %v311 = vpack.c.b16 %v247, %v243
  %v312 = vpack.c.b16 %v248, %v244
  %v313 = vpack.c.b16 %v253, %v249
  %v314 = vpack.c.b16 %v254, %v250
  %v315 = vpack.c.b16 %v255, %v251
  %v316 = vpack.c.b16 %v256, %v252
  %v317 = vpack.c.b16 %v261, %v257
  %v318 = vpack.c.b16 %v262, %v258
  %v319 = vpack.c.b16 %v263, %v259
  %v320 = vpack.c.b16 %v264, %v260
  %v321 = vpack.c.b16 %v269, %v265
  %v322 = vpack.c.b16 %v270, %v266
  %v323 = vpack.c.b16 %v271, %v267
  %v324 = vpack.c.b16 %v272, %v268
  %v325 = vpack.c.b16 %v277, %v273
  %v326 = vpack.c.b16 %v278, %v274
  %v327 = vpack.c.b16 %v279, %v275
  %v328 = vpack.c.b16 %v280, %v276
  %v329 = vpack.c.b16 %v285, %v281
  %v330 = vpack.c.b16 %v286, %v282
  %v331 = vpack.c.b16 %v287, %v283
  %v332 = vpack.c.b16 %v288, %v284
  %v333 = vpack.c.b16 %v289, %v289
  %v334 = vpack.c.b16 %v290, %v290
  %v335 = vpack.c.b16 %v291, %v291
  %v336 = vpack.c.b16 %v292, %v292
  %v445 = vunpack.c.l.b16 %v103
  %v446 = vunpack.c.l.b16 %v104
  %v447 = vunpack.c.l.b16 %v105
  %v448 = vunpack.c.l.b16 %v106
  %v449 = vunpack.c.l.b16 %v107
  %v450 = vunpack.c.l.b16 %v108
  %v451 = vunpack.c.l.b16 %v109
  %v452 = vunpack.c.l.b16 %v110
  %v453 = vunpack.c.l.b16 %v111
  %v454 = vunpack.c.l.b16 %v112
  %v455 = vunpack.c.l.b16 %v113
  %v456 = vunpack.c.l.b16 %v114
  %v457 = vunpack.c.l.b16 %v115
  %v458 = vunpack.c.l.b16 %v116
  %v459 = vunpack.c.l.b16 %v117
  %v460 = vunpack.c.l.b16 %v118
  %v461 = vunpack.c.l.b16 %v119
  %v462 = vunpack.c.l.b16 %v120
  %v463 = vunpack.c.l.b16 %v121
  %v464 = vunpack.c.l.b16 %v122
  %v465 = vunpack.c.l.b16 %v123
  %v466 = vunpack.c.l.b16 %v124
  %v467 = vunpack.c.l.b16 %v125
  %v468 = vunpack.c.l.b16 %v126
  %v469 = vunpack.c.l.b16 %v127
  %v470 = vunpack.c.l.b16 %v128
  %v471 = vunpack.c.l.b16 %v129
  %v472 = vunpack.c.l.b16 %v130
  %v473 = vunpack.c.l.b16 %v131
  %v474 = vunpack.c.l.b16 %v132
  %v475 = vunpack.c.l.b16 %v133
  %v476 = vunpack.c.l.b16 %v134
  %v477 = vunpack.c.l.b16 %v135
  %v478 = vunpack.c.l.b16 %v136
  %v479 = vunpack.c.l.b16 %v137
  %v480 = vunpack.c.l.b16 %v138
  %v481 = vunpack.c.l.b16 %v139
  %v482 = vunpack.c.l.b16 %v140
  %v483 = vunpack.c.l.b16 %v141
  %v484 = vunpack.c.l.b16 %v142
  %v485 = vunpack.c.l.b16 %v143
  %v486 = vunpack.c.l.b16 %v144
  %v487 = vunpack.c.l.b16 %v145
  %v488 = vunpack.c.l.b16 %v146
  %v489 = vunpack.c.l.b16 %v147
  %v490 = vunpack.c.l.b16 %v148
  %v491 = vunpack.c.l.b16 %v149
  %v492 = vunpack.c.l.b16 %v150
  %v493 = vunpack.c.l.b16 %v151
  %v494 = vunpack.c.l.b16 %v152
  %v495 = vunpack.c.l.b16 %v153
  %v496 = vunpack.c.l.b16 %v154
  %v497 = vunpack.c.l.b16 %v155
  %v498 = vunpack.c.l.b16 %v156
  %v499 = vunpack.c.l.b16 %v157
  %v500 = vunpack.c.l.b16 %v158
  %v501 = vunpack.c.l.b16 %v159
  %v502 = vunpack.c.l.b16 %v160
  %v503 = vunpack.c.l.b16 %v161
  %v504 = vunpack.c.l.b16 %v162
  %v505 = vunpack.c.l.b16 %v163
  %v506 = vunpack.c.l.b16 %v164
  %v507 = vunpack.c.l.b16 %v165
  %v508 = vunpack.c.l.b16 %v166
  %v509 = vpack.c.b16 %v446, %v445
  %v510 = vpack.c.b16 %v448, %v447
  %v511 = vpack.c.b16 %v450, %v449
  %v512 = vpack.c.b16 %v452, %v451
  %v513 = vpack.c.b16 %v454, %v453
  %v514 = vpack.c.b16 %v456, %v455
  %v515 = vpack.c.b16 %v458, %v457
  %v516 = vpack.c.b16 %v460, %v459
  %v517 = vpack.c.b16 %v462, %v461
  %v518 = vpack.c.b16 %v464, %v463
  %v519 = vpack.c.b16 %v466, %v465
  %v520 = vpack.c.b16 %v468, %v467
  %v521 = vpack.c.b16 %v470, %v469
  %v522 = vpack.c.b16 %v472, %v471
  %v523 = vpack.c.b16 %v474, %v473
  %v524 = vpack.c.b16 %v476, %v475
  %v525 = vpack.c.b16 %v478, %v477
  %v526 = vpack.c.b16 %v480, %v479
  %v527 = vpack.c.b16 %v482, %v481
  %v528 = vpack.c.b16 %v484, %v483
  %v529 = vpack.c.b16 %v486, %v485
  %v530 = vpack.c.b16 %v488, %v487
  %v531 = vpack.c.b16 %v490, %v489
  %v532 = vpack.c.b16 %v492, %v491
  %v533 = vpack.c.b16 %v494, %v493
  %v534 = vpack.c.b16 %v496, %v495
  %v535 = vpack.c.b16 %v498, %v497
  %v536 = vpack.c.b16 %v500, %v499
  %v537 = vpack.c.b16 %v502, %v501
  %v538 = vpack.c.b16 %v504, %v503
  %v539 = vpack.c.b16 %v506, %v505
  %v540 = vpack.c.b16 %v508, %v507
  %573 = vmatprep.subr.bf16.mxu0 0
  %574 = vmatpush1.bf16.msra.mxu0 %v509
  %575 = vmatprep.subr.bf16.mxu0 0
  %576 = vmatpush1.bf16.msra.mxu0 %v510
  %577 = vmatprep.subr.bf16.mxu0 0
  %578 = vmatpush1.bf16.msra.mxu0 %v511
  %579 = vmatprep.subr.bf16.mxu0 0
  %580 = vmatpush1.bf16.msra.mxu0 %v512
  %581 = vmatprep.subr.bf16.mxu0 0
  %582 = vmatpush1.bf16.msra.mxu0 %v513
  %583 = vmatprep.subr.bf16.mxu0 0
  %584 = vmatpush1.bf16.msra.mxu0 %v514
  %585 = vmatprep.subr.bf16.mxu0 0
  %586 = vmatpush1.bf16.msra.mxu0 %v515
  %587 = vmatprep.subr.bf16.mxu0 0
  %588 = vmatpush1.bf16.msra.mxu0 %v516
  %589 = vmatprep.subr.bf16.mxu0 0
  %590 = vmatpush1.bf16.msra.mxu0 %v517
  %591 = vmatprep.subr.bf16.mxu0 0
  %592 = vmatpush1.bf16.msra.mxu0 %v518
  %593 = vmatprep.subr.bf16.mxu0 0
  %594 = vmatpush1.bf16.msra.mxu0 %v519
  %595 = vmatprep.subr.bf16.mxu0 0
  %596 = vmatpush1.bf16.msra.mxu0 %v520
  %597 = vmatprep.subr.bf16.mxu0 0
  %598 = vmatpush1.bf16.msra.mxu0 %v521
  %599 = vmatprep.subr.bf16.mxu0 0
  %600 = vmatpush1.bf16.msra.mxu0 %v522
  %601 = vmatprep.subr.bf16.mxu0 0
  %602 = vmatpush1.bf16.msra.mxu0 %v523
  %603 = vmatprep.subr.bf16.mxu0 0
  %604 = vmatpush1.bf16.msra.mxu0 %v524
  %605 = vmatprep.mubr.bf16.mxu0 %v294
  %606 = vmatmul.mubr.bf16.gmra.mrb[0].mxu0 %v293
  %v607 = vpop.f32.mrb[0].mxu0
  %v608 = vadd.f32 0.0, %v607
  %v609 = vpop.f32.mrb[0].mxu0
  %v610 = vpop.f32.mrb[0].mxu0
  %v611 = vadd.f32 0.0, %v610
  %v612 = vpop.f32.mrb[0].mxu0
  %613 = vmatprep.mubr.bf16.mxu0 %v298
  %614 = vmatmul.mubr.bf16.gmra.mrb[0].mxu0 %v297
  %v615 = vpop.f32.mrb[0].mxu0
  %v616 = vadd.f32 0.0, %v615
  %v617 = vpop.f32.mrb[0].mxu0
  %v618 = vpop.f32.mrb[0].mxu0
  %v619 = vadd.f32 0.0, %v618
  %v620 = vpop.f32.mrb[0].mxu0
  %621 = vmatprep.mubr.bf16.mxu0 %v302
  %622 = vmatmul.mubr.bf16.gmra.mrb[0].mxu0 %v301
  %v623 = vpop.f32.mrb[0].mxu0
  %v624 = vadd.f32 0.0, %v623
  %v625 = vpop.f32.mrb[0].mxu0
  %v626 = vpop.f32.mrb[0].mxu0
  %v627 = vadd.f32 0.0, %v626
  %v628 = vpop.f32.mrb[0].mxu0
  %629 = vmatprep.mubr.bf16.mxu0 %v306
  %630 = vmatmul.mubr.bf16.gmra.mrb[0].mxu0 %v305
  %v631 = vpop.f32.mrb[0].mxu0
  %v632 = vadd.f32 0.0, %v631
  %v633 = vpop.f32.mrb[0].mxu0
  %v634 = vpop.f32.mrb[0].mxu0
  %v635 = vadd.f32 0.0, %v634
  %v636 = vpop.f32.mrb[0].mxu0
  %637 = vmatprep.mubr.bf16.mxu0 %v310
  %638 = vmatmul.mubr.bf16.gmra.mrb[0].mxu0 %v309
  %v639 = vpop.f32.mrb[0].mxu0
  %v640 = vadd.f32 0.0, %v639
  %v641 = vpop.f32.mrb[0].mxu0
  %v642 = vpop.f32.mrb[0].mxu0
  %v643 = vadd.f32 0.0, %v642
  %v644 = vpop.f32.mrb[0].mxu0
  %645 = vmatprep.mubr.bf16.mxu0 %v314
  %646 = vmatmul.mubr.bf16.gmra.mrb[0].mxu0 %v313
  %v647 = vpop.f32.mrb[0].mxu0
  %v648 = vadd.f32 0.0, %v647
  %v649 = vpop.f32.mrb[0].mxu0
  %v650 = vpop.f32.mrb[0].mxu0
  %v651 = vadd.f32 0.0, %v650
  %v652 = vpop.f32.mrb[0].mxu0
  %653 = vmatprep.mubr.bf16.mxu0 %v318
  %654 = vmatmul.mubr.bf16.gmra.mrb[0].mxu0 %v317
  %v655 = vpop.f32.mrb[0].mxu0
  %v656 = vadd.f32 0.0, %v655
  %v657 = vpop.f32.mrb[0].mxu0
  %v658 = vpop.f32.mrb[0].mxu0
  %v659 = vadd.f32 0.0, %v658
  %v660 = vpop.f32.mrb[0].mxu0
  %661 = vmatprep.mubr.bf16.mxu0 %v322
  %662 = vmatmul.mubr.bf16.gmra.mrb[0].mxu0 %v321
  %v663 = vpop.f32.mrb[0].mxu0
  %v664 = vadd.f32 0.0, %v663
  %v665 = vpop.f32.mrb[0].mxu0
  %v666 = vpop.f32.mrb[0].mxu0
  %v667 = vadd.f32 0.0, %v666
  %v668 = vpop.f32.mrb[0].mxu0
  %669 = vmatprep.mubr.bf16.mxu0 %v326
  %670 = vmatmul.mubr.bf16.gmra.mrb[0].mxu0 %v325
  %v671 = vpop.f32.mrb[0].mxu0
  %v672 = vadd.f32 0.0, %v671
  %v673 = vpop.f32.mrb[0].mxu0
  %v674 = vpop.f32.mrb[0].mxu0
  %v675 = vadd.f32 0.0, %v674
  %v676 = vpop.f32.mrb[0].mxu0
  %677 = vmatprep.mubr.bf16.mxu0 %v330
  %678 = vmatmul.mubr.bf16.gmra.mrb[0].mxu0 %v329
  %v679 = vpop.f32.mrb[0].mxu0
  %v680 = vadd.f32 0.0, %v679
  %v681 = vpop.f32.mrb[0].mxu0
  %v682 = vpop.f32.mrb[0].mxu0
  %v683 = vadd.f32 0.0, %v682
  %v684 = vpop.f32.mrb[0].mxu0
  %685 = vmatprep.mubr.bf16.mxu0 %v334
  %686 = vmatmul.mubr.bf16.gmra.mrb[0].mxu0 %v333
  %v687 = vpop.f32.mrb[0].mxu0
  %v688 = vadd.f32 0.0, %v687
  %v689 = vpop.f32.mrb[0].mxu0
  %v690 = vpop.f32.mrb[0].mxu0
  %v691 = vpop.f32.mrb[0].mxu0
  %692 = vdwg.mxu0
  %693 = vmatprep.subr.bf16.mxu0 0
  %694 = vmatpush1.bf16.msra.mxu0 %v525
  %695 = vmatprep.subr.bf16.mxu0 0
  %696 = vmatpush1.bf16.msra.mxu0 %v526
  %697 = vmatprep.subr.bf16.mxu0 0
  %698 = vmatpush1.bf16.msra.mxu0 %v527
  %699 = vmatprep.subr.bf16.mxu0 0
  %700 = vmatpush1.bf16.msra.mxu0 %v528
  %701 = vmatprep.subr.bf16.mxu0 0
  %702 = vmatpush1.bf16.msra.mxu0 %v529
  %703 = vmatprep.subr.bf16.mxu0 0
  %704 = vmatpush1.bf16.msra.mxu0 %v530
  %705 = vmatprep.subr.bf16.mxu0 0
  %706 = vmatpush1.bf16.msra.mxu0 %v531
  %707 = vmatprep.subr.bf16.mxu0 0
  %708 = vmatpush1.bf16.msra.mxu0 %v532
  %709 = vmatprep.subr.bf16.mxu0 0
  %710 = vmatpush1.bf16.msra.mxu0 %v533
  %711 = vmatprep.subr.bf16.mxu0 0
  %712 = vmatpush1.bf16.msra.mxu0 %v534
  %713 = vmatprep.subr.bf16.mxu0 0
  %714 = vmatpush1.bf16.msra.mxu0 %v535
  %715 = vmatprep.subr.bf16.mxu0 0
  %716 = vmatpush1.bf16.msra.mxu0 %v536
  %717 = vmatprep.subr.bf16.mxu0 0
  %718 = vmatpush1.bf16.msra.mxu0 %v537
  %719 = vmatprep.subr.bf16.mxu0 0
  %720 = vmatpush1.bf16.msra.mxu0 %v538
  %721 = vmatprep.subr.bf16.mxu0 0
  %722 = vmatpush1.bf16.msra.mxu0 %v539
  %723 = vmatprep.subr.bf16.mxu0 0
  %724 = vmatpush1.bf16.msra.mxu0 %v540
  %725 = vmatprep.mubr.bf16.mxu0 %v296
  %726 = vmatmul.mubr.bf16.gmra.mrb[0].mxu0 %v295
  %v727 = vpop.f32.mrb[0].mxu0
  %v728 = vadd.f32 %v608, %v727
  %v729 = vpop.f32.mrb[0].mxu0
  %v730 = vpop.f32.mrb[0].mxu0
  %v731 = vadd.f32 %v611, %v730
  %v732 = vpop.f32.mrb[0].mxu0
  %733 = vmatprep.mubr.bf16.mxu0 %v300
  %734 = vmatmul.mubr.bf16.gmra.mrb[0].mxu0 %v299
  %v735 = vpop.f32.mrb[0].mxu0
  %v736 = vadd.f32 %v616, %v735
  %v737 = vpop.f32.mrb[0].mxu0
  %v738 = vpop.f32.mrb[0].mxu0
  %v739 = vadd.f32 %v619, %v738
  %v740 = vpop.f32.mrb[0].mxu0
  %741 = vmatprep.mubr.bf16.mxu0 %v304
  %742 = vmatmul.mubr.bf16.gmra.mrb[0].mxu0 %v303
  %v743 = vpop.f32.mrb[0].mxu0
  %v744 = vadd.f32 %v624, %v743
  %v745 = vpop.f32.mrb[0].mxu0
  %v746 = vpop.f32.mrb[0].mxu0
  %v747 = vadd.f32 %v627, %v746
  %v748 = vpop.f32.mrb[0].mxu0
  %749 = vmatprep.mubr.bf16.mxu0 %v308
  %750 = vmatmul.mubr.bf16.gmra.mrb[0].mxu0 %v307
  %v751 = vpop.f32.mrb[0].mxu0
  %v752 = vadd.f32 %v632, %v751
  %v753 = vpop.f32.mrb[0].mxu0
  %v754 = vpop.f32.mrb[0].mxu0
  %v755 = vadd.f32 %v635, %v754
  %v756 = vpop.f32.mrb[0].mxu0
  %757 = vmatprep.mubr.bf16.mxu0 %v312
  %758 = vmatmul.mubr.bf16.gmra.mrb[0].mxu0 %v311
  %v759 = vpop.f32.mrb[0].mxu0
  %v760 = vadd.f32 %v640, %v759
  %v761 = vpop.f32.mrb[0].mxu0
  %v762 = vpop.f32.mrb[0].mxu0
  %v763 = vadd.f32 %v643, %v762
  %v764 = vpop.f32.mrb[0].mxu0
  %765 = vmatprep.mubr.bf16.mxu0 %v316
  %766 = vmatmul.mubr.bf16.gmra.mrb[0].mxu0 %v315
  %v767 = vpop.f32.mrb[0].mxu0
  %v768 = vadd.f32 %v648, %v767
  %v769 = vpop.f32.mrb[0].mxu0
  %v770 = vpop.f32.mrb[0].mxu0
  %v771 = vadd.f32 %v651, %v770
  %v772 = vpop.f32.mrb[0].mxu0
  %773 = vmatprep.mubr.bf16.mxu0 %v320
  %774 = vmatmul.mubr.bf16.gmra.mrb[0].mxu0 %v319
  %v775 = vpop.f32.mrb[0].mxu0
  %v776 = vadd.f32 %v656, %v775
  %v777 = vpop.f32.mrb[0].mxu0
  %v778 = vpop.f32.mrb[0].mxu0
  %v779 = vadd.f32 %v659, %v778
  %v780 = vpop.f32.mrb[0].mxu0
  %781 = vmatprep.mubr.bf16.mxu0 %v324
  %782 = vmatmul.mubr.bf16.gmra.mrb[0].mxu0 %v323
  %v783 = vpop.f32.mrb[0].mxu0
  %v784 = vadd.f32 %v664, %v783
  %v785 = vpop.f32.mrb[0].mxu0
  %v786 = vpop.f32.mrb[0].mxu0
  %v787 = vadd.f32 %v667, %v786
  %v788 = vpop.f32.mrb[0].mxu0
  %789 = vmatprep.mubr.bf16.mxu0 %v328
  %790 = vmatmul.mubr.bf16.gmra.mrb[0].mxu0 %v327
  %v791 = vpop.f32.mrb[0].mxu0
  %v792 = vadd.f32 %v672, %v791
  %v793 = vpop.f32.mrb[0].mxu0
  %v794 = vpop.f32.mrb[0].mxu0
  %v795 = vadd.f32 %v675, %v794
  %v796 = vpop.f32.mrb[0].mxu0
  %797 = vmatprep.mubr.bf16.mxu0 %v332
  %798 = vmatmul.mubr.bf16.gmra.mrb[0].mxu0 %v331
  %v799 = vpop.f32.mrb[0].mxu0
  %v800 = vadd.f32 %v680, %v799
  %v801 = vpop.f32.mrb[0].mxu0
  %v802 = vpop.f32.mrb[0].mxu0
  %v803 = vadd.f32 %v683, %v802
  %v804 = vpop.f32.mrb[0].mxu0
  %805 = vmatprep.mubr.bf16.mxu0 %v336
  %806 = vmatmul.mubr.bf16.gmra.mrb[0].mxu0 %v335
  %v807 = vpop.f32.mrb[0].mxu0
  %v808 = vadd.f32 %v688, %v807
  %v809 = vpop.f32.mrb[0].mxu0
  %v810 = vpop.f32.mrb[0].mxu0
  %v811 = vpop.f32.mrb[0].mxu0
  %812 = vdwg.mxu0
  %v813 = vadd.f32 %v40, %v728
  %v814 = vadd.f32 %v41, %v731
  %v815 = vadd.f32 %v42, %v736
  %v816 = vadd.f32 %v43, %v739
  %v817 = vadd.f32 %v44, %v744
  %v818 = vadd.f32 %v45, %v747
  %v819 = vadd.f32 %v46, %v752
  %v820 = vadd.f32 %v47, %v755
  %v821 = vadd.f32 %v48, %v760
  %v822 = vadd.f32 %v49, %v763
  %v823 = vadd.f32 %v50, %v768
  %v824 = vadd.f32 %v51, %v771
  %v825 = vadd.f32 %v52, %v776
  %v826 = vadd.f32 %v53, %v779
  %v827 = vadd.f32 %v54, %v784
  %v828 = vadd.f32 %v55, %v787
  %v829 = vadd.f32 %v56, %v792
  %v830 = vadd.f32 %v57, %v795
  %v831 = vadd.f32 %v58, %v800
  %v832 = vadd.f32 %v59, %v803
  %v833 = vadd.f32 %v60, %v808
  %834 = vst [vmem:[#allocation2] sm:$0xff] %v813
  %835 = vst [vmem:[#allocation2 + $0x8] sm:$0xff] %v814
  %836 = vst [vmem:[#allocation2 + $0x10] sm:$0xff] %v815
  %837 = vst [vmem:[#allocation2 + $0x18] sm:$0xff] %v816
  %838 = vst [vmem:[#allocation2 + $0x20] sm:$0xff] %v817
  %839 = vst [vmem:[#allocation2 + $0x28] sm:$0xff] %v818
  %840 = vst [vmem:[#allocation2 + $0x30] sm:$0xff] %v819
  %841 = vst [vmem:[#allocation2 + $0x38] sm:$0xff] %v820
  %842 = vst [vmem:[#allocation2 + $0x40] sm:$0xff] %v821
  %843 = vst [vmem:[#allocation2 + $0x48] sm:$0xff] %v822
  %844 = vst [vmem:[#allocation2 + $0x50] sm:$0xff] %v823
  %845 = vst [vmem:[#allocation2 + $0x58] sm:$0xff] %v824
  %846 = vst [vmem:[#allocation2 + $0x60] sm:$0xff] %v825
  %847 = vst [vmem:[#allocation2 + $0x68] sm:$0xff] %v826
  %848 = vst [vmem:[#allocation2 + $0x70] sm:$0xff] %v827
  %849 = vst [vmem:[#allocation2 + $0x78] sm:$0xff] %v828
  %850 = vst [vmem:[#allocation2 + $0x80] sm:$0xff] %v829
  %851 = vst [vmem:[#allocation2 + $0x88] sm:$0xff] %v830
  %852 = vst [vmem:[#allocation2 + $0x90] sm:$0xff] %v831
  %853 = vst [vmem:[#allocation2 + $0x98] sm:$0xff] %v832
  %854 = vst [vmem:[#allocation2 + $0xa0] sm:$0xff] %v833
  // Predicated region
  $region18: #{bayesian_atari_qr_forward.7} parent=0 // pred_check
    %p855 = pneg %p15
  $region19: #{bayesian_atari_qr_forward.7} parent=0 // pred_check_branch
    %857 = sbr.rel (%p855) target = $region21
  $region20: #{bayesian_atari_qr_forward.7} parent=0 // pred_region
    %v858 = vld [vmem:[#allocation2] sm:$0xff]
    %v859 = vld [vmem:[#allocation2 + $0x8] sm:$0xff]
    %v860 = vld [vmem:[#allocation2 + $0x10] sm:$0xff]
    %v861 = vld [vmem:[#allocation2 + $0x18] sm:$0xff]
    %v862 = vld [vmem:[#allocation2 + $0x20] sm:$0xff]
    %v863 = vld [vmem:[#allocation2 + $0x28] sm:$0xff]
    %v864 = vld [vmem:[#allocation2 + $0x30] sm:$0xff]
    %v865 = vld [vmem:[#allocation2 + $0x38] sm:$0xff]
    %v866 = vld [vmem:[#allocation2 + $0x40] sm:$0xff]
    %v867 = vld [vmem:[#allocation2 + $0x48] sm:$0xff]
    %v868 = vld [vmem:[#allocation2 + $0x50] sm:$0xff]
    %v869 = vld [vmem:[#allocation2 + $0x58] sm:$0xff]
    %v870 = vld [vmem:[#allocation2 + $0x60] sm:$0xff]
    %v871 = vld [vmem:[#allocation2 + $0x68] sm:$0xff]
    %v872 = vld [vmem:[#allocation2 + $0x70] sm:$0xff]
    %v873 = vld [vmem:[#allocation2 + $0x78] sm:$0xff]
    %v874 = vld [vmem:[#allocation2 + $0x80] sm:$0xff]
    %v875 = vld [vmem:[#allocation2 + $0x88] sm:$0xff]
    %v876 = vld [vmem:[#allocation2 + $0x90] sm:$0xff]
    %v877 = vld [vmem:[#allocation2 + $0x98] sm:$0xff]
    %v878 = vld [vmem:[#allocation2 + $0xa0] sm:$0xff]
    %v879 = vld [vmem:[%s2] sm:$0x1]
    %v881 = vlaneseq
    %v882 = vshrl.u32 %v881, 7
    %v883 = vsub.s32 0, %v882
    %v884 = vrot.slane %v879, %v883
    %v886 = vadd.f32 %v858, %v884
    %v887 = vadd.f32 %v859, %v884
    %v888 = vadd.f32 %v860, %v884
    %v889 = vadd.f32 %v861, %v884
    %v890 = vadd.f32 %v862, %v884
    %v891 = vadd.f32 %v863, %v884
    %v892 = vadd.f32 %v864, %v884
    %v893 = vadd.f32 %v865, %v884
    %v894 = vadd.f32 %v866, %v884
    %v895 = vadd.f32 %v867, %v884
    %v896 = vadd.f32 %v868, %v884
    %v897 = vadd.f32 %v869, %v884
    %v898 = vadd.f32 %v870, %v884
    %v899 = vadd.f32 %v871, %v884
    %v900 = vadd.f32 %v872, %v884
    %v901 = vadd.f32 %v873, %v884
    %v902 = vadd.f32 %v874, %v884
    %v903 = vadd.f32 %v875, %v884
    %v904 = vadd.f32 %v876, %v884
    %v905 = vadd.f32 %v877, %v884
    %v906 = vadd.f32 %v878, %v884
    %v907 = vmax.f32 %v886, 0.0
    %v908 = vmax.f32 %v887, 0.0
    %v909 = vmax.f32 %v888, 0.0
    %v910 = vmax.f32 %v889, 0.0
    %v911 = vmax.f32 %v890, 0.0
    %v912 = vmax.f32 %v891, 0.0
    %v913 = vmax.f32 %v892, 0.0
    %v914 = vmax.f32 %v893, 0.0
    %v915 = vmax.f32 %v894, 0.0
    %v916 = vmax.f32 %v895, 0.0
    %v917 = vmax.f32 %v896, 0.0
    %v918 = vmax.f32 %v897, 0.0
    %v919 = vmax.f32 %v898, 0.0
    %v920 = vmax.f32 %v899, 0.0
    %v921 = vmax.f32 %v900, 0.0
    %v922 = vmax.f32 %v901, 0.0
    %v923 = vmax.f32 %v902, 0.0
    %v924 = vmax.f32 %v903, 0.0
    %v925 = vmax.f32 %v904, 0.0
    %v926 = vmax.f32 %v905, 0.0
    %v927 = vmax.f32 %v906, 0.0
    %v928 = vpack.c.bf16 %v908, %v907
    %v929 = vpack.c.bf16 %v910, %v909
    %v930 = vpack.c.bf16 %v912, %v911
    %v931 = vpack.c.bf16 %v914, %v913
    %v932 = vpack.c.bf16 %v916, %v915
    %v933 = vpack.c.bf16 %v918, %v917
    %v934 = vpack.c.bf16 %v920, %v919
    %v935 = vpack.c.bf16 %v922, %v921
    %v936 = vpack.c.bf16 %v924, %v923
    %v937 = vpack.c.bf16 %v926, %v925
    %v938 = vpack.c.bf16 %v927, %v927
    %v950 = vunpack.c.l.b16 %v928
    %v951 = vunpack.c.h.b16 %v928
    %v952 = vunpack.c.l.b16 %v929
    %v953 = vunpack.c.h.b16 %v929
    %v954 = vunpack.c.l.b16 %v930
    %v955 = vunpack.c.h.b16 %v930
    %v956 = vunpack.c.l.b16 %v931
    %v957 = vunpack.c.h.b16 %v931
    %v958 = vunpack.c.l.b16 %v932
    %v959 = vunpack.c.h.b16 %v932
    %v960 = vunpack.c.l.b16 %v933
    %v961 = vunpack.c.h.b16 %v933
    %v962 = vunpack.c.l.b16 %v934
    %v963 = vunpack.c.h.b16 %v934
    %v964 = vunpack.c.l.b16 %v935
    %v965 = vunpack.c.h.b16 %v935
    %v966 = vunpack.c.l.b16 %v936
    %v967 = vunpack.c.h.b16 %v936
    %v968 = vunpack.c.l.b16 %v937
    %v969 = vunpack.c.h.b16 %v937
    %v970 = vunpack.c.l.b16 %v938
    %v971 = vpack.c.b16 %v950, %v950
    %v972 = vpack.c.b16 %v951, %v951
    %v973 = vpack.c.b16 %v952, %v952
    %v974 = vpack.c.b16 %v953, %v953
    %v975 = vpack.c.b16 %v954, %v954
    %v976 = vpack.c.b16 %v955, %v955
    %v977 = vpack.c.b16 %v956, %v956
    %v978 = vpack.c.b16 %v957, %v957
    %v979 = vpack.c.b16 %v958, %v958
    %v980 = vpack.c.b16 %v959, %v959
    %v981 = vpack.c.b16 %v960, %v960
    %v982 = vpack.c.b16 %v961, %v961
    %v983 = vpack.c.b16 %v962, %v962
    %v984 = vpack.c.b16 %v963, %v963
    %v985 = vpack.c.b16 %v964, %v964
    %v986 = vpack.c.b16 %v965, %v965
    %v987 = vpack.c.b16 %v966, %v966
    %v988 = vpack.c.b16 %v967, %v967
    %v989 = vpack.c.b16 %v968, %v968
    %v990 = vpack.c.b16 %v969, %v969
    %v991 = vpack.c.b16 %v970, %v970
    %1013 = vst [vmem:[%s3] sm:$0xf] %v971
    %1014 = vst [vmem:[%s3 + $0x4] sm:$0xf] %v972
    %1015 = vst [vmem:[%s3 + $0x8] sm:$0xf] %v973
    %1016 = vst [vmem:[%s3 + $0xc] sm:$0xf] %v974
    %1017 = vst [vmem:[%s3 + $0x10] sm:$0xf] %v975
    %1018 = vst [vmem:[%s3 + $0x14] sm:$0xf] %v976
    %1019 = vst [vmem:[%s3 + $0x18] sm:$0xf] %v977
    %1020 = vst [vmem:[%s3 + $0x1c] sm:$0xf] %v978
    %1021 = vst [vmem:[%s3 + $0x20] sm:$0xf] %v979
    %1022 = vst [vmem:[%s3 + $0x24] sm:$0xf] %v980
    %1023 = vst [vmem:[%s3 + $0x28] sm:$0xf] %v981
    %1024 = vst [vmem:[%s3 + $0x2c] sm:$0xf] %v982
    %1025 = vst [vmem:[%s3 + $0x30] sm:$0xf] %v983
    %1026 = vst [vmem:[%s3 + $0x34] sm:$0xf] %v984
    %1027 = vst [vmem:[%s3 + $0x38] sm:$0xf] %v985
    %1028 = vst [vmem:[%s3 + $0x3c] sm:$0xf] %v986
    %1029 = vst [vmem:[%s3 + $0x40] sm:$0xf] %v987
    %1030 = vst [vmem:[%s3 + $0x44] sm:$0xf] %v988
    %1031 = vst [vmem:[%s3 + $0x48] sm:$0xf] %v989
    %1032 = vst [vmem:[%s3 + $0x4c] sm:$0xf] %v990
    %1033 = vst [vmem:[%s3 + $0x50] sm:$0xf] %v991
  $region21: #{bayesian_atari_qr_forward.7} parent=0 // pred_fallthru
    _
  // Predicated region
  $region22: #{bayesian_atari_qr_forward.7} parent=0 // pred_check
    _
  $region23: #{bayesian_atari_qr_forward.7} parent=0 // pred_check_branch
    %1035 = sbr.rel (0) target = $region25
  $region24: #{bayesian_atari_qr_forward.7} parent=0 // pred_region
    _
  $region25: #{bayesian_atari_qr_forward.7} parent=0 // pred_fallthru
    _
  // Predicated region
  $region26: #{bayesian_atari_qr_forward.7} parent=0 // pred_check
    _
  $region27: #{bayesian_atari_qr_forward.7} parent=0 // pred_check_branch
    %1037 = sbr.rel (0) target = $region29
  $region28: #{bayesian_atari_qr_forward.7} parent=0 // pred_region
    _
  $region29: #{bayesian_atari_qr_forward.7} parent=0 // pred_fallthru
    _

// kernel: bayesian_atari_qr_forward.8
$region0: #{bayesian_atari_qr_forward.8}
  #allocation0 [shape = 'u32[]', space=smem, size = 0x4, offset = 0x4, fixed_abs, tag = 'smem constant byte address 0x4 - core index']
  #allocation1 [shape = 'u32[144,128]{1,0:T(1,128)}', space=vmem, size = 0x12000, scoped, tag = 'internal scratch']
  #allocation2 [shape = 'f32[104,128]{1,0:T(8,128)}', space=vmem, size = 0xd000, scoped, tag = 'scratch operand']
  %s0 = inlined_call_operand.vmem [shape: bf16[104,640], index: 0, kind: input, shape index: {}]
  %s1 = inlined_call_operand.vmem [shape: bf16[640,128], index: 1, kind: input, shape index: {}]
  %s2 = inlined_call_operand.vmem [shape: f32[1,128], index: 2, kind: input, shape index: {}]
  %s3 = inlined_call_operand.vmem [shape: bf16[104,128], index: 3, kind: output, shape index: {}]
  %s4 = sld [smem:[#allocation0]]
  $region30: #{bayesian_atari_qr_forward.8} parent=0
    _
  %s6 = ssub.s32 1, %s4
  %s7 = scalar_select 0, %s6, %s4
  // Predicated region
  $region2: #{bayesian_atari_qr_forward.8} parent=0 // pred_check
    _
  $region3: #{bayesian_atari_qr_forward.8} parent=0 // pred_check_branch
    %9 = sbr.rel (0) target = $region5
  $region4: #{bayesian_atari_qr_forward.8} parent=0 // pred_region
    _
  $region5: #{bayesian_atari_qr_forward.8} parent=0 // pred_fallthru
    _
  // Predicated region
  $region6: #{bayesian_atari_qr_forward.8} parent=0 // pred_check
    _
  $region7: #{bayesian_atari_qr_forward.8} parent=0 // pred_check_branch
    %11 = sbr.rel (0) target = $region9
  $region8: #{bayesian_atari_qr_forward.8} parent=0 // pred_region
    _
  $region9: #{bayesian_atari_qr_forward.8} parent=0 // pred_fallthru
    _
  // Predicated region
  $region10: #{bayesian_atari_qr_forward.8} parent=0 // pred_check
    _
  $region11: #{bayesian_atari_qr_forward.8} parent=0 // pred_check_branch
    %13 = sbr.rel (0) target = $region13
  $region12: #{bayesian_atari_qr_forward.8} parent=0 // pred_region
    _
  $region13: #{bayesian_atari_qr_forward.8} parent=0 // pred_fallthru
    _
  %p15 = scmp.eq.s32.totalorder 0, 0
  // Predicated region
  $region14: #{bayesian_atari_qr_forward.8} parent=0 // pred_check
    %p16 = pneg %p15
  $region15: #{bayesian_atari_qr_forward.8} parent=0 // pred_check_branch
    %18 = sbr.rel (%p16) target = $region17
  $region16: #{bayesian_atari_qr_forward.8} parent=0 // pred_region
    %19 = vst [vmem:[#allocation2] sm:$0xff] 0.0
    %20 = vst [vmem:[#allocation2 + $0x8] sm:$0xff] 0.0
    %21 = vst [vmem:[#allocation2 + $0x10] sm:$0xff] 0.0
    %22 = vst [vmem:[#allocation2 + $0x18] sm:$0xff] 0.0
    %23 = vst [vmem:[#allocation2 + $0x20] sm:$0xff] 0.0
    %24 = vst [vmem:[#allocation2 + $0x28] sm:$0xff] 0.0
    %25 = vst [vmem:[#allocation2 + $0x30] sm:$0xff] 0.0
    %26 = vst [vmem:[#allocation2 + $0x38] sm:$0xff] 0.0
    %27 = vst [vmem:[#allocation2 + $0x40] sm:$0xff] 0.0
    %28 = vst [vmem:[#allocation2 + $0x48] sm:$0xff] 0.0
    %29 = vst [vmem:[#allocation2 + $0x50] sm:$0xff] 0.0
    %30 = vst [vmem:[#allocation2 + $0x58] sm:$0xff] 0.0
    %31 = vst [vmem:[#allocation2 + $0x60] sm:$0xff] 0.0
  $region17: #{bayesian_atari_qr_forward.8} parent=0 // pred_fallthru
    _
  %v32 = vld [vmem:[#allocation2] sm:$0xff]
  %v33 = vld [vmem:[#allocation2 + $0x8] sm:$0xff]
  %v34 = vld [vmem:[#allocation2 + $0x10] sm:$0xff]
  %v35 = vld [vmem:[#allocation2 + $0x18] sm:$0xff]
  %v36 = vld [vmem:[#allocation2 + $0x20] sm:$0xff]
  %v37 = vld [vmem:[#allocation2 + $0x28] sm:$0xff]
  %v38 = vld [vmem:[#allocation2 + $0x30] sm:$0xff]
  %v39 = vld [vmem:[#allocation2 + $0x38] sm:$0xff]
  %v40 = vld [vmem:[#allocation2 + $0x40] sm:$0xff]
  %v41 = vld [vmem:[#allocation2 + $0x48] sm:$0xff]
  %v42 = vld [vmem:[#allocation2 + $0x50] sm:$0xff]
  %v43 = vld [vmem:[#allocation2 + $0x58] sm:$0xff]
  %v44 = vld [vmem:[#allocation2 + $0x60] sm:$0xff]
  %v45 = vld [vmem:[%s0] sm:$0xff]
  %v46 = vld [vmem:[%s0 + $0x8] sm:$0xff]
  %v47 = vld [vmem:[%s0 + $0x10] sm:$0xf]
  %v48 = vld [vmem:[%s0 + $0x14] sm:$0xff]
  %v49 = vld [vmem:[%s0 + $0x1c] sm:$0xff]
  %v50 = vld [vmem:[%s0 + $0x24] sm:$0xf]
  %v51 = vld [vmem:[%s0 + $0x28] sm:$0xff]
  %v52 = vld [vmem:[%s0 + $0x30] sm:$0xff]
  %v53 = vld [vmem:[%s0 + $0x38] sm:$0xf]
  %v54 = vld [vmem:[%s0 + $0x3c] sm:$0xff]
  %v55 = vld [vmem:[%s0 + $0x44] sm:$0xff]
  %v56 = vld [vmem:[%s0 + $0x4c] sm:$0xf]
  %v57 = vld [vmem:[%s0 + $0x50] sm:$0xff]
  %v58 = vld [vmem:[%s0 + $0x58] sm:$0xff]
  %v59 = vld [vmem:[%s0 + $0x60] sm:$0xf]
  %v60 = vld [vmem:[%s0 + $0x64] sm:$0xff]
  %v61 = vld [vmem:[%s0 + $0x6c] sm:$0xff]
  %v62 = vld [vmem:[%s0 + $0x74] sm:$0xf]
  %v63 = vld [vmem:[%s0 + $0x78] sm:$0xff]
  %v64 = vld [vmem:[%s0 + $0x80] sm:$0xff]
  %v65 = vld [vmem:[%s0 + $0x88] sm:$0xf]
  %v66 = vld [vmem:[%s0 + $0x8c] sm:$0xff]
  %v67 = vld [vmem:[%s0 + $0x94] sm:$0xff]
  %v68 = vld [vmem:[%s0 + $0x9c] sm:$0xf]
  %v69 = vld [vmem:[%s0 + $0xa0] sm:$0xff]
  %v70 = vld [vmem:[%s0 + $0xa8] sm:$0xff]
  %v71 = vld [vmem:[%s0 + $0xb0] sm:$0xf]
  %v72 = vld [vmem:[%s0 + $0xb4] sm:$0xff]
  %v73 = vld [vmem:[%s0 + $0xbc] sm:$0xff]
  %v74 = vld [vmem:[%s0 + $0xc4] sm:$0xf]
  %v75 = vld [vmem:[%s0 + $0xc8] sm:$0xff]
  %v76 = vld [vmem:[%s0 + $0xd0] sm:$0xff]
  %v77 = vld [vmem:[%s0 + $0xd8] sm:$0xf]
  %v78 = vld [vmem:[%s0 + $0xdc] sm:$0xff]
  %v79 = vld [vmem:[%s0 + $0xe4] sm:$0xff]
  %v80 = vld [vmem:[%s0 + $0xec] sm:$0xf]
  %v81 = vld [vmem:[%s0 + $0xf0] sm:$0xff]
  %v82 = vld [vmem:[%s0 + $0xf8] sm:$0xff]
  %v83 = vld [vmem:[%s0 + $0x100] sm:$0xf]
  %v84 = vld [vmem:[%s1] sm:$0xf]
  %v85 = vld [vmem:[%s1 + $0x4] sm:$0xf]
  %v86 = vld [vmem:[%s1 + $0x8] sm:$0xf]
  %v87 = vld [vmem:[%s1 + $0xc] sm:$0xf]
  %v88 = vld [vmem:[%s1 + $0x10] sm:$0xf]
  %v89 = vld [vmem:[%s1 + $0x14] sm:$0xf]
  %v90 = vld [vmem:[%s1 + $0x18] sm:$0xf]
  %v91 = vld [vmem:[%s1 + $0x1c] sm:$0xf]
  %v92 = vld [vmem:[%s1 + $0x20] sm:$0xf]
  %v93 = vld [vmem:[%s1 + $0x24] sm:$0xf]
  %v94 = vld [vmem:[%s1 + $0x28] sm:$0xf]
  %v95 = vld [vmem:[%s1 + $0x2c] sm:$0xf]
  %v96 = vld [vmem:[%s1 + $0x30] sm:$0xf]
  %v97 = vld [vmem:[%s1 + $0x34] sm:$0xf]
  %v98 = vld [vmem:[%s1 + $0x38] sm:$0xf]
  %v99 = vld [vmem:[%s1 + $0x3c] sm:$0xf]
  %v100 = vld [vmem:[%s1 + $0x40] sm:$0xf]
  %v101 = vld [vmem:[%s1 + $0x44] sm:$0xf]
  %v102 = vld [vmem:[%s1 + $0x48] sm:$0xf]
  %v103 = vld [vmem:[%s1 + $0x4c] sm:$0xf]
  %v104 = vld [vmem:[%s1 + $0x50] sm:$0xf]
  %v105 = vld [vmem:[%s1 + $0x54] sm:$0xf]
  %v106 = vld [vmem:[%s1 + $0x58] sm:$0xf]
  %v107 = vld [vmem:[%s1 + $0x5c] sm:$0xf]
  %v108 = vld [vmem:[%s1 + $0x60] sm:$0xf]
  %v109 = vld [vmem:[%s1 + $0x64] sm:$0xf]
  %v110 = vld [vmem:[%s1 + $0x68] sm:$0xf]
  %v111 = vld [vmem:[%s1 + $0x6c] sm:$0xf]
  %v112 = vld [vmem:[%s1 + $0x70] sm:$0xf]
  %v113 = vld [vmem:[%s1 + $0x74] sm:$0xf]
  %v114 = vld [vmem:[%s1 + $0x78] sm:$0xf]
  %v115 = vld [vmem:[%s1 + $0x7c] sm:$0xf]
  %v116 = vld [vmem:[%s1 + $0x80] sm:$0xf]
  %v117 = vld [vmem:[%s1 + $0x84] sm:$0xf]
  %v118 = vld [vmem:[%s1 + $0x88] sm:$0xf]
  %v119 = vld [vmem:[%s1 + $0x8c] sm:$0xf]
  %v120 = vld [vmem:[%s1 + $0x90] sm:$0xf]
  %v121 = vld [vmem:[%s1 + $0x94] sm:$0xf]
  %v122 = vld [vmem:[%s1 + $0x98] sm:$0xf]
  %v123 = vld [vmem:[%s1 + $0x9c] sm:$0xf]
  %v124 = vld [vmem:[%s1 + $0xa0] sm:$0xf]
  %v125 = vld [vmem:[%s1 + $0xa4] sm:$0xf]
  %v126 = vld [vmem:[%s1 + $0xa8] sm:$0xf]
  %v127 = vld [vmem:[%s1 + $0xac] sm:$0xf]
  %v128 = vld [vmem:[%s1 + $0xb0] sm:$0xf]
  %v129 = vld [vmem:[%s1 + $0xb4] sm:$0xf]
  %v130 = vld [vmem:[%s1 + $0xb8] sm:$0xf]
  %v131 = vld [vmem:[%s1 + $0xbc] sm:$0xf]
  %v132 = vld [vmem:[%s1 + $0xc0] sm:$0xf]
  %v133 = vld [vmem:[%s1 + $0xc4] sm:$0xf]
  %v134 = vld [vmem:[%s1 + $0xc8] sm:$0xf]
  %v135 = vld [vmem:[%s1 + $0xcc] sm:$0xf]
  %v136 = vld [vmem:[%s1 + $0xd0] sm:$0xf]
  %v137 = vld [vmem:[%s1 + $0xd4] sm:$0xf]
  %v138 = vld [vmem:[%s1 + $0xd8] sm:$0xf]
  %v139 = vld [vmem:[%s1 + $0xdc] sm:$0xf]
  %v140 = vld [vmem:[%s1 + $0xe0] sm:$0xf]
  %v141 = vld [vmem:[%s1 + $0xe4] sm:$0xf]
  %v142 = vld [vmem:[%s1 + $0xe8] sm:$0xf]
  %v143 = vld [vmem:[%s1 + $0xec] sm:$0xf]
  %v144 = vld [vmem:[%s1 + $0xf0] sm:$0xf]
  %v145 = vld [vmem:[%s1 + $0xf4] sm:$0xf]
  %v146 = vld [vmem:[%s1 + $0xf8] sm:$0xf]
  %v147 = vld [vmem:[%s1 + $0xfc] sm:$0xf]
  %v148 = vld [vmem:[%s1 + $0x100] sm:$0xf]
  %v149 = vld [vmem:[%s1 + $0x104] sm:$0xf]
  %v150 = vld [vmem:[%s1 + $0x108] sm:$0xf]
  %v151 = vld [vmem:[%s1 + $0x10c] sm:$0xf]
  %v152 = vld [vmem:[%s1 + $0x110] sm:$0xf]
  %v153 = vld [vmem:[%s1 + $0x114] sm:$0xf]
  %v154 = vld [vmem:[%s1 + $0x118] sm:$0xf]
  %v155 = vld [vmem:[%s1 + $0x11c] sm:$0xf]
  %v156 = vld [vmem:[%s1 + $0x120] sm:$0xf]
  %v157 = vld [vmem:[%s1 + $0x124] sm:$0xf]
  %v158 = vld [vmem:[%s1 + $0x128] sm:$0xf]
  %v159 = vld [vmem:[%s1 + $0x12c] sm:$0xf]
  %v160 = vld [vmem:[%s1 + $0x130] sm:$0xf]
  %v161 = vld [vmem:[%s1 + $0x134] sm:$0xf]
  %v162 = vld [vmem:[%s1 + $0x138] sm:$0xf]
  %v163 = vld [vmem:[%s1 + $0x13c] sm:$0xf]
  %v203 = vunpack.c.l.b16 %v45
  %v204 = vunpack.c.h.b16 %v45
  %v205 = vunpack.c.l.b16 %v46
  %v206 = vunpack.c.h.b16 %v46
  %v207 = vunpack.c.l.b16 %v47
  %v208 = vunpack.c.l.b16 %v48
  %v209 = vunpack.c.h.b16 %v48
  %v210 = vunpack.c.l.b16 %v49
  %v211 = vunpack.c.h.b16 %v49
  %v212 = vunpack.c.l.b16 %v50
  %v213 = vunpack.c.l.b16 %v51
  %v214 = vunpack.c.h.b16 %v51
  %v215 = vunpack.c.l.b16 %v52
  %v216 = vunpack.c.h.b16 %v52
  %v217 = vunpack.c.l.b16 %v53
  %v218 = vunpack.c.l.b16 %v54
  %v219 = vunpack.c.h.b16 %v54
  %v220 = vunpack.c.l.b16 %v55
  %v221 = vunpack.c.h.b16 %v55
  %v222 = vunpack.c.l.b16 %v56
  %v223 = vunpack.c.l.b16 %v57
  %v224 = vunpack.c.h.b16 %v57
  %v225 = vunpack.c.l.b16 %v58
  %v226 = vunpack.c.h.b16 %v58
  %v227 = vunpack.c.l.b16 %v59
  %v228 = vunpack.c.l.b16 %v60
  %v229 = vunpack.c.h.b16 %v60
  %v230 = vunpack.c.l.b16 %v61
  %v231 = vunpack.c.h.b16 %v61
  %v232 = vunpack.c.l.b16 %v62
  %v233 = vunpack.c.l.b16 %v63
  %v234 = vunpack.c.h.b16 %v63
  %v235 = vunpack.c.l.b16 %v64
  %v236 = vunpack.c.h.b16 %v64
  %v237 = vunpack.c.l.b16 %v65
  %v238 = vunpack.c.l.b16 %v66
  %v239 = vunpack.c.h.b16 %v66
  %v240 = vunpack.c.l.b16 %v67
  %v241 = vunpack.c.h.b16 %v67
  %v242 = vunpack.c.l.b16 %v68
  %v243 = vunpack.c.l.b16 %v69
  %v244 = vunpack.c.h.b16 %v69
  %v245 = vunpack.c.l.b16 %v70
  %v246 = vunpack.c.h.b16 %v70
  %v247 = vunpack.c.l.b16 %v71
  %v248 = vunpack.c.l.b16 %v72
  %v249 = vunpack.c.h.b16 %v72
  %v250 = vunpack.c.l.b16 %v73
  %v251 = vunpack.c.h.b16 %v73
  %v252 = vunpack.c.l.b16 %v74
  %v253 = vunpack.c.l.b16 %v75
  %v254 = vunpack.c.h.b16 %v75
  %v255 = vunpack.c.l.b16 %v76
  %v256 = vunpack.c.h.b16 %v76
  %v257 = vunpack.c.l.b16 %v77
  %v258 = vunpack.c.l.b16 %v78
  %v259 = vunpack.c.h.b16 %v78
  %v260 = vunpack.c.l.b16 %v79
  %v261 = vunpack.c.h.b16 %v79
  %v262 = vunpack.c.l.b16 %v80
  %v263 = vunpack.c.l.b16 %v81
  %v264 = vunpack.c.h.b16 %v81
  %v265 = vunpack.c.l.b16 %v82
  %v266 = vunpack.c.h.b16 %v82
  %v267 = vunpack.c.l.b16 %v83
  %v268 = vpack.c.b16 %v208, %v203
  %v269 = vpack.c.b16 %v209, %v204
  %v270 = vpack.c.b16 %v210, %v205
  %v271 = vpack.c.b16 %v211, %v206
  %v272 = vpack.c.b16 %v212, %v207
  %v273 = vpack.c.b16 %v218, %v213
  %v274 = vpack.c.b16 %v219, %v214
  %v275 = vpack.c.b16 %v220, %v215
  %v276 = vpack.c.b16 %v221, %v216
  %v277 = vpack.c.b16 %v222, %v217
  %v278 = vpack.c.b16 %v228, %v223
  %v279 = vpack.c.b16 %v229, %v224
  %v280 = vpack.c.b16 %v230, %v225
  %v281 = vpack.c.b16 %v231, %v226
  %v282 = vpack.c.b16 %v232, %v227
  %v283 = vpack.c.b16 %v238, %v233
  %v284 = vpack.c.b16 %v239, %v234
  %v285 = vpack.c.b16 %v240, %v235
  %v286 = vpack.c.b16 %v241, %v236
  %v287 = vpack.c.b16 %v242, %v237
  %v288 = vpack.c.b16 %v248, %v243
  %v289 = vpack.c.b16 %v249, %v244
  %v290 = vpack.c.b16 %v250, %v245
  %v291 = vpack.c.b16 %v251, %v246
  %v292 = vpack.c.b16 %v252, %v247
  %v293 = vpack.c.b16 %v258, %v253
  %v294 = vpack.c.b16 %v259, %v254
  %v295 = vpack.c.b16 %v260, %v255
  %v296 = vpack.c.b16 %v261, %v256
  %v297 = vpack.c.b16 %v262, %v257
  %v298 = vpack.c.b16 %v263, %v263
  %v299 = vpack.c.b16 %v264, %v264
  %v300 = vpack.c.b16 %v265, %v265
  %v301 = vpack.c.b16 %v266, %v266
  %v302 = vpack.c.b16 %v267, %v267
  %v418 = vunpack.c.l.b16 %v84
  %v419 = vunpack.c.l.b16 %v85
  %v420 = vunpack.c.l.b16 %v86
  %v421 = vunpack.c.l.b16 %v87
  %v422 = vunpack.c.l.b16 %v88
  %v423 = vunpack.c.l.b16 %v89
  %v424 = vunpack.c.l.b16 %v90
  %v425 = vunpack.c.l.b16 %v91
  %v426 = vunpack.c.l.b16 %v92
  %v427 = vunpack.c.l.b16 %v93
  %v428 = vunpack.c.l.b16 %v94
  %v429 = vunpack.c.l.b16 %v95
  %v430 = vunpack.c.l.b16 %v96
  %v431 = vunpack.c.l.b16 %v97
  %v432 = vunpack.c.l.b16 %v98
  %v433 = vunpack.c.l.b16 %v99
  %v434 = vunpack.c.l.b16 %v100
  %v435 = vunpack.c.l.b16 %v101
  %v436 = vunpack.c.l.b16 %v102
  %v437 = vunpack.c.l.b16 %v103
  %v438 = vunpack.c.l.b16 %v104
  %v439 = vunpack.c.l.b16 %v105
  %v440 = vunpack.c.l.b16 %v106
  %v441 = vunpack.c.l.b16 %v107
  %v442 = vunpack.c.l.b16 %v108
  %v443 = vunpack.c.l.b16 %v109
  %v444 = vunpack.c.l.b16 %v110
  %v445 = vunpack.c.l.b16 %v111
  %v446 = vunpack.c.l.b16 %v112
  %v447 = vunpack.c.l.b16 %v113
  %v448 = vunpack.c.l.b16 %v114
  %v449 = vunpack.c.l.b16 %v115
  %v450 = vunpack.c.l.b16 %v116
  %v451 = vunpack.c.l.b16 %v117
  %v452 = vunpack.c.l.b16 %v118
  %v453 = vunpack.c.l.b16 %v119
  %v454 = vunpack.c.l.b16 %v120
  %v455 = vunpack.c.l.b16 %v121
  %v456 = vunpack.c.l.b16 %v122
  %v457 = vunpack.c.l.b16 %v123
  %v458 = vunpack.c.l.b16 %v124
  %v459 = vunpack.c.l.b16 %v125
  %v460 = vunpack.c.l.b16 %v126
  %v461 = vunpack.c.l.b16 %v127
  %v462 = vunpack.c.l.b16 %v128
  %v463 = vunpack.c.l.b16 %v129
  %v464 = vunpack.c.l.b16 %v130
  %v465 = vunpack.c.l.b16 %v131
  %v466 = vunpack.c.l.b16 %v132
  %v467 = vunpack.c.l.b16 %v133
  %v468 = vunpack.c.l.b16 %v134
  %v469 = vunpack.c.l.b16 %v135
  %v470 = vunpack.c.l.b16 %v136
  %v471 = vunpack.c.l.b16 %v137
  %v472 = vunpack.c.l.b16 %v138
  %v473 = vunpack.c.l.b16 %v139
  %v474 = vunpack.c.l.b16 %v140
  %v475 = vunpack.c.l.b16 %v141
  %v476 = vunpack.c.l.b16 %v142
  %v477 = vunpack.c.l.b16 %v143
  %v478 = vunpack.c.l.b16 %v144
  %v479 = vunpack.c.l.b16 %v145
  %v480 = vunpack.c.l.b16 %v146
  %v481 = vunpack.c.l.b16 %v147
  %v482 = vunpack.c.l.b16 %v148
  %v483 = vunpack.c.l.b16 %v149
  %v484 = vunpack.c.l.b16 %v150
  %v485 = vunpack.c.l.b16 %v151
  %v486 = vunpack.c.l.b16 %v152
  %v487 = vunpack.c.l.b16 %v153
  %v488 = vunpack.c.l.b16 %v154
  %v489 = vunpack.c.l.b16 %v155
  %v490 = vunpack.c.l.b16 %v156
  %v491 = vunpack.c.l.b16 %v157
  %v492 = vunpack.c.l.b16 %v158
  %v493 = vunpack.c.l.b16 %v159
  %v494 = vunpack.c.l.b16 %v160
  %v495 = vunpack.c.l.b16 %v161
  %v496 = vunpack.c.l.b16 %v162
  %v497 = vunpack.c.l.b16 %v163
  %v498 = vpack.c.b16 %v419, %v418
  %v499 = vpack.c.b16 %v421, %v420
  %v500 = vpack.c.b16 %v423, %v422
  %v501 = vpack.c.b16 %v425, %v424
  %v502 = vpack.c.b16 %v427, %v426
  %v503 = vpack.c.b16 %v429, %v428
  %v504 = vpack.c.b16 %v431, %v430
  %v505 = vpack.c.b16 %v433, %v432
  %v506 = vpack.c.b16 %v435, %v434
  %v507 = vpack.c.b16 %v437, %v436
  %v508 = vpack.c.b16 %v439, %v438
  %v509 = vpack.c.b16 %v441, %v440
  %v510 = vpack.c.b16 %v443, %v442
  %v511 = vpack.c.b16 %v445, %v444
  %v512 = vpack.c.b16 %v447, %v446
  %v513 = vpack.c.b16 %v449, %v448
  %v514 = vpack.c.b16 %v451, %v450
  %v515 = vpack.c.b16 %v453, %v452
  %v516 = vpack.c.b16 %v455, %v454
  %v517 = vpack.c.b16 %v457, %v456
  %v518 = vpack.c.b16 %v459, %v458
  %v519 = vpack.c.b16 %v461, %v460
  %v520 = vpack.c.b16 %v463, %v462
  %v521 = vpack.c.b16 %v465, %v464
  %v522 = vpack.c.b16 %v467, %v466
  %v523 = vpack.c.b16 %v469, %v468
  %v524 = vpack.c.b16 %v471, %v470
  %v525 = vpack.c.b16 %v473, %v472
  %v526 = vpack.c.b16 %v475, %v474
  %v527 = vpack.c.b16 %v477, %v476
  %v528 = vpack.c.b16 %v479, %v478
  %v529 = vpack.c.b16 %v481, %v480
  %v530 = vpack.c.b16 %v483, %v482
  %v531 = vpack.c.b16 %v485, %v484
  %v532 = vpack.c.b16 %v487, %v486
  %v533 = vpack.c.b16 %v489, %v488
  %v534 = vpack.c.b16 %v491, %v490
  %v535 = vpack.c.b16 %v493, %v492
  %v536 = vpack.c.b16 %v495, %v494
  %v537 = vpack.c.b16 %v497, %v496
  %578 = vmatprep.subr.bf16.mxu0 0
  %579 = vmatpush1.bf16.msra.mxu0 %v498
  %580 = vmatprep.subr.bf16.mxu0 0
  %581 = vmatpush1.bf16.msra.mxu0 %v499
  %582 = vmatprep.subr.bf16.mxu0 0
  %583 = vmatpush1.bf16.msra.mxu0 %v500
  %584 = vmatprep.subr.bf16.mxu0 0
  %585 = vmatpush1.bf16.msra.mxu0 %v501
  %586 = vmatprep.subr.bf16.mxu0 0
  %587 = vmatpush1.bf16.msra.mxu0 %v502
  %588 = vmatprep.subr.bf16.mxu0 0
  %589 = vmatpush1.bf16.msra.mxu0 %v503
  %590 = vmatprep.subr.bf16.mxu0 0
  %591 = vmatpush1.bf16.msra.mxu0 %v504
  %592 = vmatprep.subr.bf16.mxu0 0
  %593 = vmatpush1.bf16.msra.mxu0 %v505
  %594 = vmatprep.subr.bf16.mxu0 0
  %595 = vmatpush1.bf16.msra.mxu0 %v506
  %596 = vmatprep.subr.bf16.mxu0 0
  %597 = vmatpush1.bf16.msra.mxu0 %v507
  %598 = vmatprep.subr.bf16.mxu0 0
  %599 = vmatpush1.bf16.msra.mxu0 %v508
  %600 = vmatprep.subr.bf16.mxu0 0
  %601 = vmatpush1.bf16.msra.mxu0 %v509
  %602 = vmatprep.subr.bf16.mxu0 0
  %603 = vmatpush1.bf16.msra.mxu0 %v510
  %604 = vmatprep.subr.bf16.mxu0 0
  %605 = vmatpush1.bf16.msra.mxu0 %v511
  %606 = vmatprep.subr.bf16.mxu0 0
  %607 = vmatpush1.bf16.msra.mxu0 %v512
  %608 = vmatprep.subr.bf16.mxu0 0
  %609 = vmatpush1.bf16.msra.mxu0 %v513
  %610 = vmatprep.mubr.bf16.mxu0 %v269
  %611 = vmatmul.mubr.bf16.gmra.mrb[0].mxu0 %v268
  %v612 = vpop.f32.mrb[0].mxu0
  %v613 = vadd.f32 0.0, %v612
  %v614 = vpop.f32.mrb[0].mxu0
  %v615 = vpop.f32.mrb[0].mxu0
  %v616 = vadd.f32 0.0, %v615
  %v617 = vpop.f32.mrb[0].mxu0
  %618 = vmatprep.mubr.bf16.mxu0 %v274
  %619 = vmatmul.mubr.bf16.gmra.mrb[0].mxu0 %v273
  %v620 = vpop.f32.mrb[0].mxu0
  %v621 = vadd.f32 0.0, %v620
  %v622 = vpop.f32.mrb[0].mxu0
  %v623 = vpop.f32.mrb[0].mxu0
  %v624 = vadd.f32 0.0, %v623
  %v625 = vpop.f32.mrb[0].mxu0
  %626 = vmatprep.mubr.bf16.mxu0 %v279
  %627 = vmatmul.mubr.bf16.gmra.mrb[0].mxu0 %v278
  %v628 = vpop.f32.mrb[0].mxu0
  %v629 = vadd.f32 0.0, %v628
  %v630 = vpop.f32.mrb[0].mxu0
  %v631 = vpop.f32.mrb[0].mxu0
  %v632 = vadd.f32 0.0, %v631
  %v633 = vpop.f32.mrb[0].mxu0
  %634 = vmatprep.mubr.bf16.mxu0 %v284
  %635 = vmatmul.mubr.bf16.gmra.mrb[0].mxu0 %v283
  %v636 = vpop.f32.mrb[0].mxu0
  %v637 = vadd.f32 0.0, %v636
  %v638 = vpop.f32.mrb[0].mxu0
  %v639 = vpop.f32.mrb[0].mxu0
  %v640 = vadd.f32 0.0, %v639
  %v641 = vpop.f32.mrb[0].mxu0
  %642 = vmatprep.mubr.bf16.mxu0 %v289
  %643 = vmatmul.mubr.bf16.gmra.mrb[0].mxu0 %v288
  %v644 = vpop.f32.mrb[0].mxu0
  %v645 = vadd.f32 0.0, %v644
  %v646 = vpop.f32.mrb[0].mxu0
  %v647 = vpop.f32.mrb[0].mxu0
  %v648 = vadd.f32 0.0, %v647
  %v649 = vpop.f32.mrb[0].mxu0
  %650 = vmatprep.mubr.bf16.mxu0 %v294
  %651 = vmatmul.mubr.bf16.gmra.mrb[0].mxu0 %v293
  %v652 = vpop.f32.mrb[0].mxu0
  %v653 = vadd.f32 0.0, %v652
  %v654 = vpop.f32.mrb[0].mxu0
  %v655 = vpop.f32.mrb[0].mxu0
  %v656 = vadd.f32 0.0, %v655
  %v657 = vpop.f32.mrb[0].mxu0
  %658 = vmatprep.mubr.bf16.mxu0 %v299
  %659 = vmatmul.mubr.bf16.gmra.mrb[0].mxu0 %v298
  %v660 = vpop.f32.mrb[0].mxu0
  %v661 = vadd.f32 0.0, %v660
  %v662 = vpop.f32.mrb[0].mxu0
  %v663 = vpop.f32.mrb[0].mxu0
  %v664 = vpop.f32.mrb[0].mxu0
  %665 = vdwg.mxu0
  %666 = vmatprep.subr.bf16.mxu0 0
  %667 = vmatpush1.bf16.msra.mxu0 %v514
  %668 = vmatprep.subr.bf16.mxu0 0
  %669 = vmatpush1.bf16.msra.mxu0 %v515
  %670 = vmatprep.subr.bf16.mxu0 0
  %671 = vmatpush1.bf16.msra.mxu0 %v516
  %672 = vmatprep.subr.bf16.mxu0 0
  %673 = vmatpush1.bf16.msra.mxu0 %v517
  %674 = vmatprep.subr.bf16.mxu0 0
  %675 = vmatpush1.bf16.msra.mxu0 %v518
  %676 = vmatprep.subr.bf16.mxu0 0
  %677 = vmatpush1.bf16.msra.mxu0 %v519
  %678 = vmatprep.subr.bf16.mxu0 0
  %679 = vmatpush1.bf16.msra.mxu0 %v520
  %680 = vmatprep.subr.bf16.mxu0 0
  %681 = vmatpush1.bf16.msra.mxu0 %v521
  %682 = vmatprep.subr.bf16.mxu0 0
  %683 = vmatpush1.bf16.msra.mxu0 %v522
  %684 = vmatprep.subr.bf16.mxu0 0
  %685 = vmatpush1.bf16.msra.mxu0 %v523
  %686 = vmatprep.subr.bf16.mxu0 0
  %687 = vmatpush1.bf16.msra.mxu0 %v524
  %688 = vmatprep.subr.bf16.mxu0 0
  %689 = vmatpush1.bf16.msra.mxu0 %v525
  %690 = vmatprep.subr.bf16.mxu0 0
  %691 = vmatpush1.bf16.msra.mxu0 %v526
  %692 = vmatprep.subr.bf16.mxu0 0
  %693 = vmatpush1.bf16.msra.mxu0 %v527
  %694 = vmatprep.subr.bf16.mxu0 0
  %695 = vmatpush1.bf16.msra.mxu0 %v528
  %696 = vmatprep.subr.bf16.mxu0 0
  %697 = vmatpush1.bf16.msra.mxu0 %v529
  %698 = vmatprep.mubr.bf16.mxu0 %v271
  %699 = vmatmul.mubr.bf16.gmra.mrb[0].mxu0 %v270
  %v700 = vpop.f32.mrb[0].mxu0
  %v701 = vadd.f32 %v613, %v700
  %v702 = vpop.f32.mrb[0].mxu0
  %v703 = vpop.f32.mrb[0].mxu0
  %v704 = vadd.f32 %v616, %v703
  %v705 = vpop.f32.mrb[0].mxu0
  %706 = vmatprep.mubr.bf16.mxu0 %v276
  %707 = vmatmul.mubr.bf16.gmra.mrb[0].mxu0 %v275
  %v708 = vpop.f32.mrb[0].mxu0
  %v709 = vadd.f32 %v621, %v708
  %v710 = vpop.f32.mrb[0].mxu0
  %v711 = vpop.f32.mrb[0].mxu0
  %v712 = vadd.f32 %v624, %v711
  %v713 = vpop.f32.mrb[0].mxu0
  %714 = vmatprep.mubr.bf16.mxu0 %v281
  %715 = vmatmul.mubr.bf16.gmra.mrb[0].mxu0 %v280
  %v716 = vpop.f32.mrb[0].mxu0
  %v717 = vadd.f32 %v629, %v716
  %v718 = vpop.f32.mrb[0].mxu0
  %v719 = vpop.f32.mrb[0].mxu0
  %v720 = vadd.f32 %v632, %v719
  %v721 = vpop.f32.mrb[0].mxu0
  %722 = vmatprep.mubr.bf16.mxu0 %v286
  %723 = vmatmul.mubr.bf16.gmra.mrb[0].mxu0 %v285
  %v724 = vpop.f32.mrb[0].mxu0
  %v725 = vadd.f32 %v637, %v724
  %v726 = vpop.f32.mrb[0].mxu0
  %v727 = vpop.f32.mrb[0].mxu0
  %v728 = vadd.f32 %v640, %v727
  %v729 = vpop.f32.mrb[0].mxu0
  %730 = vmatprep.mubr.bf16.mxu0 %v291
  %731 = vmatmul.mubr.bf16.gmra.mrb[0].mxu0 %v290
  %v732 = vpop.f32.mrb[0].mxu0
  %v733 = vadd.f32 %v645, %v732
  %v734 = vpop.f32.mrb[0].mxu0
  %v735 = vpop.f32.mrb[0].mxu0
  %v736 = vadd.f32 %v648, %v735
  %v737 = vpop.f32.mrb[0].mxu0
  %738 = vmatprep.mubr.bf16.mxu0 %v296
  %739 = vmatmul.mubr.bf16.gmra.mrb[0].mxu0 %v295
  %v740 = vpop.f32.mrb[0].mxu0
  %v741 = vadd.f32 %v653, %v740
  %v742 = vpop.f32.mrb[0].mxu0
  %v743 = vpop.f32.mrb[0].mxu0
  %v744 = vadd.f32 %v656, %v743
  %v745 = vpop.f32.mrb[0].mxu0
  %746 = vmatprep.mubr.bf16.mxu0 %v301
  %747 = vmatmul.mubr.bf16.gmra.mrb[0].mxu0 %v300
  %v748 = vpop.f32.mrb[0].mxu0
  %v749 = vadd.f32 %v661, %v748
  %v750 = vpop.f32.mrb[0].mxu0
  %v751 = vpop.f32.mrb[0].mxu0
  %v752 = vpop.f32.mrb[0].mxu0
  %753 = vdwg.mxu0
  %754 = vmatprep.subr.bf16.mxu0 0
  %755 = vmatpush1.bf16.msra.mxu0 %v530
  %756 = vmatprep.subr.bf16.mxu0 0
  %757 = vmatpush1.bf16.msra.mxu0 %v531
  %758 = vmatprep.subr.bf16.mxu0 0
  %759 = vmatpush1.bf16.msra.mxu0 %v532
  %760 = vmatprep.subr.bf16.mxu0 0
  %761 = vmatpush1.bf16.msra.mxu0 %v533
  %762 = vmatprep.subr.bf16.mxu0 0
  %763 = vmatpush1.bf16.msra.mxu0 %v534
  %764 = vmatprep.subr.bf16.mxu0 0
  %765 = vmatpush1.bf16.msra.mxu0 %v535
  %766 = vmatprep.subr.bf16.mxu0 0
  %767 = vmatpush1.bf16.msra.mxu0 %v536
  %768 = vmatprep.subr.bf16.mxu0 0
  %769 = vmatpush1.bf16.msra.mxu0 %v537
  %770 = vmatprep.subr.bf16.mxu0 0
  %771 = vmatpush1.bf16.msra.mxu0 0
  %772 = vmatprep.subr.bf16.mxu0 0
  %773 = vmatpush1.bf16.msra.mxu0 0
  %774 = vmatprep.subr.bf16.mxu0 0
  %775 = vmatpush1.bf16.msra.mxu0 0
  %776 = vmatprep.subr.bf16.mxu0 0
  %777 = vmatpush1.bf16.msra.mxu0 0
  %778 = vmatprep.subr.bf16.mxu0 0
  %779 = vmatpush1.bf16.msra.mxu0 0
  %780 = vmatprep.subr.bf16.mxu0 0
  %781 = vmatpush1.bf16.msra.mxu0 0
  %782 = vmatprep.subr.bf16.mxu0 0
  %783 = vmatpush1.bf16.msra.mxu0 0
  %784 = vmatprep.subr.bf16.mxu0 0
  %785 = vmatpush1.bf16.msra.mxu0 0
  %786 = vmatprep.mubr.bf16.mxu0 0
  %787 = vmatmul.mubr.bf16.gmra.mrb[0].mxu0 %v272
  %v788 = vpop.f32.mrb[0].mxu0
  %v789 = vadd.f32 %v701, %v788
  %v790 = vpop.f32.mrb[0].mxu0
  %v791 = vpop.f32.mrb[0].mxu0
  %v792 = vadd.f32 %v704, %v791
  %v793 = vpop.f32.mrb[0].mxu0
  %794 = vmatprep.mubr.bf16.mxu0 0
  %795 = vmatmul.mubr.bf16.gmra.mrb[0].mxu0 %v277
  %v796 = vpop.f32.mrb[0].mxu0
  %v797 = vadd.f32 %v709, %v796
  %v798 = vpop.f32.mrb[0].mxu0
  %v799 = vpop.f32.mrb[0].mxu0
  %v800 = vadd.f32 %v712, %v799
  %v801 = vpop.f32.mrb[0].mxu0
  %802 = vmatprep.mubr.bf16.mxu0 0
  %803 = vmatmul.mubr.bf16.gmra.mrb[0].mxu0 %v282
  %v804 = vpop.f32.mrb[0].mxu0
  %v805 = vadd.f32 %v717, %v804
  %v806 = vpop.f32.mrb[0].mxu0
  %v807 = vpop.f32.mrb[0].mxu0
  %v808 = vadd.f32 %v720, %v807
  %v809 = vpop.f32.mrb[0].mxu0
  %810 = vmatprep.mubr.bf16.mxu0 0
  %811 = vmatmul.mubr.bf16.gmra.mrb[0].mxu0 %v287
  %v812 = vpop.f32.mrb[0].mxu0
  %v813 = vadd.f32 %v725, %v812
  %v814 = vpop.f32.mrb[0].mxu0
  %v815 = vpop.f32.mrb[0].mxu0
  %v816 = vadd.f32 %v728, %v815
  %v817 = vpop.f32.mrb[0].mxu0
  %818 = vmatprep.mubr.bf16.mxu0 0
  %819 = vmatmul.mubr.bf16.gmra.mrb[0].mxu0 %v292
  %v820 = vpop.f32.mrb[0].mxu0
  %v821 = vadd.f32 %v733, %v820
  %v822 = vpop.f32.mrb[0].mxu0
  %v823 = vpop.f32.mrb[0].mxu0
  %v824 = vadd.f32 %v736, %v823
  %v825 = vpop.f32.mrb[0].mxu0
  %826 = vmatprep.mubr.bf16.mxu0 0
  %827 = vmatmul.mubr.bf16.gmra.mrb[0].mxu0 %v297
  %v828 = vpop.f32.mrb[0].mxu0
  %v829 = vadd.f32 %v741, %v828
  %v830 = vpop.f32.mrb[0].mxu0
  %v831 = vpop.f32.mrb[0].mxu0
  %v832 = vadd.f32 %v744, %v831
  %v833 = vpop.f32.mrb[0].mxu0
  %834 = vmatprep.mubr.bf16.mxu0 0
  %835 = vmatmul.mubr.bf16.gmra.mrb[0].mxu0 %v302
  %v836 = vpop.f32.mrb[0].mxu0
  %v837 = vadd.f32 %v749, %v836
  %v838 = vpop.f32.mrb[0].mxu0
  %v839 = vpop.f32.mrb[0].mxu0
  %v840 = vpop.f32.mrb[0].mxu0
  %841 = vdwg.mxu0
  %v842 = vadd.f32 %v32, %v789
  %v843 = vadd.f32 %v33, %v792
  %v844 = vadd.f32 %v34, %v797
  %v845 = vadd.f32 %v35, %v800
  %v846 = vadd.f32 %v36, %v805
  %v847 = vadd.f32 %v37, %v808
  %v848 = vadd.f32 %v38, %v813
  %v849 = vadd.f32 %v39, %v816
  %v850 = vadd.f32 %v40, %v821
  %v851 = vadd.f32 %v41, %v824
  %v852 = vadd.f32 %v42, %v829
  %v853 = vadd.f32 %v43, %v832
  %v854 = vadd.f32 %v44, %v837
  %855 = vst [vmem:[#allocation2] sm:$0xff] %v842
  %856 = vst [vmem:[#allocation2 + $0x8] sm:$0xff] %v843
  %857 = vst [vmem:[#allocation2 + $0x10] sm:$0xff] %v844
  %858 = vst [vmem:[#allocation2 + $0x18] sm:$0xff] %v845
  %859 = vst [vmem:[#allocation2 + $0x20] sm:$0xff] %v846
  %860 = vst [vmem:[#allocation2 + $0x28] sm:$0xff] %v847
  %861 = vst [vmem:[#allocation2 + $0x30] sm:$0xff] %v848
  %862 = vst [vmem:[#allocation2 + $0x38] sm:$0xff] %v849
  %863 = vst [vmem:[#allocation2 + $0x40] sm:$0xff] %v850
  %864 = vst [vmem:[#allocation2 + $0x48] sm:$0xff] %v851
  %865 = vst [vmem:[#allocation2 + $0x50] sm:$0xff] %v852
  %866 = vst [vmem:[#allocation2 + $0x58] sm:$0xff] %v853
  %867 = vst [vmem:[#allocation2 + $0x60] sm:$0xff] %v854
  // Predicated region
  $region18: #{bayesian_atari_qr_forward.8} parent=0 // pred_check
    %p868 = pneg %p15
  $region19: #{bayesian_atari_qr_forward.8} parent=0 // pred_check_branch
    %870 = sbr.rel (%p868) target = $region21
  $region20: #{bayesian_atari_qr_forward.8} parent=0 // pred_region
    %v871 = vld [vmem:[#allocation2] sm:$0xff]
    %v872 = vld [vmem:[#allocation2 + $0x8] sm:$0xff]
    %v873 = vld [vmem:[#allocation2 + $0x10] sm:$0xff]
    %v874 = vld [vmem:[#allocation2 + $0x18] sm:$0xff]
    %v875 = vld [vmem:[#allocation2 + $0x20] sm:$0xff]
    %v876 = vld [vmem:[#allocation2 + $0x28] sm:$0xff]
    %v877 = vld [vmem:[#allocation2 + $0x30] sm:$0xff]
    %v878 = vld [vmem:[#allocation2 + $0x38] sm:$0xff]
    %v879 = vld [vmem:[#allocation2 + $0x40] sm:$0xff]
    %v880 = vld [vmem:[#allocation2 + $0x48] sm:$0xff]
    %v881 = vld [vmem:[#allocation2 + $0x50] sm:$0xff]
    %v882 = vld [vmem:[#allocation2 + $0x58] sm:$0xff]
    %v883 = vld [vmem:[#allocation2 + $0x60] sm:$0xff]
    %v884 = vld [vmem:[%s2] sm:$0x1]
    %v886 = vlaneseq
    %v887 = vshrl.u32 %v886, 7
    %v888 = vsub.s32 0, %v887
    %v889 = vrot.slane %v884, %v888
    %v891 = vadd.f32 %v871, %v889
    %v892 = vadd.f32 %v872, %v889
    %v893 = vadd.f32 %v873, %v889
    %v894 = vadd.f32 %v874, %v889
    %v895 = vadd.f32 %v875, %v889
    %v896 = vadd.f32 %v876, %v889
    %v897 = vadd.f32 %v877, %v889
    %v898 = vadd.f32 %v878, %v889
    %v899 = vadd.f32 %v879, %v889
    %v900 = vadd.f32 %v880, %v889
    %v901 = vadd.f32 %v881, %v889
    %v902 = vadd.f32 %v882, %v889
    %v903 = vadd.f32 %v883, %v889
    %v904 = vmax.f32 %v891, 0.0
    %v905 = vmax.f32 %v892, 0.0
    %v906 = vmax.f32 %v893, 0.0
    %v907 = vmax.f32 %v894, 0.0
    %v908 = vmax.f32 %v895, 0.0
    %v909 = vmax.f32 %v896, 0.0
    %v910 = vmax.f32 %v897, 0.0
    %v911 = vmax.f32 %v898, 0.0
    %v912 = vmax.f32 %v899, 0.0
    %v913 = vmax.f32 %v900, 0.0
    %v914 = vmax.f32 %v901, 0.0
    %v915 = vmax.f32 %v902, 0.0
    %v916 = vmax.f32 %v903, 0.0
    %v917 = vpack.c.bf16 %v905, %v904
    %v918 = vpack.c.bf16 %v907, %v906
    %v919 = vpack.c.bf16 %v909, %v908
    %v920 = vpack.c.bf16 %v911, %v910
    %v921 = vpack.c.bf16 %v913, %v912
    %v922 = vpack.c.bf16 %v915, %v914
    %v923 = vpack.c.bf16 %v916, %v916
    %v931 = vunpack.c.l.b16 %v917
    %v932 = vunpack.c.h.b16 %v917
    %v933 = vunpack.c.l.b16 %v918
    %v934 = vunpack.c.h.b16 %v918
    %v935 = vunpack.c.l.b16 %v919
    %v936 = vunpack.c.h.b16 %v919
    %v937 = vunpack.c.l.b16 %v920
    %v938 = vunpack.c.h.b16 %v920
    %v939 = vunpack.c.l.b16 %v921
    %v940 = vunpack.c.h.b16 %v921
    %v941 = vunpack.c.l.b16 %v922
    %v942 = vunpack.c.h.b16 %v922
    %v943 = vunpack.c.l.b16 %v923
    %v944 = vpack.c.b16 %v931, %v931
    %v945 = vpack.c.b16 %v932, %v932
    %v946 = vpack.c.b16 %v933, %v933
    %v947 = vpack.c.b16 %v934, %v934
    %v948 = vpack.c.b16 %v935, %v935
    %v949 = vpack.c.b16 %v936, %v936
    %v950 = vpack.c.b16 %v937, %v937
    %v951 = vpack.c.b16 %v938, %v938
    %v952 = vpack.c.b16 %v939, %v939
    %v953 = vpack.c.b16 %v940, %v940
    %v954 = vpack.c.b16 %v941, %v941
    %v955 = vpack.c.b16 %v942, %v942
    %v956 = vpack.c.b16 %v943, %v943
    %970 = vst [vmem:[%s3] sm:$0xf] %v944
    %971 = vst [vmem:[%s3 + $0x4] sm:$0xf] %v945
    %972 = vst [vmem:[%s3 + $0x8] sm:$0xf] %v946
    %973 = vst [vmem:[%s3 + $0xc] sm:$0xf] %v947
    %974 = vst [vmem:[%s3 + $0x10] sm:$0xf] %v948
    %975 = vst [vmem:[%s3 + $0x14] sm:$0xf] %v949
    %976 = vst [vmem:[%s3 + $0x18] sm:$0xf] %v950
    %977 = vst [vmem:[%s3 + $0x1c] sm:$0xf] %v951
    %978 = vst [vmem:[%s3 + $0x20] sm:$0xf] %v952
    %979 = vst [vmem:[%s3 + $0x24] sm:$0xf] %v953
    %980 = vst [vmem:[%s3 + $0x28] sm:$0xf] %v954
    %981 = vst [vmem:[%s3 + $0x2c] sm:$0xf] %v955
    %982 = vst [vmem:[%s3 + $0x30] sm:$0xf] %v956
  $region21: #{bayesian_atari_qr_forward.8} parent=0 // pred_fallthru
    _
  // Predicated region
  $region22: #{bayesian_atari_qr_forward.8} parent=0 // pred_check
    _
  $region23: #{bayesian_atari_qr_forward.8} parent=0 // pred_check_branch
    %984 = sbr.rel (0) target = $region25
  $region24: #{bayesian_atari_qr_forward.8} parent=0 // pred_region
    _
  $region25: #{bayesian_atari_qr_forward.8} parent=0 // pred_fallthru
    _
  // Predicated region
  $region26: #{bayesian_atari_qr_forward.8} parent=0 // pred_check
    _
  $region27: #{bayesian_atari_qr_forward.8} parent=0 // pred_check_branch
    %986 = sbr.rel (0) target = $region29
  $region28: #{bayesian_atari_qr_forward.8} parent=0 // pred_region
    _
  $region29: #{bayesian_atari_qr_forward.8} parent=0 // pred_fallthru
    _

// kernel: bayesian_atari_qr_forward.9
$region0: #{bayesian_atari_qr_forward.9}
  #allocation0 [shape = 'u32[]', space=smem, size = 0x4, offset = 0x4, fixed_abs, tag = 'smem constant byte address 0x4 - core index']
  #allocation1 [shape = 'u32[144,128]{1,0:T(1,128)}', space=vmem, size = 0x12000, scoped, tag = 'internal scratch']
  #allocation2 [shape = 'f32[8,512]{1,0:T(8,128)}', space=vmem, size = 0x4000, scoped, tag = 'scratch operand']
  %s0 = inlined_call_operand.vmem [shape: bf16[8,3584], index: 0, kind: input, shape index: {}]
  %s1 = inlined_call_operand.vmem [shape: bf16[3584,512], index: 1, kind: input, shape index: {}]
  %s2 = inlined_call_operand.vmem [shape: f32[1,512], index: 2, kind: input, shape index: {}]
  %s3 = inlined_call_operand.vmem [shape: bf16[512,128], index: 3, kind: input, shape index: {}]
  %s4 = inlined_call_operand.vmem [shape: f32[1,128], index: 4, kind: input, shape index: {}]
  %s5 = inlined_call_operand.vmem [shape: f32[8,128], index: 5, kind: output, shape index: {}]
  %s6 = sld [smem:[#allocation0]]
  $region61: #{bayesian_atari_qr_forward.9} parent=0
    _
  %s8 = ssub.s32 1, %s6
  %s9 = scalar_select 0, %s8, %s6
  loop: start=0, step=1, limit=9
  $region2: #{bayesian_atari_qr_forward.9} parent=0 // loop_pre_header
    _
  $region3: #{bayesian_atari_qr_forward.9} parent=0 // loop_header
    %s11 = sphi 0, %s15
    %p12 = scmp.ge.s32.totalorder %s11, 9
    %s21 = sphi 0, %s23
    %s24 = sphi 0, %s21
    %s25 = sphi 0, %s24
    %s41 = sphi 0, %s25
    %s47 = sphi 0, %s49
    %s50 = sphi 0, %s47
    %s51 = sphi 0, %s50
    %s67 = sphi 0, %s51
    %s71 = sphi 0, %s71
    %s73 = sphi 0, %s71
    %s74 = sphi 0, %s73
    %s88 = sphi 0, %s74
    %s92 = sphi 0, %s92
    %s94 = sphi 0, %s92
    %s95 = sphi 0, %s94
    %s109 = sphi 0, %s95
    %s113 = sphi 0, %s113
    %s115 = sphi 0, %s113
    %s116 = sphi 0, %s115
    %s130 = sphi 0, %s116
    %s134 = sphi 0, %s134
    %s136 = sphi 0, %s134
    %s137 = sphi 0, %s136
    %s151 = sphi 0, %s137
  $region4: #{bayesian_atari_qr_forward.9} parent=0 // loop_header_branch
    %14 = sbr.rel (%p12) target = $region8
  $region5: #{bayesian_atari_qr_forward.9} parent=0 // loop_body
    %s16 = ssub.s32 %s11, 1
    %s17 = ssub.s32 %s11, 2
    %s18 = sadd.s32 %s11, 1
    %s19 = ssub.s32 %s11, %s18
    %p20 = scmp.eq.s32.totalorder %s19, 0
    %s22 = sadd.s32 %s21, 1
    %s23 = scalar_select %p20, %s21, %s22
    %p26 = pneg %p20
    %p27 = scmp.eq.s32.totalorder %s11, 6
    %p28 = por %p26, %p27
    %p29 = scmp.ne.s32.totalorder %s21, %s24
    %p30 = scmp.eq.s32.totalorder %s11, 0
    %p31 = por %p29, %p30
    %p32 = scmp.ne.s32.totalorder %s21, %s24
    %p33 = scmp.eq.s32.totalorder %s16, 6
    %p34 = por %p32, %p33
    %p35 = scmp.ne.s32.totalorder %s24, %s25
    %p36 = scmp.eq.s32.totalorder %s16, 0
    %p37 = por %p35, %p36
    %p38 = scmp.ne.s32.totalorder %s24, %s25
    %p39 = scmp.eq.s32.totalorder %s17, 6
    %p40 = por %p38, %p39
    %p42 = scmp.ne.s32.totalorder %s25, %s41
    %p43 = scmp.eq.s32.totalorder %s17, 0
    %p44 = por %p42, %p43
    %s45 = ssub.s32 %s11, %s18
    %p46 = scmp.eq.s32.totalorder %s45, 0
    %s48 = sadd.s32 %s47, 1
    %s49 = scalar_select %p46, %s47, %s48
    %p52 = pneg %p46
    %p53 = scmp.eq.s32.totalorder %s11, 6
    %p54 = por %p52, %p53
    %p55 = scmp.ne.s32.totalorder %s47, %s50
    %p56 = scmp.eq.s32.totalorder %s11, 0
    %p57 = por %p55, %p56
    %p58 = scmp.ne.s32.totalorder %s47, %s50
    %p59 = scmp.eq.s32.totalorder %s16, 6
    %p60 = por %p58, %p59
    %p61 = scmp.ne.s32.totalorder %s50, %s51
    %p62 = scmp.eq.s32.totalorder %s16, 0
    %p63 = por %p61, %p62
    %p64 = scmp.ne.s32.totalorder %s50, %s51
    %p65 = scmp.eq.s32.totalorder %s17, 6
    %p66 = por %p64, %p65
    %p68 = scmp.ne.s32.totalorder %s51, %s67
    %p69 = scmp.eq.s32.totalorder %s17, 0
    %p70 = por %p68, %p69
    %s72 = sadd.s32 %s71, 1
    %p75 = scmp.eq.s32.totalorder %s11, 6
    %p76 = scmp.ne.s32.totalorder %s71, %s73
    %p77 = scmp.eq.s32.totalorder %s11, 0
    %p78 = por %p76, %p77
    %p79 = scmp.ne.s32.totalorder %s71, %s73
    %p80 = scmp.eq.s32.totalorder %s16, 6
    %p81 = por %p79, %p80
    %p82 = scmp.ne.s32.totalorder %s73, %s74
    %p83 = scmp.eq.s32.totalorder %s16, 0
    %p84 = por %p82, %p83
    %p85 = scmp.ne.s32.totalorder %s73, %s74
    %p86 = scmp.eq.s32.totalorder %s17, 6
    %p87 = por %p85, %p86
    %p89 = scmp.ne.s32.totalorder %s74, %s88
    %p90 = scmp.eq.s32.totalorder %s17, 0
    %p91 = por %p89, %p90
    %s93 = sadd.s32 %s92, 1
    %p96 = scmp.eq.s32.totalorder %s11, 6
    %p97 = scmp.ne.s32.totalorder %s92, %s94
    %p98 = scmp.eq.s32.totalorder %s11, 0
    %p99 = por %p97, %p98
    %p100 = scmp.ne.s32.totalorder %s92, %s94
    %p101 = scmp.eq.s32.totalorder %s16, 6
    %p102 = por %p100, %p101
    %p103 = scmp.ne.s32.totalorder %s94, %s95
    %p104 = scmp.eq.s32.totalorder %s16, 0
    %p105 = por %p103, %p104
    %p106 = scmp.ne.s32.totalorder %s94, %s95
    %p107 = scmp.eq.s32.totalorder %s17, 6
    %p108 = por %p106, %p107
    %p110 = scmp.ne.s32.totalorder %s95, %s109
    %p111 = scmp.eq.s32.totalorder %s17, 0
    %p112 = por %p110, %p111
    %s114 = sadd.s32 %s113, 1
    %p117 = scmp.eq.s32.totalorder %s11, 6
    %p118 = scmp.ne.s32.totalorder %s113, %s115
    %p119 = scmp.eq.s32.totalorder %s11, 0
    %p120 = por %p118, %p119
    %p121 = scmp.ne.s32.totalorder %s113, %s115
    %p122 = scmp.eq.s32.totalorder %s16, 6
    %p123 = por %p121, %p122
    %p124 = scmp.ne.s32.totalorder %s115, %s116
    %p125 = scmp.eq.s32.totalorder %s16, 0
    %p126 = por %p124, %p125
    %p127 = scmp.ne.s32.totalorder %s115, %s116
    %p128 = scmp.eq.s32.totalorder %s17, 6
    %p129 = por %p127, %p128
    %p131 = scmp.ne.s32.totalorder %s116, %s130
    %p132 = scmp.eq.s32.totalorder %s17, 0
    %p133 = por %p131, %p132
    %s135 = sadd.s32 %s134, 1
    %p138 = scmp.eq.s32.totalorder %s11, 6
    %p139 = scmp.ne.s32.totalorder %s134, %s136
    %p140 = scmp.eq.s32.totalorder %s11, 0
    %p141 = por %p139, %p140
    %p142 = scmp.ne.s32.totalorder %s134, %s136
    %p143 = scmp.eq.s32.totalorder %s16, 6
    %p144 = por %p142, %p143
    %p145 = scmp.ne.s32.totalorder %s136, %s137
    %p146 = scmp.eq.s32.totalorder %s16, 0
    %p147 = por %p145, %p146
    %p148 = scmp.ne.s32.totalorder %s136, %s137
    %p149 = scmp.eq.s32.totalorder %s17, 6
    %p150 = por %p148, %p149
    %p152 = scmp.ne.s32.totalorder %s137, %s151
    %p153 = scmp.eq.s32.totalorder %s17, 0
    %p154 = por %p152, %p153
    %p155 = scmp.le.s32.totalorder 1, %s11
    %p156 = scmp.lt.s32.totalorder %s11, 8
    %p157 = pnand %p155, %p156
    %p158 = pneg %p157
    // Predicated region
    $region9: #{bayesian_atari_qr_forward.9} parent=5 // pred_check
      _
    $region10: #{bayesian_atari_qr_forward.9} parent=5 // pred_check_branch
      %160 = sbr.rel (%p157) target = $region12
    $region11: #{bayesian_atari_qr_forward.9} parent=5 // pred_region
      %s161 = ssub.s32 %s11, 1
      // Predicated region
      $region13: #{bayesian_atari_qr_forward.9} parent=11 // pred_check
        %p162 = pneg %p84
      $region14: #{bayesian_atari_qr_forward.9} parent=11 // pred_check_branch
        %164 = sbr.rel (%p162) target = $region16
      $region15: #{bayesian_atari_qr_forward.9} parent=11 // pred_region
        _
      $region16: #{bayesian_atari_qr_forward.9} parent=11 // pred_fallthru
        _
      // Predicated region
      $region17: #{bayesian_atari_qr_forward.9} parent=11 // pred_check
        %p165 = pneg %p105
      $region18: #{bayesian_atari_qr_forward.9} parent=11 // pred_check_branch
        %167 = sbr.rel (%p165) target = $region20
      $region19: #{bayesian_atari_qr_forward.9} parent=11 // pred_region
        _
      $region20: #{bayesian_atari_qr_forward.9} parent=11 // pred_fallthru
        _
      // Predicated region
      $region21: #{bayesian_atari_qr_forward.9} parent=11 // pred_check
        %p168 = pneg %p126
      $region22: #{bayesian_atari_qr_forward.9} parent=11 // pred_check_branch
        %170 = sbr.rel (%p168) target = $region24
      $region23: #{bayesian_atari_qr_forward.9} parent=11 // pred_region
        _
      $region24: #{bayesian_atari_qr_forward.9} parent=11 // pred_fallthru
        _
    $region12: #{bayesian_atari_qr_forward.9} parent=5 // pred_fallthru
      _
    %p171 = scmp.lt.s32.totalorder %s11, 7
    // Predicated region
    $region25: #{bayesian_atari_qr_forward.9} parent=5 // pred_check
      %p172 = pneg %p171
    $region26: #{bayesian_atari_qr_forward.9} parent=5 // pred_check_branch
      %174 = sbr.rel (%p172) target = $region28
    $region27: #{bayesian_atari_qr_forward.9} parent=5 // pred_region
      // Predicated region
      $region29: #{bayesian_atari_qr_forward.9} parent=27 // pred_check
        %p175 = pneg %p31
      $region30: #{bayesian_atari_qr_forward.9} parent=27 // pred_check_branch
        %177 = sbr.rel (%p175) target = $region32
      $region31: #{bayesian_atari_qr_forward.9} parent=27 // pred_region
        %s178 = smul.u32 4, %s11
        %p179 = scmp.lt.s32.totalorder %s178, 27
        %s180 = scalar_select %p179, %s178, 27
        %s181 = smul.addr %s180, 4
        %s182 = scalar_lea.vmem %s0, %s181
        %s183 = smul.u32 4, %s11
      $region32: #{bayesian_atari_qr_forward.9} parent=27 // pred_fallthru
        _
      // Predicated region
      $region33: #{bayesian_atari_qr_forward.9} parent=27 // pred_check
        %p184 = pneg %p57
      $region34: #{bayesian_atari_qr_forward.9} parent=27 // pred_check_branch
        %186 = sbr.rel (%p184) target = $region36
      $region35: #{bayesian_atari_qr_forward.9} parent=27 // pred_region
        %s187 = smul.u32 64, %s11
        %p188 = scmp.lt.s32.totalorder %s187, 447
        %s189 = scalar_select %p188, %s187, 447
        %s190 = smul.addr %s189, 4
        %s191 = smul.addr %s190, 4
        %s192 = scalar_lea.vmem %s1, %s191
        %s193 = smul.u32 64, %s11
      $region36: #{bayesian_atari_qr_forward.9} parent=27 // pred_fallthru
        _
    $region28: #{bayesian_atari_qr_forward.9} parent=5 // pred_fallthru
      _
    %p194 = scmp.le.s32.totalorder 1, %s11
    %p195 = scmp.lt.s32.totalorder %s11, 8
    %p196 = pnand %p194, %p195
    %p197 = pneg %p196
    // Predicated region
    $region37: #{bayesian_atari_qr_forward.9} parent=5 // pred_check
      _
    $region38: #{bayesian_atari_qr_forward.9} parent=5 // pred_check_branch
      %199 = sbr.rel (%p196) target = $region40
    $region39: #{bayesian_atari_qr_forward.9} parent=5 // pred_region
      %s200 = ssub.s32 %s11, 1
      %s201 = smul.u32 4, %s16
      %p202 = scmp.lt.s32.totalorder %s201, 27
      %s203 = scalar_select %p202, %s201, 27
      %s204 = smul.addr %s203, 4
      %s205 = scalar_lea.vmem %s0, %s204
      %p206 = pneg %p37
      %p207 = pneg %p34
      %s208 = smul.u32 64, %s16
      %p209 = scmp.lt.s32.totalorder %s208, 447
      %s210 = scalar_select %p209, %s208, 447
      %s211 = smul.addr %s210, 4
      %s212 = smul.addr %s211, 4
      %s213 = scalar_lea.vmem %s1, %s212
      %p214 = pneg %p63
      %p215 = pneg %p60
      %p216 = pneg %p84
      %p217 = pneg %p81
      %p218 = pneg %p105
      %p219 = pneg %p102
      %p220 = pneg %p126
      %p221 = pneg %p123
      %p222 = pneg %p147
      %p223 = pneg %p144
      %s224 = smul.u32 4, %s16
      %p225 = scmp.lt.s32.totalorder %s224, 27
      %s226 = scalar_select %p225, %s224, 27
      %s227 = smul.addr %s226, 4
      %s228 = scalar_lea.vmem %s0, %s227
      %s229 = smul.u32 4, %s16
      %s230 = smul.u32 64, %s16
      %p231 = scmp.lt.s32.totalorder %s230, 447
      %s232 = scalar_select %p231, %s230, 447
      %s233 = smul.addr %s232, 4
      %s234 = smul.addr %s233, 4
      %s235 = scalar_lea.vmem %s1, %s234
      %s236 = smul.u32 64, %s16
      %p238 = scmp.eq.s32.totalorder %s16, 0
      // Predicated region
      $region41: #{bayesian_atari_qr_forward.9} parent=39 // pred_check
        %p239 = pneg %p238
      $region42: #{bayesian_atari_qr_forward.9} parent=39 // pred_check_branch
        %241 = sbr.rel (%p239) target = $region44
      $region43: #{bayesian_atari_qr_forward.9} parent=39 // pred_region
        %242 = vst [vmem:[#allocation2] sm:$0xff] 0.0
        %243 = vst [vmem:[#allocation2 + $0x8] sm:$0xff] 0.0
        %244 = vst [vmem:[#allocation2 + $0x10] sm:$0xff] 0.0
        %245 = vst [vmem:[#allocation2 + $0x18] sm:$0xff] 0.0
      $region44: #{bayesian_atari_qr_forward.9} parent=39 // pred_fallthru
        _
      %v246 = vld [vmem:[#allocation2] sm:$0xff]
      %v247 = vld [vmem:[#allocation2 + $0x8] sm:$0xff]
      %v248 = vld [vmem:[#allocation2 + $0x10] sm:$0xff]
      %v249 = vld [vmem:[#allocation2 + $0x18] sm:$0xff]
      %v250 = vld [vmem:[%s228] sm:$0xff]
      %v251 = vld [vmem:[%s228 + $0x8] sm:$0xff]
      %v252 = vld [vmem:[%s235] sm:$0xff]
      %v253 = vld [vmem:[%s235 + $0x8] sm:$0xff]
      %v254 = vld [vmem:[%s235 + $0x10] sm:$0xff]
      %v255 = vld [vmem:[%s235 + $0x18] sm:$0xff]
      %v256 = vld [vmem:[%s235 + $0x20] sm:$0xff]
      %v257 = vld [vmem:[%s235 + $0x28] sm:$0xff]
      %v258 = vld [vmem:[%s235 + $0x30] sm:$0xff]
      %v259 = vld [vmem:[%s235 + $0x38] sm:$0xff]
      %v260 = vld [vmem:[%s235 + $0x40] sm:$0xff]
      %v261 = vld [vmem:[%s235 + $0x48] sm:$0xff]
      %v262 = vld [vmem:[%s235 + $0x50] sm:$0xff]
      %v263 = vld [vmem:[%s235 + $0x58] sm:$0xff]
      %v264 = vld [vmem:[%s235 + $0x60] sm:$0xff]
      %v265 = vld [vmem:[%s235 + $0x68] sm:$0xff]
      %v266 = vld [vmem:[%s235 + $0x70] sm:$0xff]
      %v267 = vld [vmem:[%s235 + $0x78] sm:$0xff]
      %v268 = vld [vmem:[%s235 + $0x80] sm:$0xff]
      %v269 = vld [vmem:[%s235 + $0x88] sm:$0xff]
      %v270 = vld [vmem:[%s235 + $0x90] sm:$0xff]
      %v271 = vld [vmem:[%s235 + $0x98] sm:$0xff]
      %v272 = vld [vmem:[%s235 + $0xa0] sm:$0xff]
      %v273 = vld [vmem:[%s235 + $0xa8] sm:$0xff]
      %v274 = vld [vmem:[%s235 + $0xb0] sm:$0xff]
      %v275 = vld [vmem:[%s235 + $0xb8] sm:$0xff]
      %v276 = vld [vmem:[%s235 + $0xc0] sm:$0xff]
      %v277 = vld [vmem:[%s235 + $0xc8] sm:$0xff]
      %v278 = vld [vmem:[%s235 + $0xd0] sm:$0xff]
      %v279 = vld [vmem:[%s235 + $0xd8] sm:$0xff]
      %v280 = vld [vmem:[%s235 + $0xe0] sm:$0xff]
      %v281 = vld [vmem:[%s235 + $0xe8] sm:$0xff]
      %v282 = vld [vmem:[%s235 + $0xf0] sm:$0xff]
      %v283 = vld [vmem:[%s235 + $0xf8] sm:$0xff]
      %v284 = vld [vmem:[%s235 + $0x100] sm:$0xff]
      %v285 = vld [vmem:[%s235 + $0x108] sm:$0xff]
      %v286 = vld [vmem:[%s235 + $0x110] sm:$0xff]
      %v287 = vld [vmem:[%s235 + $0x118] sm:$0xff]
      %v288 = vld [vmem:[%s235 + $0x120] sm:$0xff]
      %v289 = vld [vmem:[%s235 + $0x128] sm:$0xff]
      %v290 = vld [vmem:[%s235 + $0x130] sm:$0xff]
      %v291 = vld [vmem:[%s235 + $0x138] sm:$0xff]
      %v292 = vld [vmem:[%s235 + $0x140] sm:$0xff]
      %v293 = vld [vmem:[%s235 + $0x148] sm:$0xff]
      %v294 = vld [vmem:[%s235 + $0x150] sm:$0xff]
      %v295 = vld [vmem:[%s235 + $0x158] sm:$0xff]
      %v296 = vld [vmem:[%s235 + $0x160] sm:$0xff]
      %v297 = vld [vmem:[%s235 + $0x168] sm:$0xff]
      %v298 = vld [vmem:[%s235 + $0x170] sm:$0xff]
      %v299 = vld [vmem:[%s235 + $0x178] sm:$0xff]
      %v300 = vld [vmem:[%s235 + $0x180] sm:$0xff]
      %v301 = vld [vmem:[%s235 + $0x188] sm:$0xff]
      %v302 = vld [vmem:[%s235 + $0x190] sm:$0xff]
      %v303 = vld [vmem:[%s235 + $0x198] sm:$0xff]
      %v304 = vld [vmem:[%s235 + $0x1a0] sm:$0xff]
      %v305 = vld [vmem:[%s235 + $0x1a8] sm:$0xff]
      %v306 = vld [vmem:[%s235 + $0x1b0] sm:$0xff]
      %v307 = vld [vmem:[%s235 + $0x1b8] sm:$0xff]
      %v308 = vld [vmem:[%s235 + $0x1c0] sm:$0xff]
      %v309 = vld [vmem:[%s235 + $0x1c8] sm:$0xff]
      %v310 = vld [vmem:[%s235 + $0x1d0] sm:$0xff]
      %v311 = vld [vmem:[%s235 + $0x1d8] sm:$0xff]
      %v312 = vld [vmem:[%s235 + $0x1e0] sm:$0xff]
      %v313 = vld [vmem:[%s235 + $0x1e8] sm:$0xff]
      %v314 = vld [vmem:[%s235 + $0x1f0] sm:$0xff]
      %v315 = vld [vmem:[%s235 + $0x1f8] sm:$0xff]
      %v316 = vld [vmem:[%s235 + $0x200] sm:$0xff]
      %v317 = vld [vmem:[%s235 + $0x208] sm:$0xff]
      %v318 = vld [vmem:[%s235 + $0x210] sm:$0xff]
      %v319 = vld [vmem:[%s235 + $0x218] sm:$0xff]
      %v320 = vld [vmem:[%s235 + $0x220] sm:$0xff]
      %v321 = vld [vmem:[%s235 + $0x228] sm:$0xff]
      %v322 = vld [vmem:[%s235 + $0x230] sm:$0xff]
      %v323 = vld [vmem:[%s235 + $0x238] sm:$0xff]
      %v324 = vld [vmem:[%s235 + $0x240] sm:$0xff]
      %v325 = vld [vmem:[%s235 + $0x248] sm:$0xff]
      %v326 = vld [vmem:[%s235 + $0x250] sm:$0xff]
      %v327 = vld [vmem:[%s235 + $0x258] sm:$0xff]
      %v328 = vld [vmem:[%s235 + $0x260] sm:$0xff]
      %v329 = vld [vmem:[%s235 + $0x268] sm:$0xff]
      %v330 = vld [vmem:[%s235 + $0x270] sm:$0xff]
      %v331 = vld [vmem:[%s235 + $0x278] sm:$0xff]
      %v332 = vld [vmem:[%s235 + $0x280] sm:$0xff]
      %v333 = vld [vmem:[%s235 + $0x288] sm:$0xff]
      %v334 = vld [vmem:[%s235 + $0x290] sm:$0xff]
      %v335 = vld [vmem:[%s235 + $0x298] sm:$0xff]
      %v336 = vld [vmem:[%s235 + $0x2a0] sm:$0xff]
      %v337 = vld [vmem:[%s235 + $0x2a8] sm:$0xff]
      %v338 = vld [vmem:[%s235 + $0x2b0] sm:$0xff]
      %v339 = vld [vmem:[%s235 + $0x2b8] sm:$0xff]
      %v340 = vld [vmem:[%s235 + $0x2c0] sm:$0xff]
      %v341 = vld [vmem:[%s235 + $0x2c8] sm:$0xff]
      %v342 = vld [vmem:[%s235 + $0x2d0] sm:$0xff]
      %v343 = vld [vmem:[%s235 + $0x2d8] sm:$0xff]
      %v344 = vld [vmem:[%s235 + $0x2e0] sm:$0xff]
      %v345 = vld [vmem:[%s235 + $0x2e8] sm:$0xff]
      %v346 = vld [vmem:[%s235 + $0x2f0] sm:$0xff]
      %v347 = vld [vmem:[%s235 + $0x2f8] sm:$0xff]
      %v348 = vld [vmem:[%s235 + $0x300] sm:$0xff]
      %v349 = vld [vmem:[%s235 + $0x308] sm:$0xff]
      %v350 = vld [vmem:[%s235 + $0x310] sm:$0xff]
      %v351 = vld [vmem:[%s235 + $0x318] sm:$0xff]
      %v352 = vld [vmem:[%s235 + $0x320] sm:$0xff]
      %v353 = vld [vmem:[%s235 + $0x328] sm:$0xff]
      %v354 = vld [vmem:[%s235 + $0x330] sm:$0xff]
      %v355 = vld [vmem:[%s235 + $0x338] sm:$0xff]
      %v356 = vld [vmem:[%s235 + $0x340] sm:$0xff]
      %v357 = vld [vmem:[%s235 + $0x348] sm:$0xff]
      %v358 = vld [vmem:[%s235 + $0x350] sm:$0xff]
      %v359 = vld [vmem:[%s235 + $0x358] sm:$0xff]
      %v360 = vld [vmem:[%s235 + $0x360] sm:$0xff]
      %v361 = vld [vmem:[%s235 + $0x368] sm:$0xff]
      %v362 = vld [vmem:[%s235 + $0x370] sm:$0xff]
      %v363 = vld [vmem:[%s235 + $0x378] sm:$0xff]
      %v364 = vld [vmem:[%s235 + $0x380] sm:$0xff]
      %v365 = vld [vmem:[%s235 + $0x388] sm:$0xff]
      %v366 = vld [vmem:[%s235 + $0x390] sm:$0xff]
      %v367 = vld [vmem:[%s235 + $0x398] sm:$0xff]
      %v368 = vld [vmem:[%s235 + $0x3a0] sm:$0xff]
      %v369 = vld [vmem:[%s235 + $0x3a8] sm:$0xff]
      %v370 = vld [vmem:[%s235 + $0x3b0] sm:$0xff]
      %v371 = vld [vmem:[%s235 + $0x3b8] sm:$0xff]
      %v372 = vld [vmem:[%s235 + $0x3c0] sm:$0xff]
      %v373 = vld [vmem:[%s235 + $0x3c8] sm:$0xff]
      %v374 = vld [vmem:[%s235 + $0x3d0] sm:$0xff]
      %v375 = vld [vmem:[%s235 + $0x3d8] sm:$0xff]
      %v376 = vld [vmem:[%s235 + $0x3e0] sm:$0xff]
      %v377 = vld [vmem:[%s235 + $0x3e8] sm:$0xff]
      %v378 = vld [vmem:[%s235 + $0x3f0] sm:$0xff]
      %v379 = vld [vmem:[%s235 + $0x3f8] sm:$0xff]
      %v382 = vunpack.c.l.b16 %v250
      %v383 = vunpack.c.h.b16 %v250
      %v384 = vunpack.c.l.b16 %v251
      %v385 = vunpack.c.h.b16 %v251
      %v386 = vpack.c.b16 %v382, %v382
      %v387 = vpack.c.b16 %v383, %v383
      %v388 = vpack.c.b16 %v384, %v384
      %v389 = vpack.c.b16 %v385, %v385
      %v522 = vunpack.c.l.b16 %v252
      %v523 = vunpack.c.h.b16 %v252
      %v524 = vunpack.c.l.b16 %v253
      %v525 = vunpack.c.h.b16 %v253
      %v526 = vunpack.c.l.b16 %v254
      %v527 = vunpack.c.h.b16 %v254
      %v528 = vunpack.c.l.b16 %v255
      %v529 = vunpack.c.h.b16 %v255
      %v530 = vunpack.c.l.b16 %v256
      %v531 = vunpack.c.h.b16 %v256
      %v532 = vunpack.c.l.b16 %v257
      %v533 = vunpack.c.h.b16 %v257
      %v534 = vunpack.c.l.b16 %v258
      %v535 = vunpack.c.h.b16 %v258
      %v536 = vunpack.c.l.b16 %v259
      %v537 = vunpack.c.h.b16 %v259
      %v538 = vunpack.c.l.b16 %v260
      %v539 = vunpack.c.h.b16 %v260
      %v540 = vunpack.c.l.b16 %v261
      %v541 = vunpack.c.h.b16 %v261
      %v542 = vunpack.c.l.b16 %v262
      %v543 = vunpack.c.h.b16 %v262
      %v544 = vunpack.c.l.b16 %v263
      %v545 = vunpack.c.h.b16 %v263
      %v546 = vunpack.c.l.b16 %v264
      %v547 = vunpack.c.h.b16 %v264
      %v548 = vunpack.c.l.b16 %v265
      %v549 = vunpack.c.h.b16 %v265
      %v550 = vunpack.c.l.b16 %v266
      %v551 = vunpack.c.h.b16 %v266
      %v552 = vunpack.c.l.b16 %v267
      %v553 = vunpack.c.h.b16 %v267
      %v554 = vunpack.c.l.b16 %v268
      %v555 = vunpack.c.h.b16 %v268
      %v556 = vunpack.c.l.b16 %v269
      %v557 = vunpack.c.h.b16 %v269
      %v558 = vunpack.c.l.b16 %v270
      %v559 = vunpack.c.h.b16 %v270
      %v560 = vunpack.c.l.b16 %v271
      %v561 = vunpack.c.h.b16 %v271
      %v562 = vunpack.c.l.b16 %v272
      %v563 = vunpack.c.h.b16 %v272
      %v564 = vunpack.c.l.b16 %v273
      %v565 = vunpack.c.h.b16 %v273
      %v566 = vunpack.c.l.b16 %v274
      %v567 = vunpack.c.h.b16 %v274
      %v568 = vunpack.c.l.b16 %v275
      %v569 = vunpack.c.h.b16 %v275
      %v570 = vunpack.c.l.b16 %v276
      %v571 = vunpack.c.h.b16 %v276
      %v572 = vunpack.c.l.b16 %v277
      %v573 = vunpack.c.h.b16 %v277
      %v574 = vunpack.c.l.b16 %v278
      %v575 = vunpack.c.h.b16 %v278
      %v576 = vunpack.c.l.b16 %v279
      %v577 = vunpack.c.h.b16 %v279
      %v578 = vunpack.c.l.b16 %v280
      %v579 = vunpack.c.h.b16 %v280
      %v580 = vunpack.c.l.b16 %v281
      %v581 = vunpack.c.h.b16 %v281
      %v582 = vunpack.c.l.b16 %v282
      %v583 = vunpack.c.h.b16 %v282
      %v584 = vunpack.c.l.b16 %v283
      %v585 = vunpack.c.h.b16 %v283
      %v586 = vunpack.c.l.b16 %v284
      %v587 = vunpack.c.h.b16 %v284
      %v588 = vunpack.c.l.b16 %v285
      %v589 = vunpack.c.h.b16 %v285
      %v590 = vunpack.c.l.b16 %v286
      %v591 = vunpack.c.h.b16 %v286
      %v592 = vunpack.c.l.b16 %v287
      %v593 = vunpack.c.h.b16 %v287
      %v594 = vunpack.c.l.b16 %v288
      %v595 = vunpack.c.h.b16 %v288
      %v596 = vunpack.c.l.b16 %v289
      %v597 = vunpack.c.h.b16 %v289
      %v598 = vunpack.c.l.b16 %v290
      %v599 = vunpack.c.h.b16 %v290
      %v600 = vunpack.c.l.b16 %v291
      %v601 = vunpack.c.h.b16 %v291
      %v602 = vunpack.c.l.b16 %v292
      %v603 = vunpack.c.h.b16 %v292
      %v604 = vunpack.c.l.b16 %v293
      %v605 = vunpack.c.h.b16 %v293
      %v606 = vunpack.c.l.b16 %v294
      %v607 = vunpack.c.h.b16 %v294
      %v608 = vunpack.c.l.b16 %v295
      %v609 = vunpack.c.h.b16 %v295
      %v610 = vunpack.c.l.b16 %v296
      %v611 = vunpack.c.h.b16 %v296
      %v612 = vunpack.c.l.b16 %v297
      %v613 = vunpack.c.h.b16 %v297
      %v614 = vunpack.c.l.b16 %v298
      %v615 = vunpack.c.h.b16 %v298
      %v616 = vunpack.c.l.b16 %v299
      %v617 = vunpack.c.h.b16 %v299
      %v618 = vunpack.c.l.b16 %v300
      %v619 = vunpack.c.h.b16 %v300
      %v620 = vunpack.c.l.b16 %v301
      %v621 = vunpack.c.h.b16 %v301
      %v622 = vunpack.c.l.b16 %v302
      %v623 = vunpack.c.h.b16 %v302
      %v624 = vunpack.c.l.b16 %v303
      %v625 = vunpack.c.h.b16 %v303
      %v626 = vunpack.c.l.b16 %v304
      %v627 = vunpack.c.h.b16 %v304
      %v628 = vunpack.c.l.b16 %v305
      %v629 = vunpack.c.h.b16 %v305
      %v630 = vunpack.c.l.b16 %v306
      %v631 = vunpack.c.h.b16 %v306
      %v632 = vunpack.c.l.b16 %v307
      %v633 = vunpack.c.h.b16 %v307
      %v634 = vunpack.c.l.b16 %v308
      %v635 = vunpack.c.h.b16 %v308
      %v636 = vunpack.c.l.b16 %v309
      %v637 = vunpack.c.h.b16 %v309
      %v638 = vunpack.c.l.b16 %v310
      %v639 = vunpack.c.h.b16 %v310
      %v640 = vunpack.c.l.b16 %v311
      %v641 = vunpack.c.h.b16 %v311
      %v642 = vunpack.c.l.b16 %v312
      %v643 = vunpack.c.h.b16 %v312
      %v644 = vunpack.c.l.b16 %v313
      %v645 = vunpack.c.h.b16 %v313
      %v646 = vunpack.c.l.b16 %v314
      %v647 = vunpack.c.h.b16 %v314
      %v648 = vunpack.c.l.b16 %v315
      %v649 = vunpack.c.h.b16 %v315
      %v650 = vunpack.c.l.b16 %v316
      %v651 = vunpack.c.h.b16 %v316
      %v652 = vunpack.c.l.b16 %v317
      %v653 = vunpack.c.h.b16 %v317
      %v654 = vunpack.c.l.b16 %v318
      %v655 = vunpack.c.h.b16 %v318
      %v656 = vunpack.c.l.b16 %v319
      %v657 = vunpack.c.h.b16 %v319
      %v658 = vunpack.c.l.b16 %v320
      %v659 = vunpack.c.h.b16 %v320
      %v660 = vunpack.c.l.b16 %v321
      %v661 = vunpack.c.h.b16 %v321
      %v662 = vunpack.c.l.b16 %v322
      %v663 = vunpack.c.h.b16 %v322
      %v664 = vunpack.c.l.b16 %v323
      %v665 = vunpack.c.h.b16 %v323
      %v666 = vunpack.c.l.b16 %v324
      %v667 = vunpack.c.h.b16 %v324
      %v668 = vunpack.c.l.b16 %v325
      %v669 = vunpack.c.h.b16 %v325
      %v670 = vunpack.c.l.b16 %v326
      %v671 = vunpack.c.h.b16 %v326
      %v672 = vunpack.c.l.b16 %v327
      %v673 = vunpack.c.h.b16 %v327
      %v674 = vunpack.c.l.b16 %v328
      %v675 = vunpack.c.h.b16 %v328
      %v676 = vunpack.c.l.b16 %v329
      %v677 = vunpack.c.h.b16 %v329
      %v678 = vunpack.c.l.b16 %v330
      %v679 = vunpack.c.h.b16 %v330
      %v680 = vunpack.c.l.b16 %v331
      %v681 = vunpack.c.h.b16 %v331
      %v682 = vunpack.c.l.b16 %v332
      %v683 = vunpack.c.h.b16 %v332
      %v684 = vunpack.c.l.b16 %v333
      %v685 = vunpack.c.h.b16 %v333
      %v686 = vunpack.c.l.b16 %v334
      %v687 = vunpack.c.h.b16 %v334
      %v688 = vunpack.c.l.b16 %v335
      %v689 = vunpack.c.h.b16 %v335
      %v690 = vunpack.c.l.b16 %v336
      %v691 = vunpack.c.h.b16 %v336
      %v692 = vunpack.c.l.b16 %v337
      %v693 = vunpack.c.h.b16 %v337
      %v694 = vunpack.c.l.b16 %v338
      %v695 = vunpack.c.h.b16 %v338
      %v696 = vunpack.c.l.b16 %v339
      %v697 = vunpack.c.h.b16 %v339
      %v698 = vunpack.c.l.b16 %v340
      %v699 = vunpack.c.h.b16 %v340
      %v700 = vunpack.c.l.b16 %v341
      %v701 = vunpack.c.h.b16 %v341
      %v702 = vunpack.c.l.b16 %v342
      %v703 = vunpack.c.h.b16 %v342
      %v704 = vunpack.c.l.b16 %v343
      %v705 = vunpack.c.h.b16 %v343
      %v706 = vunpack.c.l.b16 %v344
      %v707 = vunpack.c.h.b16 %v344
      %v708 = vunpack.c.l.b16 %v345
      %v709 = vunpack.c.h.b16 %v345
      %v710 = vunpack.c.l.b16 %v346
      %v711 = vunpack.c.h.b16 %v346
      %v712 = vunpack.c.l.b16 %v347
      %v713 = vunpack.c.h.b16 %v347
      %v714 = vunpack.c.l.b16 %v348
      %v715 = vunpack.c.h.b16 %v348
      %v716 = vunpack.c.l.b16 %v349
      %v717 = vunpack.c.h.b16 %v349
      %v718 = vunpack.c.l.b16 %v350
      %v719 = vunpack.c.h.b16 %v350
      %v720 = vunpack.c.l.b16 %v351
      %v721 = vunpack.c.h.b16 %v351
      %v722 = vunpack.c.l.b16 %v352
      %v723 = vunpack.c.h.b16 %v352
      %v724 = vunpack.c.l.b16 %v353
      %v725 = vunpack.c.h.b16 %v353
      %v726 = vunpack.c.l.b16 %v354
      %v727 = vunpack.c.h.b16 %v354
      %v728 = vunpack.c.l.b16 %v355
      %v729 = vunpack.c.h.b16 %v355
      %v730 = vunpack.c.l.b16 %v356
      %v731 = vunpack.c.h.b16 %v356
      %v732 = vunpack.c.l.b16 %v357
      %v733 = vunpack.c.h.b16 %v357
      %v734 = vunpack.c.l.b16 %v358
      %v735 = vunpack.c.h.b16 %v358
      %v736 = vunpack.c.l.b16 %v359
      %v737 = vunpack.c.h.b16 %v359
      %v738 = vunpack.c.l.b16 %v360
      %v739 = vunpack.c.h.b16 %v360
      %v740 = vunpack.c.l.b16 %v361
      %v741 = vunpack.c.h.b16 %v361
      %v742 = vunpack.c.l.b16 %v362
      %v743 = vunpack.c.h.b16 %v362
      %v744 = vunpack.c.l.b16 %v363
      %v745 = vunpack.c.h.b16 %v363
      %v746 = vunpack.c.l.b16 %v364
      %v747 = vunpack.c.h.b16 %v364
      %v748 = vunpack.c.l.b16 %v365
      %v749 = vunpack.c.h.b16 %v365
      %v750 = vunpack.c.l.b16 %v366
      %v751 = vunpack.c.h.b16 %v366
      %v752 = vunpack.c.l.b16 %v367
      %v753 = vunpack.c.h.b16 %v367
      %v754 = vunpack.c.l.b16 %v368
      %v755 = vunpack.c.h.b16 %v368
      %v756 = vunpack.c.l.b16 %v369
      %v757 = vunpack.c.h.b16 %v369
      %v758 = vunpack.c.l.b16 %v370
      %v759 = vunpack.c.h.b16 %v370
      %v760 = vunpack.c.l.b16 %v371
      %v761 = vunpack.c.h.b16 %v371
      %v762 = vunpack.c.l.b16 %v372
      %v763 = vunpack.c.h.b16 %v372
      %v764 = vunpack.c.l.b16 %v373
      %v765 = vunpack.c.h.b16 %v373
      %v766 = vunpack.c.l.b16 %v374
      %v767 = vunpack.c.h.b16 %v374
      %v768 = vunpack.c.l.b16 %v375
      %v769 = vunpack.c.h.b16 %v375
      %v770 = vunpack.c.l.b16 %v376
      %v771 = vunpack.c.h.b16 %v376
      %v772 = vunpack.c.l.b16 %v377
      %v773 = vunpack.c.h.b16 %v377
      %v774 = vunpack.c.l.b16 %v378
      %v775 = vunpack.c.h.b16 %v378
      %v776 = vunpack.c.l.b16 %v379
      %v777 = vunpack.c.h.b16 %v379
      %v778 = vpack.c.b16 %v526, %v522
      %v779 = vpack.c.b16 %v527, %v523
      %v780 = vpack.c.b16 %v528, %v524
      %v781 = vpack.c.b16 %v529, %v525
      %v782 = vpack.c.b16 %v534, %v530
      %v783 = vpack.c.b16 %v535, %v531
      %v784 = vpack.c.b16 %v536, %v532
      %v785 = vpack.c.b16 %v537, %v533
      %v786 = vpack.c.b16 %v542, %v538
      %v787 = vpack.c.b16 %v543, %v539
      %v788 = vpack.c.b16 %v544, %v540
      %v789 = vpack.c.b16 %v545, %v541
      %v790 = vpack.c.b16 %v550, %v546
      %v791 = vpack.c.b16 %v551, %v547
      %v792 = vpack.c.b16 %v552, %v548
      %v793 = vpack.c.b16 %v553, %v549
      %v794 = vpack.c.b16 %v558, %v554
      %v795 = vpack.c.b16 %v559, %v555
      %v796 = vpack.c.b16 %v560, %v556
      %v797 = vpack.c.b16 %v561, %v557
      %v798 = vpack.c.b16 %v566, %v562
      %v799 = vpack.c.b16 %v567, %v563
      %v800 = vpack.c.b16 %v568, %v564
      %v801 = vpack.c.b16 %v569, %v565
      %v802 = vpack.c.b16 %v574, %v570
      %v803 = vpack.c.b16 %v575, %v571
      %v804 = vpack.c.b16 %v576, %v572
      %v805 = vpack.c.b16 %v577, %v573
      %v806 = vpack.c.b16 %v582, %v578
      %v807 = vpack.c.b16 %v583, %v579
      %v808 = vpack.c.b16 %v584, %v580
      %v809 = vpack.c.b16 %v585, %v581
      %v810 = vpack.c.b16 %v590, %v586
      %v811 = vpack.c.b16 %v591, %v587
      %v812 = vpack.c.b16 %v592, %v588
      %v813 = vpack.c.b16 %v593, %v589
      %v814 = vpack.c.b16 %v598, %v594
      %v815 = vpack.c.b16 %v599, %v595
      %v816 = vpack.c.b16 %v600, %v596
      %v817 = vpack.c.b16 %v601, %v597
      %v818 = vpack.c.b16 %v606, %v602
      %v819 = vpack.c.b16 %v607, %v603
      %v820 = vpack.c.b16 %v608, %v604
      %v821 = vpack.c.b16 %v609, %v605
      %v822 = vpack.c.b16 %v614, %v610
      %v823 = vpack.c.b16 %v615, %v611
      %v824 = vpack.c.b16 %v616, %v612
      %v825 = vpack.c.b16 %v617, %v613
      %v826 = vpack.c.b16 %v622, %v618
      %v827 = vpack.c.b16 %v623, %v619
      %v828 = vpack.c.b16 %v624, %v620
      %v829 = vpack.c.b16 %v625, %v621
      %v830 = vpack.c.b16 %v630, %v626
      %v831 = vpack.c.b16 %v631, %v627
      %v832 = vpack.c.b16 %v632, %v628
      %v833 = vpack.c.b16 %v633, %v629
      %v834 = vpack.c.b16 %v638, %v634
      %v835 = vpack.c.b16 %v639, %v635
      %v836 = vpack.c.b16 %v640, %v636
      %v837 = vpack.c.b16 %v641, %v637
      %v838 = vpack.c.b16 %v646, %v642
      %v839 = vpack.c.b16 %v647, %v643
      %v840 = vpack.c.b16 %v648, %v644
      %v841 = vpack.c.b16 %v649, %v645
      %v842 = vpack.c.b16 %v654, %v650
      %v843 = vpack.c.b16 %v655, %v651
      %v844 = vpack.c.b16 %v656, %v652
      %v845 = vpack.c.b16 %v657, %v653
      %v846 = vpack.c.b16 %v662, %v658
      %v847 = vpack.c.b16 %v663, %v659
      %v848 = vpack.c.b16 %v664, %v660
      %v849 = vpack.c.b16 %v665, %v661
      %v850 = vpack.c.b16 %v670, %v666
      %v851 = vpack.c.b16 %v671, %v667
      %v852 = vpack.c.b16 %v672, %v668
      %v853 = vpack.c.b16 %v673, %v669
      %v854 = vpack.c.b16 %v678, %v674
      %v855 = vpack.c.b16 %v679, %v675
      %v856 = vpack.c.b16 %v680, %v676
      %v857 = vpack.c.b16 %v681, %v677
      %v858 = vpack.c.b16 %v686, %v682
      %v859 = vpack.c.b16 %v687, %v683
      %v860 = vpack.c.b16 %v688, %v684
      %v861 = vpack.c.b16 %v689, %v685
      %v862 = vpack.c.b16 %v694, %v690
      %v863 = vpack.c.b16 %v695, %v691
      %v864 = vpack.c.b16 %v696, %v692
      %v865 = vpack.c.b16 %v697, %v693
      %v866 = vpack.c.b16 %v702, %v698
      %v867 = vpack.c.b16 %v703, %v699
      %v868 = vpack.c.b16 %v704, %v700
      %v869 = vpack.c.b16 %v705, %v701
      %v870 = vpack.c.b16 %v710, %v706
      %v871 = vpack.c.b16 %v711, %v707
      %v872 = vpack.c.b16 %v712, %v708
      %v873 = vpack.c.b16 %v713, %v709
      %v874 = vpack.c.b16 %v718, %v714
      %v875 = vpack.c.b16 %v719, %v715
      %v876 = vpack.c.b16 %v720, %v716
      %v877 = vpack.c.b16 %v721, %v717
      %v878 = vpack.c.b16 %v726, %v722
      %v879 = vpack.c.b16 %v727, %v723
      %v880 = vpack.c.b16 %v728, %v724
      %v881 = vpack.c.b16 %v729, %v725
      %v882 = vpack.c.b16 %v734, %v730
      %v883 = vpack.c.b16 %v735, %v731
      %v884 = vpack.c.b16 %v736, %v732
      %v885 = vpack.c.b16 %v737, %v733
      %v886 = vpack.c.b16 %v742, %v738
      %v887 = vpack.c.b16 %v743, %v739
      %v888 = vpack.c.b16 %v744, %v740
      %v889 = vpack.c.b16 %v745, %v741
      %v890 = vpack.c.b16 %v750, %v746
      %v891 = vpack.c.b16 %v751, %v747
      %v892 = vpack.c.b16 %v752, %v748
      %v893 = vpack.c.b16 %v753, %v749
      %v894 = vpack.c.b16 %v758, %v754
      %v895 = vpack.c.b16 %v759, %v755
      %v896 = vpack.c.b16 %v760, %v756
      %v897 = vpack.c.b16 %v761, %v757
      %v898 = vpack.c.b16 %v766, %v762
      %v899 = vpack.c.b16 %v767, %v763
      %v900 = vpack.c.b16 %v768, %v764
      %v901 = vpack.c.b16 %v769, %v765
      %v902 = vpack.c.b16 %v774, %v770
      %v903 = vpack.c.b16 %v775, %v771
      %v904 = vpack.c.b16 %v776, %v772
      %v905 = vpack.c.b16 %v777, %v773
      %1034 = vmatprep.subr.bf16.mxu0 %v779
      %1035 = vmatpush1.bf16.msra.mxu0 %v778
      %1036 = vmatprep.subr.bf16.mxu0 %v783
      %1037 = vmatpush1.bf16.msra.mxu0 %v782
      %1038 = vmatprep.subr.bf16.mxu0 %v787
      %1039 = vmatpush1.bf16.msra.mxu0 %v786
      %1040 = vmatprep.subr.bf16.mxu0 %v791
      %1041 = vmatpush1.bf16.msra.mxu0 %v790
      %1042 = vmatprep.subr.bf16.mxu0 %v795
      %1043 = vmatpush1.bf16.msra.mxu0 %v794
      %1044 = vmatprep.subr.bf16.mxu0 %v799
      %1045 = vmatpush1.bf16.msra.mxu0 %v798
      %1046 = vmatprep.subr.bf16.mxu0 %v803
      %1047 = vmatpush1.bf16.msra.mxu0 %v802
      %1048 = vmatprep.subr.bf16.mxu0 %v807
      %1049 = vmatpush1.bf16.msra.mxu0 %v806
      %1050 = vmatprep.subr.bf16.mxu0 %v811
      %1051 = vmatpush1.bf16.msra.mxu0 %v810
      %1052 = vmatprep.subr.bf16.mxu0 %v815
      %1053 = vmatpush1.bf16.msra.mxu0 %v814
      %1054 = vmatprep.subr.bf16.mxu0 %v819
      %1055 = vmatpush1.bf16.msra.mxu0 %v818
      %1056 = vmatprep.subr.bf16.mxu0 %v823
      %1057 = vmatpush1.bf16.msra.mxu0 %v822
      %1058 = vmatprep.subr.bf16.mxu0 %v827
      %1059 = vmatpush1.bf16.msra.mxu0 %v826
      %1060 = vmatprep.subr.bf16.mxu0 %v831
      %1061 = vmatpush1.bf16.msra.mxu0 %v830
      %1062 = vmatprep.subr.bf16.mxu0 %v835
      %1063 = vmatpush1.bf16.msra.mxu0 %v834
      %1064 = vmatprep.subr.bf16.mxu0 %v839
      %1065 = vmatpush1.bf16.msra.mxu0 %v838
      %1066 = vmatprep.mubr.bf16.mxu0 %v387
      %1067 = vmatmul.mubr.bf16.gmra.mrb[0].mxu0 %v386
      %v1068 = vpop.f32.mrb[0].mxu0
      %v1069 = vadd.f32 0.0, %v1068
      %v1070 = vpop.f32.mrb[0].mxu0
      %v1071 = vadd.f32 0.0, %v1070
      %v1072 = vpop.f32.mrb[0].mxu0
      %v1073 = vpop.f32.mrb[0].mxu0
      %1074 = vdwg.mxu0
      %1075 = vmatprep.subr.bf16.mxu0 %v843
      %1076 = vmatpush1.bf16.msra.mxu0 %v842
      %1077 = vmatprep.subr.bf16.mxu0 %v847
      %1078 = vmatpush1.bf16.msra.mxu0 %v846
      %1079 = vmatprep.subr.bf16.mxu0 %v851
      %1080 = vmatpush1.bf16.msra.mxu0 %v850
      %1081 = vmatprep.subr.bf16.mxu0 %v855
      %1082 = vmatpush1.bf16.msra.mxu0 %v854
      %1083 = vmatprep.subr.bf16.mxu0 %v859
      %1084 = vmatpush1.bf16.msra.mxu0 %v858
      %1085 = vmatprep.subr.bf16.mxu0 %v863
      %1086 = vmatpush1.bf16.msra.mxu0 %v862
      %1087 = vmatprep.subr.bf16.mxu0 %v867
      %1088 = vmatpush1.bf16.msra.mxu0 %v866
      %1089 = vmatprep.subr.bf16.mxu0 %v871
      %1090 = vmatpush1.bf16.msra.mxu0 %v870
      %1091 = vmatprep.subr.bf16.mxu0 %v875
      %1092 = vmatpush1.bf16.msra.mxu0 %v874
      %1093 = vmatprep.subr.bf16.mxu0 %v879
      %1094 = vmatpush1.bf16.msra.mxu0 %v878
      %1095 = vmatprep.subr.bf16.mxu0 %v883
      %1096 = vmatpush1.bf16.msra.mxu0 %v882
      %1097 = vmatprep.subr.bf16.mxu0 %v887
      %1098 = vmatpush1.bf16.msra.mxu0 %v886
      %1099 = vmatprep.subr.bf16.mxu0 %v891
      %1100 = vmatpush1.bf16.msra.mxu0 %v890
      %1101 = vmatprep.subr.bf16.mxu0 %v895
      %1102 = vmatpush1.bf16.msra.mxu0 %v894
      %1103 = vmatprep.subr.bf16.mxu0 %v899
      %1104 = vmatpush1.bf16.msra.mxu0 %v898
      %1105 = vmatprep.subr.bf16.mxu0 %v903
      %1106 = vmatpush1.bf16.msra.mxu0 %v902
      %1107 = vmatprep.mubr.bf16.mxu0 %v389
      %1108 = vmatmul.mubr.bf16.gmra.mrb[0].mxu0 %v388
      %v1109 = vpop.f32.mrb[0].mxu0
      %v1110 = vadd.f32 %v1069, %v1109
      %v1111 = vpop.f32.mrb[0].mxu0
      %v1112 = vadd.f32 %v1071, %v1111
      %v1113 = vpop.f32.mrb[0].mxu0
      %v1114 = vpop.f32.mrb[0].mxu0
      %1115 = vdwg.mxu0
      %1116 = vmatprep.subr.bf16.mxu0 %v781
      %1117 = vmatpush1.bf16.msra.mxu0 %v780
      %1118 = vmatprep.subr.bf16.mxu0 %v785
      %1119 = vmatpush1.bf16.msra.mxu0 %v784
      %1120 = vmatprep.subr.bf16.mxu0 %v789
      %1121 = vmatpush1.bf16.msra.mxu0 %v788
      %1122 = vmatprep.subr.bf16.mxu0 %v793
      %1123 = vmatpush1.bf16.msra.mxu0 %v792
      %1124 = vmatprep.subr.bf16.mxu0 %v797
      %1125 = vmatpush1.bf16.msra.mxu0 %v796
      %1126 = vmatprep.subr.bf16.mxu0 %v801
      %1127 = vmatpush1.bf16.msra.mxu0 %v800
      %1128 = vmatprep.subr.bf16.mxu0 %v805
      %1129 = vmatpush1.bf16.msra.mxu0 %v804
      %1130 = vmatprep.subr.bf16.mxu0 %v809
      %1131 = vmatpush1.bf16.msra.mxu0 %v808
      %1132 = vmatprep.subr.bf16.mxu0 %v813
      %1133 = vmatpush1.bf16.msra.mxu0 %v812
      %1134 = vmatprep.subr.bf16.mxu0 %v817
      %1135 = vmatpush1.bf16.msra.mxu0 %v816
      %1136 = vmatprep.subr.bf16.mxu0 %v821
      %1137 = vmatpush1.bf16.msra.mxu0 %v820
      %1138 = vmatprep.subr.bf16.mxu0 %v825
      %1139 = vmatpush1.bf16.msra.mxu0 %v824
      %1140 = vmatprep.subr.bf16.mxu0 %v829
      %1141 = vmatpush1.bf16.msra.mxu0 %v828
      %1142 = vmatprep.subr.bf16.mxu0 %v833
      %1143 = vmatpush1.bf16.msra.mxu0 %v832
      %1144 = vmatprep.subr.bf16.mxu0 %v837
      %1145 = vmatpush1.bf16.msra.mxu0 %v836
      %1146 = vmatprep.subr.bf16.mxu0 %v841
      %1147 = vmatpush1.bf16.msra.mxu0 %v840
      %1148 = vmatprep.mubr.bf16.mxu0 %v387
      %1149 = vmatmul.mubr.bf16.gmra.mrb[0].mxu0 %v386
      %v1150 = vpop.f32.mrb[0].mxu0
      %v1151 = vadd.f32 0.0, %v1150
      %v1152 = vpop.f32.mrb[0].mxu0
      %v1153 = vadd.f32 0.0, %v1152
      %v1154 = vpop.f32.mrb[0].mxu0
      %v1155 = vpop.f32.mrb[0].mxu0
      %1156 = vdwg.mxu0
      %1157 = vmatprep.subr.bf16.mxu0 %v845
      %1158 = vmatpush1.bf16.msra.mxu0 %v844
      %1159 = vmatprep.subr.bf16.mxu0 %v849
      %1160 = vmatpush1.bf16.msra.mxu0 %v848
      %1161 = vmatprep.subr.bf16.mxu0 %v853
      %1162 = vmatpush1.bf16.msra.mxu0 %v852
      %1163 = vmatprep.subr.bf16.mxu0 %v857
      %1164 = vmatpush1.bf16.msra.mxu0 %v856
      %1165 = vmatprep.subr.bf16.mxu0 %v861
      %1166 = vmatpush1.bf16.msra.mxu0 %v860
      %1167 = vmatprep.subr.bf16.mxu0 %v865
      %1168 = vmatpush1.bf16.msra.mxu0 %v864
      %1169 = vmatprep.subr.bf16.mxu0 %v869
      %1170 = vmatpush1.bf16.msra.mxu0 %v868
      %1171 = vmatprep.subr.bf16.mxu0 %v873
      %1172 = vmatpush1.bf16.msra.mxu0 %v872
      %1173 = vmatprep.subr.bf16.mxu0 %v877
      %1174 = vmatpush1.bf16.msra.mxu0 %v876
      %1175 = vmatprep.subr.bf16.mxu0 %v881
      %1176 = vmatpush1.bf16.msra.mxu0 %v880
      %1177 = vmatprep.subr.bf16.mxu0 %v885
      %1178 = vmatpush1.bf16.msra.mxu0 %v884
      %1179 = vmatprep.subr.bf16.mxu0 %v889
      %1180 = vmatpush1.bf16.msra.mxu0 %v888
      %1181 = vmatprep.subr.bf16.mxu0 %v893
      %1182 = vmatpush1.bf16.msra.mxu0 %v892
      %1183 = vmatprep.subr.bf16.mxu0 %v897
      %1184 = vmatpush1.bf16.msra.mxu0 %v896
      %1185 = vmatprep.subr.bf16.mxu0 %v901
      %1186 = vmatpush1.bf16.msra.mxu0 %v900
      %1187 = vmatprep.subr.bf16.mxu0 %v905
      %1188 = vmatpush1.bf16.msra.mxu0 %v904
      %1189 = vmatprep.mubr.bf16.mxu0 %v389
      %1190 = vmatmul.mubr.bf16.gmra.mrb[0].mxu0 %v388
      %v1191 = vpop.f32.mrb[0].mxu0
      %v1192 = vadd.f32 %v1151, %v1191
      %v1193 = vpop.f32.mrb[0].mxu0
      %v1194 = vadd.f32 %v1153, %v1193
      %v1195 = vpop.f32.mrb[0].mxu0
      %v1196 = vpop.f32.mrb[0].mxu0
      %1197 = vdwg.mxu0
      %v1198 = vadd.f32 %v246, %v1110
      %v1199 = vadd.f32 %v247, %v1112
      %v1200 = vadd.f32 %v248, %v1192
      %v1201 = vadd.f32 %v249, %v1194
      %1202 = vst [vmem:[#allocation2] sm:$0xff] %v1198
      %1203 = vst [vmem:[#allocation2 + $0x8] sm:$0xff] %v1199
      %1204 = vst [vmem:[#allocation2 + $0x10] sm:$0xff] %v1200
      %1205 = vst [vmem:[#allocation2 + $0x18] sm:$0xff] %v1201
      %p1206 = scmp.eq.s32.totalorder %s16, 6
      // Predicated region
      $region45: #{bayesian_atari_qr_forward.9} parent=39 // pred_check
        %p1207 = pneg %p1206
      $region46: #{bayesian_atari_qr_forward.9} parent=39 // pred_check_branch
        %1209 = sbr.rel (%p1207) target = $region48
      $region47: #{bayesian_atari_qr_forward.9} parent=39 // pred_region
        %v1210 = vld [vmem:[#allocation2] sm:$0xff]
        %v1211 = vld [vmem:[#allocation2 + $0x8] sm:$0xff]
        %v1212 = vld [vmem:[#allocation2 + $0x10] sm:$0xff]
        %v1213 = vld [vmem:[#allocation2 + $0x18] sm:$0xff]
        %v1214 = vld [vmem:[%s2] sm:$0xf]
        %v1216 = vlaneseq
        %v1217 = vshrl.u32 %v1216, 7
        %v1218 = vsub.s32 0, %v1217
        %v1219 = vrot.slane %v1214, %v1218
        %v1220 = vlaneseq
        %v1221 = vshrl.u32 %v1220, 7
        %v1222 = vsub.s32 1, %v1221
        %v1223 = vrot.slane %v1214, %v1222
        %v1224 = vlaneseq
        %v1225 = vshrl.u32 %v1224, 7
        %v1226 = vsub.s32 2, %v1225
        %v1227 = vrot.slane %v1214, %v1226
        %v1228 = vlaneseq
        %v1229 = vshrl.u32 %v1228, 7
        %v1230 = vsub.s32 3, %v1229
        %v1231 = vrot.slane %v1214, %v1230
        %v1236 = vadd.f32 %v1210, %v1219
        %v1237 = vadd.f32 %v1211, %v1223
        %v1238 = vadd.f32 %v1212, %v1227
        %v1239 = vadd.f32 %v1213, %v1231
        %v1240 = vmax.f32 %v1236, 0.0
        %v1241 = vmax.f32 %v1237, 0.0
        %v1242 = vmax.f32 %v1238, 0.0
        %v1243 = vmax.f32 %v1239, 0.0
        %v1244 = vpack.c.bf16 %v1240, %v1240
        %v1245 = vpack.c.bf16 %v1241, %v1241
        %v1246 = vpack.c.bf16 %v1242, %v1242
        %v1247 = vpack.c.bf16 %v1243, %v1243
        %v1248 = vld [vmem:[%s3] sm:$0xf]
        %v1249 = vld [vmem:[%s3 + $0x4] sm:$0xf]
        %v1250 = vld [vmem:[%s3 + $0x8] sm:$0xf]
        %v1251 = vld [vmem:[%s3 + $0xc] sm:$0xf]
        %v1252 = vld [vmem:[%s3 + $0x10] sm:$0xf]
        %v1253 = vld [vmem:[%s3 + $0x14] sm:$0xf]
        %v1254 = vld [vmem:[%s3 + $0x18] sm:$0xf]
        %v1255 = vld [vmem:[%s3 + $0x1c] sm:$0xf]
        %v1256 = vld [vmem:[%s3 + $0x20] sm:$0xf]
        %v1257 = vld [vmem:[%s3 + $0x24] sm:$0xf]
        %v1258 = vld [vmem:[%s3 + $0x28] sm:$0xf]
        %v1259 = vld [vmem:[%s3 + $0x2c] sm:$0xf]
        %v1260 = vld [vmem:[%s3 + $0x30] sm:$0xf]
        %v1261 = vld [vmem:[%s3 + $0x34] sm:$0xf]
        %v1262 = vld [vmem:[%s3 + $0x38] sm:$0xf]
        %v1263 = vld [vmem:[%s3 + $0x3c] sm:$0xf]
        %v1264 = vld [vmem:[%s3 + $0x40] sm:$0xf]
        %v1265 = vld [vmem:[%s3 + $0x44] sm:$0xf]
        %v1266 = vld [vmem:[%s3 + $0x48] sm:$0xf]
        %v1267 = vld [vmem:[%s3 + $0x4c] sm:$0xf]
        %v1268 = vld [vmem:[%s3 + $0x50] sm:$0xf]
        %v1269 = vld [vmem:[%s3 + $0x54] sm:$0xf]
        %v1270 = vld [vmem:[%s3 + $0x58] sm:$0xf]
        %v1271 = vld [vmem:[%s3 + $0x5c] sm:$0xf]
        %v1272 = vld [vmem:[%s3 + $0x60] sm:$0xf]
        %v1273 = vld [vmem:[%s3 + $0x64] sm:$0xf]
        %v1274 = vld [vmem:[%s3 + $0x68] sm:$0xf]
        %v1275 = vld [vmem:[%s3 + $0x6c] sm:$0xf]
        %v1276 = vld [vmem:[%s3 + $0x70] sm:$0xf]
        %v1277 = vld [vmem:[%s3 + $0x74] sm:$0xf]
        %v1278 = vld [vmem:[%s3 + $0x78] sm:$0xf]
        %v1279 = vld [vmem:[%s3 + $0x7c] sm:$0xf]
        %v1280 = vld [vmem:[%s3 + $0x80] sm:$0xf]
        %v1281 = vld [vmem:[%s3 + $0x84] sm:$0xf]
        %v1282 = vld [vmem:[%s3 + $0x88] sm:$0xf]
        %v1283 = vld [vmem:[%s3 + $0x8c] sm:$0xf]
        %v1284 = vld [vmem:[%s3 + $0x90] sm:$0xf]
        %v1285 = vld [vmem:[%s3 + $0x94] sm:$0xf]
        %v1286 = vld [vmem:[%s3 + $0x98] sm:$0xf]
        %v1287 = vld [vmem:[%s3 + $0x9c] sm:$0xf]
        %v1288 = vld [vmem:[%s3 + $0xa0] sm:$0xf]
        %v1289 = vld [vmem:[%s3 + $0xa4] sm:$0xf]
        %v1290 = vld [vmem:[%s3 + $0xa8] sm:$0xf]
        %v1291 = vld [vmem:[%s3 + $0xac] sm:$0xf]
        %v1292 = vld [vmem:[%s3 + $0xb0] sm:$0xf]
        %v1293 = vld [vmem:[%s3 + $0xb4] sm:$0xf]
        %v1294 = vld [vmem:[%s3 + $0xb8] sm:$0xf]
        %v1295 = vld [vmem:[%s3 + $0xbc] sm:$0xf]
        %v1296 = vld [vmem:[%s3 + $0xc0] sm:$0xf]
        %v1297 = vld [vmem:[%s3 + $0xc4] sm:$0xf]
        %v1298 = vld [vmem:[%s3 + $0xc8] sm:$0xf]
        %v1299 = vld [vmem:[%s3 + $0xcc] sm:$0xf]
        %v1300 = vld [vmem:[%s3 + $0xd0] sm:$0xf]
        %v1301 = vld [vmem:[%s3 + $0xd4] sm:$0xf]
        %v1302 = vld [vmem:[%s3 + $0xd8] sm:$0xf]
        %v1303 = vld [vmem:[%s3 + $0xdc] sm:$0xf]
        %v1304 = vld [vmem:[%s3 + $0xe0] sm:$0xf]
        %v1305 = vld [vmem:[%s3 + $0xe4] sm:$0xf]
        %v1306 = vld [vmem:[%s3 + $0xe8] sm:$0xf]
        %v1307 = vld [vmem:[%s3 + $0xec] sm:$0xf]
        %v1308 = vld [vmem:[%s3 + $0xf0] sm:$0xf]
        %v1309 = vld [vmem:[%s3 + $0xf4] sm:$0xf]
        %v1310 = vld [vmem:[%s3 + $0xf8] sm:$0xf]
        %v1311 = vld [vmem:[%s3 + $0xfc] sm:$0xf]
        %v1312 = vld [vmem:[%s4] sm:$0x1]
        %v1314 = vlaneseq
        %v1315 = vshrl.u32 %v1314, 7
        %v1316 = vsub.s32 0, %v1315
        %v1317 = vrot.slane %v1312, %v1316
        %v1383 = vunpack.c.l.b16 %v1248
        %v1384 = vunpack.c.l.b16 %v1249
        %v1385 = vunpack.c.l.b16 %v1250
        %v1386 = vunpack.c.l.b16 %v1251
        %v1387 = vunpack.c.l.b16 %v1252
        %v1388 = vunpack.c.l.b16 %v1253
        %v1389 = vunpack.c.l.b16 %v1254
        %v1390 = vunpack.c.l.b16 %v1255
        %v1391 = vunpack.c.l.b16 %v1256
        %v1392 = vunpack.c.l.b16 %v1257
        %v1393 = vunpack.c.l.b16 %v1258
        %v1394 = vunpack.c.l.b16 %v1259
        %v1395 = vunpack.c.l.b16 %v1260
        %v1396 = vunpack.c.l.b16 %v1261
        %v1397 = vunpack.c.l.b16 %v1262
        %v1398 = vunpack.c.l.b16 %v1263
        %v1399 = vunpack.c.l.b16 %v1264
        %v1400 = vunpack.c.l.b16 %v1265
        %v1401 = vunpack.c.l.b16 %v1266
        %v1402 = vunpack.c.l.b16 %v1267
        %v1403 = vunpack.c.l.b16 %v1268
        %v1404 = vunpack.c.l.b16 %v1269
        %v1405 = vunpack.c.l.b16 %v1270
        %v1406 = vunpack.c.l.b16 %v1271
        %v1407 = vunpack.c.l.b16 %v1272
        %v1408 = vunpack.c.l.b16 %v1273
        %v1409 = vunpack.c.l.b16 %v1274
        %v1410 = vunpack.c.l.b16 %v1275
        %v1411 = vunpack.c.l.b16 %v1276
        %v1412 = vunpack.c.l.b16 %v1277
        %v1413 = vunpack.c.l.b16 %v1278
        %v1414 = vunpack.c.l.b16 %v1279
        %v1415 = vunpack.c.l.b16 %v1280
        %v1416 = vunpack.c.l.b16 %v1281
        %v1417 = vunpack.c.l.b16 %v1282
        %v1418 = vunpack.c.l.b16 %v1283
        %v1419 = vunpack.c.l.b16 %v1284
        %v1420 = vunpack.c.l.b16 %v1285
        %v1421 = vunpack.c.l.b16 %v1286
        %v1422 = vunpack.c.l.b16 %v1287
        %v1423 = vunpack.c.l.b16 %v1288
        %v1424 = vunpack.c.l.b16 %v1289
        %v1425 = vunpack.c.l.b16 %v1290
        %v1426 = vunpack.c.l.b16 %v1291
        %v1427 = vunpack.c.l.b16 %v1292
        %v1428 = vunpack.c.l.b16 %v1293
        %v1429 = vunpack.c.l.b16 %v1294
        %v1430 = vunpack.c.l.b16 %v1295
        %v1431 = vunpack.c.l.b16 %v1296
        %v1432 = vunpack.c.l.b16 %v1297
        %v1433 = vunpack.c.l.b16 %v1298
        %v1434 = vunpack.c.l.b16 %v1299
        %v1435 = vunpack.c.l.b16 %v1300
        %v1436 = vunpack.c.l.b16 %v1301
        %v1437 = vunpack.c.l.b16 %v1302
        %v1438 = vunpack.c.l.b16 %v1303
        %v1439 = vunpack.c.l.b16 %v1304
        %v1440 = vunpack.c.l.b16 %v1305
        %v1441 = vunpack.c.l.b16 %v1306
        %v1442 = vunpack.c.l.b16 %v1307
        %v1443 = vunpack.c.l.b16 %v1308
        %v1444 = vunpack.c.l.b16 %v1309
        %v1445 = vunpack.c.l.b16 %v1310
        %v1446 = vunpack.c.l.b16 %v1311
        %v1447 = vpack.c.b16 %v1384, %v1383
        %v1448 = vpack.c.b16 %v1386, %v1385
        %v1449 = vpack.c.b16 %v1388, %v1387
        %v1450 = vpack.c.b16 %v1390, %v1389
        %v1451 = vpack.c.b16 %v1392, %v1391
        %v1452 = vpack.c.b16 %v1394, %v1393
        %v1453 = vpack.c.b16 %v1396, %v1395
        %v1454 = vpack.c.b16 %v1398, %v1397
        %v1455 = vpack.c.b16 %v1400, %v1399
        %v1456 = vpack.c.b16 %v1402, %v1401
        %v1457 = vpack.c.b16 %v1404, %v1403
        %v1458 = vpack.c.b16 %v1406, %v1405
        %v1459 = vpack.c.b16 %v1408, %v1407
        %v1460 = vpack.c.b16 %v1410, %v1409
        %v1461 = vpack.c.b16 %v1412, %v1411
        %v1462 = vpack.c.b16 %v1414, %v1413
        %v1463 = vpack.c.b16 %v1416, %v1415
        %v1464 = vpack.c.b16 %v1418, %v1417
        %v1465 = vpack.c.b16 %v1420, %v1419
        %v1466 = vpack.c.b16 %v1422, %v1421
        %v1467 = vpack.c.b16 %v1424, %v1423
        %v1468 = vpack.c.b16 %v1426, %v1425
        %v1469 = vpack.c.b16 %v1428, %v1427
        %v1470 = vpack.c.b16 %v1430, %v1429
        %v1471 = vpack.c.b16 %v1432, %v1431
        %v1472 = vpack.c.b16 %v1434, %v1433
        %v1473 = vpack.c.b16 %v1436, %v1435
        %v1474 = vpack.c.b16 %v1438, %v1437
        %v1475 = vpack.c.b16 %v1440, %v1439
        %v1476 = vpack.c.b16 %v1442, %v1441
        %v1477 = vpack.c.b16 %v1444, %v1443
        %v1478 = vpack.c.b16 %v1446, %v1445
        %1511 = vmatprep.subr.bf16.mxu0 0
        %1512 = vmatpush1.bf16.msra.mxu0 %v1447
        %1513 = vmatprep.subr.bf16.mxu0 0
        %1514 = vmatpush1.bf16.msra.mxu0 %v1448
        %1515 = vmatprep.subr.bf16.mxu0 0
        %1516 = vmatpush1.bf16.msra.mxu0 %v1449
        %1517 = vmatprep.subr.bf16.mxu0 0
        %1518 = vmatpush1.bf16.msra.mxu0 %v1450
        %1519 = vmatprep.subr.bf16.mxu0 0
        %1520 = vmatpush1.bf16.msra.mxu0 %v1451
        %1521 = vmatprep.subr.bf16.mxu0 0
        %1522 = vmatpush1.bf16.msra.mxu0 %v1452
        %1523 = vmatprep.subr.bf16.mxu0 0
        %1524 = vmatpush1.bf16.msra.mxu0 %v1453
        %1525 = vmatprep.subr.bf16.mxu0 0
        %1526 = vmatpush1.bf16.msra.mxu0 %v1454
        %1527 = vmatprep.subr.bf16.mxu0 0
        %1528 = vmatpush1.bf16.msra.mxu0 %v1455
        %1529 = vmatprep.subr.bf16.mxu0 0
        %1530 = vmatpush1.bf16.msra.mxu0 %v1456
        %1531 = vmatprep.subr.bf16.mxu0 0
        %1532 = vmatpush1.bf16.msra.mxu0 %v1457
        %1533 = vmatprep.subr.bf16.mxu0 0
        %1534 = vmatpush1.bf16.msra.mxu0 %v1458
        %1535 = vmatprep.subr.bf16.mxu0 0
        %1536 = vmatpush1.bf16.msra.mxu0 %v1459
        %1537 = vmatprep.subr.bf16.mxu0 0
        %1538 = vmatpush1.bf16.msra.mxu0 %v1460
        %1539 = vmatprep.subr.bf16.mxu0 0
        %1540 = vmatpush1.bf16.msra.mxu0 %v1461
        %1541 = vmatprep.subr.bf16.mxu0 0
        %1542 = vmatpush1.bf16.msra.mxu0 %v1462
        %1543 = vmatprep.mubr.bf16.mxu0 %v1245
        %1544 = vmatmul.mubr.bf16.gmra.mrb[0].mxu0 %v1244
        %v1545 = vpop.f32.mrb[0].mxu0
        %v1546 = vadd.f32 %v1317, %v1545
        %v1547 = vpop.f32.mrb[0].mxu0
        %v1548 = vpop.f32.mrb[0].mxu0
        %v1549 = vpop.f32.mrb[0].mxu0
        %1550 = vdwg.mxu0
        %1551 = vmatprep.subr.bf16.mxu0 0
        %1552 = vmatpush1.bf16.msra.mxu0 %v1463
        %1553 = vmatprep.subr.bf16.mxu0 0
        %1554 = vmatpush1.bf16.msra.mxu0 %v1464
        %1555 = vmatprep.subr.bf16.mxu0 0
        %1556 = vmatpush1.bf16.msra.mxu0 %v1465
        %1557 = vmatprep.subr.bf16.mxu0 0
        %1558 = vmatpush1.bf16.msra.mxu0 %v1466
        %1559 = vmatprep.subr.bf16.mxu0 0
        %1560 = vmatpush1.bf16.msra.mxu0 %v1467
        %1561 = vmatprep.subr.bf16.mxu0 0
        %1562 = vmatpush1.bf16.msra.mxu0 %v1468
        %1563 = vmatprep.subr.bf16.mxu0 0
        %1564 = vmatpush1.bf16.msra.mxu0 %v1469
        %1565 = vmatprep.subr.bf16.mxu0 0
        %1566 = vmatpush1.bf16.msra.mxu0 %v1470
        %1567 = vmatprep.subr.bf16.mxu0 0
        %1568 = vmatpush1.bf16.msra.mxu0 %v1471
        %1569 = vmatprep.subr.bf16.mxu0 0
        %1570 = vmatpush1.bf16.msra.mxu0 %v1472
        %1571 = vmatprep.subr.bf16.mxu0 0
        %1572 = vmatpush1.bf16.msra.mxu0 %v1473
        %1573 = vmatprep.subr.bf16.mxu0 0
        %1574 = vmatpush1.bf16.msra.mxu0 %v1474
        %1575 = vmatprep.subr.bf16.mxu0 0
        %1576 = vmatpush1.bf16.msra.mxu0 %v1475
        %1577 = vmatprep.subr.bf16.mxu0 0
        %1578 = vmatpush1.bf16.msra.mxu0 %v1476
        %1579 = vmatprep.subr.bf16.mxu0 0
        %1580 = vmatpush1.bf16.msra.mxu0 %v1477
        %1581 = vmatprep.subr.bf16.mxu0 0
        %1582 = vmatpush1.bf16.msra.mxu0 %v1478
        %1583 = vmatprep.mubr.bf16.mxu0 %v1247
        %1584 = vmatmul.mubr.bf16.gmra.mrb[0].mxu0 %v1246
        %v1585 = vpop.f32.mrb[0].mxu0
        %v1586 = vadd.f32 %v1546, %v1585
        %v1587 = vpop.f32.mrb[0].mxu0
        %v1588 = vpop.f32.mrb[0].mxu0
        %v1589 = vpop.f32.mrb[0].mxu0
        %1590 = vdwg.mxu0
        %1591 = vst [vmem:[%s5] sm:$0xff] %v1586
      $region48: #{bayesian_atari_qr_forward.9} parent=39 // pred_fallthru
        _
      // Predicated region
      $region49: #{bayesian_atari_qr_forward.9} parent=39 // pred_check
        %p1592 = pneg %p144
      $region50: #{bayesian_atari_qr_forward.9} parent=39 // pred_check_branch
        %1594 = sbr.rel (%p1592) target = $region52
      $region51: #{bayesian_atari_qr_forward.9} parent=39 // pred_region
        _
      $region52: #{bayesian_atari_qr_forward.9} parent=39 // pred_fallthru
        _
      // Predicated region
      $region53: #{bayesian_atari_qr_forward.9} parent=39 // pred_check
        %p1595 = pneg %p144
      $region54: #{bayesian_atari_qr_forward.9} parent=39 // pred_check_branch
        %1597 = sbr.rel (%p1595) target = $region56
      $region55: #{bayesian_atari_qr_forward.9} parent=39 // pred_region
        _
      $region56: #{bayesian_atari_qr_forward.9} parent=39 // pred_fallthru
        _
    $region40: #{bayesian_atari_qr_forward.9} parent=5 // pred_fallthru
      _
    %p1598 = scmp.le.s32.totalorder 2, %s11
    // Predicated region
    $region57: #{bayesian_atari_qr_forward.9} parent=5 // pred_check
      %p1599 = pneg %p1598
    $region58: #{bayesian_atari_qr_forward.9} parent=5 // pred_check_branch
      %1601 = sbr.rel (%p1599) target = $region60
    $region59: #{bayesian_atari_qr_forward.9} parent=5 // pred_region
      %s1602 = ssub.s32 %s11, 2
    $region60: #{bayesian_atari_qr_forward.9} parent=5 // pred_fallthru
      _
  $region6: #{bayesian_atari_qr_forward.9} parent=0 // loop_footer
    %s15 = sadd.s32 1, %s11
  $region7: #{bayesian_atari_qr_forward.9} parent=0 // loop_footer_branch
    %10 = sbr.rel target = $region3
  $region8: #{bayesian_atari_qr_forward.9} parent=0 // loop_exit
    _

</llo_original>
